<compile_context>
chip_gen: v7x
topology: tpu7x:2x2x1
jax: 0.10.0
libtpu: 0.0.40
codegen_flags: <defaults>
</compile_context>

<pallas_src>
import functools
import math

import jax
import jax.numpy as jnp
from jax.experimental import pallas as pl
from jax.experimental.pallas import tpu as pltpu

EPS = 1e-5  # nn.BatchNorm2d default eps


# ------------------------------ small helpers ------------------------------ #

def _rup(n, m):
    return ((n + m - 1) // m) * m


def _pad_mat(w, rows, cols):
    return jnp.pad(w, ((0, rows - w.shape[0]), (0, cols - w.shape[1])))


def _pad_vec(v, n, fill):
    return jnp.pad(v, (0, n - v.shape[0]), constant_values=fill)


def _pick_tile(m, cap):
    """Largest divisor of m that is <= cap, preferring 256/128/.../16-aligned
    row counts (bf16 sublane packing).  Falls back to the full m for awkward
    sizes (only then can the VMEM budget be exceeded)."""
    cap = min(m, cap)
    for align in (256, 128, 64, 32, 16, 8):
        t = (cap // align) * align
        while t >= align:
            if m % t == 0:
                return t
            t -= align
    return m


def _pick_rows(ho, wo, rows_cap):
    """Largest divisor of ho such that th*wo <= rows_cap (>=1 output row)."""
    best = 1
    for t in range(1, ho + 1):
        if ho % t == 0 and t * wo <= rows_cap:
            best = t
    return best


@functools.lru_cache(maxsize=1)
def _tpu_vmem_capacity():
    try:
        return int(pltpu.get_tpu_info().vmem_capacity_bytes)
    except Exception:
        return 64 * 1024 * 1024


def _vmem_limit_bytes():
    # Clamp to the per-TensorCore 64 MiB (v7x parts may report chip-level
    # capacity); leave 25% headroom for double-buffered streams.
    return (min(_tpu_vmem_capacity(), 64 * 1024 * 1024) * 3) // 4


def _ew_tile_cap():
    # Elementwise stages are HBM-roofline bound; use bigger tiles on the
    # 128-MiB VMEM generations (v5e/v6e), stay at 1024 on v7x.
    return 2048 if _tpu_vmem_capacity() >= 100 * 1024 * 1024 else 1024


def _compiler_params(n_axes):
    return pltpu.CompilerParams(
        dimension_semantics=("parallel",) * n_axes,
        vmem_limit_bytes=_vmem_limit_bytes())


# ----------------------------- Pallas kernels ------------------------------ #

def _matmul_stats_kernel(x_ref, w_ref, y_ref, s_ref, q_ref):
    """y = x @ w (bf16 MXU, f32 acc); emit bf16 y + f32 partial BN stats."""
    y = jnp.dot(x_ref[...], w_ref[...], preferred_element_type=jnp.float32)
    s_ref[...] = jnp.sum(y, axis=0, keepdims=True)[None]          # (1,1,C)
    q_ref[...] = jnp.sum(y * y, axis=0, keepdims=True)[None]      # (1,1,C)
    y_ref[...] = y.astype(y_ref.dtype)


def _affine_matmul_stats_kernel(x_ref, sc_ref, bi_ref, w_ref, y_ref, s_ref, q_ref):
    """y = relu(x*scale+bias) @ w  -- previous layer's BN affine + ReLU fused
    onto this matmul's (bf16) input; widen to f32 in-kernel."""
    x = jnp.maximum(x_ref[...].astype(jnp.float32) * sc_ref[...] + bi_ref[...], 0.0)
    y = jnp.dot(x.astype(jnp.bfloat16), w_ref[...],
                preferred_element_type=jnp.float32)
    s_ref[...] = jnp.sum(y, axis=0, keepdims=True)[None]
    q_ref[...] = jnp.sum(y * y, axis=0, keepdims=True)[None]
    y_ref[...] = y.astype(y_ref.dtype)


def _conv3x3_stats_kernel(ph_ref, w_ref, y_ref, s_ref, q_ref, *, stride, th, wo):
    """3x3 conv via 9-tap in-kernel accumulation over stride-phases for one
    (image, output-row-block) tile, plus BN partial stats.  No im2col."""
    c_out = y_ref.shape[-1]
    acc = jnp.zeros((th * wo, c_out), jnp.float32)
    for kh in range(3):
        for kw in range(3):
            ph_idx = (kh % stride) * stride + (kw % stride)
            dh, dw = kh // stride, kw // stride
            # TODO(synk): replace the sublane-unaligned dw slice with a
            # pltpu.roll along the width axis once rank-3 second-minor rotate
            # behaviour is verified on the target toolchain.
            win = ph_ref[ph_idx, dh:dh + th, dw:dw + wo, :]        # (th,wo,C)
            acc = acc + jnp.dot(win.reshape(th * wo, win.shape[-1]),
                                w_ref[kh * 3 + kw],
                                preferred_element_type=jnp.float32)
    s_ref[...] = jnp.sum(acc, axis=0, keepdims=True)[None]
    q_ref[...] = jnp.sum(acc * acc, axis=0, keepdims=True)[None]
    y_ref[...] = acc[None].astype(y_ref.dtype)                    # (1,th*wo,C)


def _bn_add_relu_kernel(y_ref, sc_ref, bi_ref, r_ref, rsc_ref, rbi_ref, o_ref):
    """relu(bn3(y) + bn_s(residual))  (downsampling shortcut branch)."""
    res = r_ref[...].astype(jnp.float32) * rsc_ref[...] + rbi_ref[...]
    out = y_ref[...].astype(jnp.float32) * sc_ref[...] + bi_ref[...] + res
    o_ref[...] = jnp.maximum(out, 0.0).astype(o_ref.dtype)


def _bn_addid_relu_kernel(y_ref, sc_ref, bi_ref, r_ref, o_ref):
    """relu(bn3(y) + residual)  (identity shortcut branch)."""
    out = (y_ref[...].astype(jnp.float32) * sc_ref[...] + bi_ref[...]
           + r_ref[...].astype(jnp.float32))
    o_ref[...] = jnp.maximum(out, 0.0).astype(o_ref.dtype)


# ------------------------------ Pallas wrappers ----------------------------- #

def matmul_stats(x2d, w2d, in_scale=None, in_bias=None, *, tm_cap=512):
    """Tiled (M,K)@(K,Cout) with per-tile BN partial stats, bf16 output.
    Optionally fuses the previous layer's BN affine + ReLU onto the input."""
    m, k = x2d.shape
    c_out = w2d.shape[1]
    x2d = x2d.astype(jnp.bfloat16)
    w2d = w2d.astype(jnp.bfloat16)

    tm = _pick_tile(m, tm_cap)
    nt = m // tm
    out_shape = (jax.ShapeDtypeStruct((m, c_out), jnp.bfloat16),
                 jax.ShapeDtypeStruct((nt, 1, c_out), jnp.float32),
                 jax.ShapeDtypeStruct((nt, 1, c_out), jnp.float32))
    out_specs = (pl.BlockSpec((tm, c_out), lambda i: (i, 0)),
                 pl.BlockSpec((1, 1, c_out), lambda i: (i, 0, 0)),
                 pl.BlockSpec((1, 1, c_out), lambda i: (i, 0, 0)))

    if in_scale is not None:
        y, sums, sqs = pl.pallas_call(
            _affine_matmul_stats_kernel,
            out_shape=out_shape,
            grid=(nt,),
            in_specs=[pl.BlockSpec((tm, k), lambda i: (i, 0)),
                      pl.BlockSpec((1, k), lambda i: (0, 0)),
                      pl.BlockSpec((1, k), lambda i: (0, 0)),
                      pl.BlockSpec((k, c_out), lambda i: (0, 0))],   # resident
            out_specs=out_specs,
            compiler_params=_compiler_params(1),
        )(x2d,
          in_scale.reshape(1, k).astype(jnp.float32),
          in_bias.reshape(1, k).astype(jnp.float32),
          w2d)
    else:
        y, sums, sqs = pl.pallas_call(
            _matmul_stats_kernel,
            out_shape=out_shape,
            grid=(nt,),
            in_specs=[pl.BlockSpec((tm, k), lambda i: (i, 0)),
                      pl.BlockSpec((k, c_out), lambda i: (0, 0))],   # resident
            out_specs=out_specs,
            compiler_params=_compiler_params(1),
        )(x2d, w2d)
    return y, sums, sqs


def conv3x3_stats(h_nhwc, w9, *, stride, rows_cap=512):
    """3x3 conv (pad=1, given stride) via stride-phase decomposition + 9-tap
    in-kernel accumulation, tiled over (batch, output-row blocks)."""
    n, h, w, c = h_nhwc.shape
    c_out = w9.shape[-1]
    ho = (h - 1) // stride + 1
    wo = (w - 1) // stride + 1
    ext = 2 // stride
    hph, wph = ho + ext, wo + ext
    nph = stride * stride

    # stride-phase extraction (XLA); BN1 affine+ReLU already folded into h_nhwc
    xp = jnp.pad(h_nhwc, ((0, 0), (1, 1), (1, 1), (0, 0)))
    plist = []
    for a in range(stride):
        for b in range(stride):
            p = xp[:, a::stride, b::stride, :][:, :hph, :wph, :]
            p = jnp.pad(p, ((0, 0), (0, hph - p.shape[1]),
                            (0, wph - p.shape[2]), (0, 0)))
            plist.append(p)
    phases = jnp.stack(plist, axis=1)                    # (n, nph, hph, wph, c)

    # row-block the phases with a (th+ext)-row halo per block (no overlap in
    # the BlockSpec windows; tiny duplicated halo rows in HBM)
    th = _pick_rows(ho, wo, rows_cap)
    nrb = ho // th
    blocks = [phases[:, :, j * th: j * th + th + ext] for j in range(nrb)]
    phases_b = jnp.stack(blocks, axis=1)                 # (n, nrb, nph, th+ext, wph, c)
    phases_b = phases_b.reshape(n * nrb * nph, th + ext, wph, c).astype(jnp.bfloat16)

    kernel = functools.partial(_conv3x3_stats_kernel, stride=stride, th=th, wo=wo)
    y, sums, sqs = pl.pallas_call(
        kernel,
        out_shape=(jax.ShapeDtypeStruct((n * nrb, th * wo, c_out), jnp.bfloat16),
                   jax.ShapeDtypeStruct((n * nrb, 1, c_out), jnp.float32),
                   jax.ShapeDtypeStruct((n * nrb, 1, c_out), jnp.float32)),
        grid=(n, nrb),
        in_specs=[
            pl.BlockSpec((nph, th + ext, wph, c),
                         lambda i, j: (i * nrb + j, 0, 0, 0)),
            pl.BlockSpec((9, c, c_out), lambda i, j: (0, 0, 0)),     # resident
        ],
        out_specs=(
            pl.BlockSpec((1, th * wo, c_out), lambda i, j: (i * nrb + j, 0, 0)),
            pl.BlockSpec((1, 1, c_out), lambda i, j: (i * nrb + j, 0, 0)),
            pl.BlockSpec((1, 1, c_out), lambda i, j: (i * nrb + j, 0, 0)),
        ),
        compiler_params=_compiler_params(2),
    )(phases_b, w9.astype(jnp.bfloat16))
    return y.reshape(n * ho * wo, c_out), sums, sqs, ho, wo


def bn_add_relu(y2d, scale, bias, res2d, rscale=None, rbias=None, *, tm_cap=1024):
    """Final stage: relu(bn3(y) + shortcut).  Residual may be bf16 (conv
    branch) or f32 (identity branch); widened in-kernel."""
    m, c = y2d.shape
    tm = _pick_tile(m, tm_cap)
    in_specs = [pl.BlockSpec((tm, c), lambda i: (i, 0)),
                pl.BlockSpec((1, c), lambda i: (0, 0)),
                pl.BlockSpec((1, c), lambda i: (0, 0)),
                pl.BlockSpec((tm, c), lambda i: (i, 0))]
    args = [y2d,
            scale.reshape(1, c).astype(jnp.float32),
            bias.reshape(1, c).astype(jnp.float32),
            res2d]
    if rscale is not None:
        kernel = _bn_add_relu_kernel
        in_specs = in_specs + [pl.BlockSpec((1, c), lambda i: (0, 0)),
                               pl.BlockSpec((1, c), lambda i: (0, 0))]
        args = args + [rscale.reshape(1, c).astype(jnp.float32),
                       rbias.reshape(1, c).astype(jnp.float32)]
    else:
        kernel = _bn_addid_relu_kernel
    return pl.pallas_call(
        kernel,
        out_shape=jax.ShapeDtypeStruct((m, c), jnp.float32),
        grid=(m // tm,),
        in_specs=in_specs,
        out_specs=pl.BlockSpec((tm, c), lambda i: (i, 0)),
        compiler_params=_compiler_params(1),
    )(*args)


# ------------------------------- JAX glue ----------------------------------- #

def _bn_scale_bias(sums, sqs, count, gamma, beta):
    """Combine per-tile partial stats into per-channel BN scale/bias (f32).
    NOTE: E[y^2]-E[y]^2 in f32; adequate at these scales (Chan's algorithm is
    the robust upgrade for very large/offset activations)."""
    s = jnp.sum(sums, axis=(0, 1))
    q = jnp.sum(sqs, axis=(0, 1))
    mean = s / count
    var = jnp.maximum(q / count - mean * mean, 0.0)   # biased, like BN forward
    scale = gamma * jax.lax.rsqrt(var + EPS)
    bias = beta - mean * scale
    return scale, bias


def bottleneck_forward(x_nchw, params, stride, *, tm_cap=512, rows_cap=512):
    x = jnp.transpose(x_nchw, (0, 2, 3, 1))            # NCHW -> NHWC
    n, h, w, c_in = x.shape
    planes = params["w1"].shape[0]
    expp = params["w3"].shape[0]
    cp_in, cp_mid, cp_out = _rup(c_in, 128), _rup(planes, 128), _rup(expp, 128)

    # lane-dense channel padding (zeros stay zero through the whole chain)
    xpad = jnp.pad(x, ((0, 0), (0, 0), (0, 0), (0, cp_in - c_in)))

    # ---- conv1 (1x1): matmul + BN1 partial stats (bf16 y1)
    w1 = _pad_mat(params["w1"][:, :, 0, 0].T, cp_in, cp_mid)
    g1 = _pad_vec(params["g1"], cp_mid, 1.0)
    b1 = _pad_vec(params["b1"], cp_mid, 0.0)
    m1 = n * h * w
    y1, s1, q1 = matmul_stats(xpad.reshape(m1, cp_in), w1, tm_cap=tm_cap)
    sc1, bi1 = _bn_scale_bias(s1, q1, m1, g1, b1)

    # ---- BN1 affine + ReLU folded into the XLA phase extraction for conv2
    #      (y1 is touched exactly once; h1 is never staged separately).
    h1 = jnp.maximum(y1.astype(jnp.float32) * sc1 + bi1, 0.0)
    h1 = h1.astype(jnp.bfloat16).reshape(n, h, w, cp_mid)

    # ---- conv2 (3x3, stride, pad=1): in-kernel 9-tap accumulation (no im2col)
    w2 = jnp.transpose(params["w2"], (2, 3, 1, 0))      # (kh, kw, cin, cout)
    w2 = jnp.pad(w2, ((0, 0), (0, 0),
                      (0, cp_mid - planes), (0, cp_mid - planes)))
    w2 = w2.reshape(9, cp_mid, cp_mid)
    g2 = _pad_vec(params["g2"], cp_mid, 1.0)
    b2 = _pad_vec(params["b2"], cp_mid, 0.0)
    y2, s2, q2, ho, wo = conv3x3_stats(h1, w2, stride=stride, rows_cap=rows_cap)
    m2 = n * ho * wo
    sc2, bi2 = _bn_scale_bias(s2, q2, m2, g2, b2)

    # ---- conv3 (1x1) with BN2 affine + ReLU fused on the input, + BN3 stats
    w3 = _pad_mat(params["w3"][:, :, 0, 0].T, cp_mid, cp_out)
    g3 = _pad_vec(params["g3"], cp_out, 1.0)
    b3 = _pad_vec(params["b3"], cp_out, 0.0)
    y3, s3, q3 = matmul_stats(y2, w3, in_scale=sc2, in_bias=bi2, tm_cap=tm_cap)
    sc3, bi3 = _bn_scale_bias(s3, q3, m2, g3, b3)

    # ---- shortcut branch + fused BN3 / add / ReLU epilogue
    if "ws" in params:
        xs = xpad[:, ::stride, ::stride, :].reshape(m2, cp_in)
        ws = _pad_mat(params["ws"][:, :, 0, 0].T, cp_in, cp_out)
        gs = _pad_vec(params["gs"], cp_out, 1.0)
        bs = _pad_vec(params["bs"], cp_out, 0.0)
        res, ss, qs = matmul_stats(xs, ws, tm_cap=tm_cap)   # bf16 residual
        rsc, rbi = _bn_scale_bias(ss, qs, m2, gs, bs)
        out = bn_add_relu(y3, sc3, bi3, res, rsc, rbi, tm_cap=_ew_tile_cap())
    else:
        res = xpad.reshape(m2, cp_in)                   # identity (cp_in==cp_out)
        out = bn_add_relu(y3, sc3, bi3, res, tm_cap=_ew_tile_cap())

    out = out.reshape(n, ho, wo, cp_out)[:, :, :, :expp]
    return jnp.transpose(out, (0, 3, 1, 2))             # NHWC -> NCHW


# --------------------------- parameter init / ref --------------------------- #

def init_bottleneck_params(key, in_planes, planes, stride):
    exp_planes = 4 * planes
    ks = jax.random.split(key, 12)

    def conv_w(k, cout, cin, kh, kw):
        bound = 1.0 / math.sqrt(cin * kh * kw)
        return jax.random.uniform(k, (cout, cin, kh, kw), jnp.float32, -bound, bound)

    def bn_p(kg, kb, c):
        g = 1.0 + 0.1 * jax.random.normal(kg, (c,), jnp.float32)
        b = 0.1 * jax.random.normal(kb, (c,), jnp.float32)
        return g, b

    p = {}
    p["w1"] = conv_w(ks[0], planes, in_planes, 1, 1)
    p["g1"], p["b1"] = bn_p(ks[1], ks[2], planes)
    p["w2"] = conv_w(ks[3], planes, planes, 3, 3)
    p["g2"], p["b2"] = bn_p(ks[4], ks[5], planes)
    p["w3"] = conv_w(ks[6], exp_planes, planes, 1, 1)
    p["g3"], p["b3"] = bn_p(ks[7], ks[8], exp_planes)
    if stride != 1 or in_planes != exp_planes:
        p["ws"] = conv_w(ks[9], exp_planes, in_planes, 1, 1)
        p["gs"], p["bs"] = bn_p(ks[10], ks[11], exp_planes)
    return p


def reference_forward(x_nchw, params, stride):
    """Plain-XLA reference.  Conv operands are rounded to bf16 to mirror the
    kernel's bf16 MXU inputs (intermediates stay f32)."""
    def q(v):
        return v.astype(jnp.bfloat16).astype(jnp.float32)

    def conv(x, w, s, pad):
        return jax.lax.conv_general_dilated(
            q(x), q(w), window_strides=(s, s),
            padding=((pad, pad), (pad, pad)),
            dimension_numbers=("NCHW", "OIHW", "NCHW"),
            precision=jax.lax.Precision.HIGHEST)

    def bn(y, g, b):
        mean = y.mean(axis=(0, 2, 3), keepdims=True)
        var = ((y - mean) ** 2).mean(axis=(0, 2, 3), keepdims=True)
        return ((y - mean) / jnp.sqrt(var + EPS)) * g.reshape(1, -1, 1, 1) \
               + b.reshape(1, -1, 1, 1)

    h = jax.nn.relu(bn(conv(x_nchw, params["w1"], 1, 0), params["g1"], params["b1"]))
    h = jax.nn.relu(bn(conv(h, params["w2"], stride, 1), params["g2"], params["b2"]))
    h = bn(conv(h, params["w3"], 1, 0), params["g3"], params["b3"])
    if "ws" in params:
        sc = bn(conv(x_nchw, params["ws"], stride, 0), params["gs"], params["bs"])
    else:
        sc = x_nchw
    return jax.nn.relu(h + sc)


# ----------------------------------- main ----------------------------------- #

if __name__ == "__main__":
    # (N, in_planes, planes, stride, H, W)
    configs = [
        (2, 16, 8, 2, 16, 16),   # downsampling block (1x1-conv shortcut)
        (2, 32, 8, 1, 16, 16),   # identity-shortcut block (in_planes == 4*planes)
    ]
    key = jax.random.PRNGKey(0)
    for (n, in_planes, planes, stride, hh, ww) in configs:
        key, kx, kp = jax.random.split(key, 3)
        x = jax.random.normal(kx, (n, in_planes, hh, ww), jnp.float32)  # NCHW
        params = init_bottleneck_params(kp, in_planes, planes, stride)

        # Small tile caps (tm_cap=256, rows_cap=128) so the multi-tile
        # partial-stats and row-blocked conv paths are exercised at toy sizes.
        fwd = jax.jit(functools.partial(bottleneck_forward, stride=stride,
                                        tm_cap=256, rows_cap=128))
        out = jax.block_until_ready(fwd(x, params))
        ref = jax.block_until_ready(reference_forward(x, params, stride))

        hs = (hh - 1) // stride + 1
        ws_ = (ww - 1) // stride + 1
        assert out.shape == (n, 4 * planes, hs, ws_), out.shape
        # Inter-stage activations are stored in bf16 in the kernel path while
        # the XLA reference keeps f32 intermediates -> compare at bf16-level
        # tolerance.
        max_err = float(jnp.max(jnp.abs(out - ref)))
        assert jnp.allclose(out, ref, atol=3e-2, rtol=3e-2), max_err

    print("KERNEL_OK")
</pallas_src>

<mosaic_0001>
module attributes {stable_mosaic.version = 11 : i64} {
  func.func @_matmul_stats_kernel(%arg0: i32, %arg1: memref<256x128xbf16, #tpu.memory_space<vmem>>, %arg2: memref<128x128xbf16, #tpu.memory_space<vmem>>, %arg3: memref<256x128xbf16, #tpu.memory_space<vmem>>, %arg4: memref<1x1x128xf32, #tpu.memory_space<vmem>>, %arg5: memref<1x1x128xf32, #tpu.memory_space<vmem>>) attributes {dimension_semantics = [#tpu.dimension_semantics<parallel>], iteration_bounds = array<i64: 2>, scalar_prefetch = 0 : i64, scratch_operands = 0 : i64, tpu.core_type = #tpu.core_type<tc>, window_params = [{transform_indices = @transform_0, window_bounds = array<i64: 256, 128>}, {pipeline_mode = #tpu.pipeline_mode<synchronous>, transform_indices = @transform_1, window_bounds = array<i64: 128, 128>}, {transform_indices = @transform_2, window_bounds = array<i64: 256, 128>}, {transform_indices = @transform_3, window_bounds = array<i64: 1, 1, 128>}, {transform_indices = @transform_4, window_bounds = array<i64: 1, 1, 128>}]} {
    %c0 = arith.constant 0 : index
    %c0_0 = arith.constant 0 : index
    %0 = vector.load %arg1[%c0, %c0_0] : memref<256x128xbf16, #tpu.memory_space<vmem>>, vector<256x128xbf16>
    %c0_1 = arith.constant 0 : index
    %c0_2 = arith.constant 0 : index
    %1 = vector.load %arg2[%c0_1, %c0_2] : memref<128x128xbf16, #tpu.memory_space<vmem>>, vector<128x128xbf16>
    %cst = arith.constant dense<0.000000e+00> : vector<256x128xf32>
    %2 = tpu.matmul %0, %1, %cst {dimension_numbers = #tpu.dot_dimension_numbers<[1], [0], [0], [1], [0, 0, 1, 1], [], []>} : vector<256x128xbf16>, vector<128x128xbf16>, vector<256x128xf32> -> vector<256x128xf32>
    %cst_3 = arith.constant dense<0.000000e+00> : vector<128xf32>
    %3 = vector.multi_reduction <add>, %2, %cst_3 [0] : vector<256x128xf32> to vector<128xf32>
    %4 = vector.shape_cast %3 : vector<128xf32> to vector<1x128xf32>
    %5 = vector.shape_cast %4 : vector<1x128xf32> to vector<1x1x128xf32>
    %c0_4 = arith.constant 0 : index
    %c0_5 = arith.constant 0 : index
    %c0_6 = arith.constant 0 : index
    %6 = vector.load %arg4[%c0_4, %c0_5, %c0_6] : memref<1x1x128xf32, #tpu.memory_space<vmem>>, vector<1x1x128xf32>
    tpu.vector_store %arg4[%c0_4, %c0_5, %c0_6], %5 {strides = array<i32>} : memref<1x1x128xf32, #tpu.memory_space<vmem>>, vector<1x1x128xf32>,
    %7 = arith.mulf %2, %2 : vector<256x128xf32>
    %cst_7 = arith.constant dense<0.000000e+00> : vector<128xf32>
    %8 = vector.multi_reduction <add>, %7, %cst_7 [0] : vector<256x128xf32> to vector<128xf32>
    %9 = vector.shape_cast %8 : vector<128xf32> to vector<1x128xf32>
    %10 = vector.shape_cast %9 : vector<1x128xf32> to vector<1x1x128xf32>
    %c0_8 = arith.constant 0 : index
    %c0_9 = arith.constant 0 : index
    %c0_10 = arith.constant 0 : index
    %11 = vector.load %arg5[%c0_8, %c0_9, %c0_10] : memref<1x1x128xf32, #tpu.memory_space<vmem>>, vector<1x1x128xf32>
    tpu.vector_store %arg5[%c0_8, %c0_9, %c0_10], %10 {strides = array<i32>} : memref<1x1x128xf32, #tpu.memory_space<vmem>>, vector<1x1x128xf32>,
    %12 = arith.truncf %2 : vector<256x128xf32> to vector<256x128xbf16>
    %c0_11 = arith.constant 0 : index
    %c0_12 = arith.constant 0 : index
    %13 = vector.load %arg3[%c0_11, %c0_12] : memref<256x128xbf16, #tpu.memory_space<vmem>>, vector<256x128xbf16>
    tpu.vector_store %arg3[%c0_11, %c0_12], %12 {strides = array<i32>} : memref<256x128xbf16, #tpu.memory_space<vmem>>, vector<256x128xbf16>,
    return
  }
  func.func @transform_0(%arg0: i32) -> (i32, i32) {
    %c0_i32 = arith.constant 0 : i32
    %c0_i32_0 = arith.constant 0 : i32
    return %arg0, %c0_i32 : i32, i32
  }
  func.func @transform_1(%arg0: i32) -> (i32, i32) {
    %c0_i32 = arith.constant 0 : i32
    %c0_i32_0 = arith.constant 0 : i32
    %c0_i32_1 = arith.constant 0 : i32
    return %c0_i32, %c0_i32_0 : i32, i32
  }
  func.func @transform_2(%arg0: i32) -> (i32, i32) {
    %c0_i32 = arith.constant 0 : i32
    %c0_i32_0 = arith.constant 0 : i32
    return %arg0, %c0_i32 : i32, i32
  }
  func.func @transform_3(%arg0: i32) -> (i32, i32, i32) {
    %c0_i32 = arith.constant 0 : i32
    %c0_i32_0 = arith.constant 0 : i32
    %c0_i32_1 = arith.constant 0 : i32
    return %arg0, %c0_i32, %c0_i32_0 : i32, i32, i32
  }
  func.func @transform_4(%arg0: i32) -> (i32, i32, i32) {
    %c0_i32 = arith.constant 0 : i32
    %c0_i32_0 = arith.constant 0 : i32
    %c0_i32_1 = arith.constant 0 : i32
    return %arg0, %c0_i32, %c0_i32_0 : i32, i32, i32
  }
}

module attributes {stable_mosaic.version = 11 : i64} {
  func.func @_conv3x3_stats_kernel(%arg0: i32, %arg1: i32, %arg2: memref<4x9x9x128xbf16, #tpu.memory_space<vmem>>, %arg3: memref<9x128x128xbf16, #tpu.memory_space<vmem>>, %arg4: memref<1x64x128xbf16, #tpu.memory_space<vmem>>, %arg5: memref<1x1x128xf32, #tpu.memory_space<vmem>>, %arg6: memref<1x1x128xf32, #tpu.memory_space<vmem>>) attributes {dimension_semantics = [#tpu.dimension_semantics<parallel>, #tpu.dimension_semantics<parallel>], iteration_bounds = array<i64: 2, 1>, scalar_prefetch = 0 : i64, scratch_operands = 0 : i64, tpu.core_type = #tpu.core_type<tc>, window_params = [{transform_indices = @transform_0, window_bounds = array<i64: 4, 9, 9, 128>}, {pipeline_mode = #tpu.pipeline_mode<synchronous>, transform_indices = @transform_1, window_bounds = array<i64: 9, 128, 128>}, {transform_indices = @transform_2, window_bounds = array<i64: 1, 64, 128>}, {transform_indices = @transform_3, window_bounds = array<i64: 1, 1, 128>}, {transform_indices = @transform_4, window_bounds = array<i64: 1, 1, 128>}]} {
    %cst = arith.constant 0.000000e+00 : f32
    %0 = vector.broadcast %cst : f32 to vector<64x128xf32>
    %c0 = arith.constant 0 : index
    %c0_0 = arith.constant 0 : index
    %c0_1 = arith.constant 0 : index
    %c0_2 = arith.constant 0 : index
    %1 = vector.load %arg2[%c0, %c0_0, %c0_1, %c0_2] : memref<4x9x9x128xbf16, #tpu.memory_space<vmem>>, vector<1x8x8x128xbf16>
    %2 = vector.shape_cast %1 : vector<1x8x8x128xbf16> to vector<8x8x128xbf16>
    %3 = vector.shape_cast %2 : vector<8x8x128xbf16> to vector<64x128xbf16>
    %c0_3 = arith.constant 0 : index
    %c0_4 = arith.constant 0 : index
    %c0_5 = arith.constant 0 : index
    %4 = vector.load %arg3[%c0_3, %c0_4, %c0_5] : memref<9x128x128xbf16, #tpu.memory_space<vmem>>, vector<1x128x128xbf16>
    %5 = vector.shape_cast %4 : vector<1x128x128xbf16> to vector<128x128xbf16>
    %cst_6 = arith.constant dense<0.000000e+00> : vector<64x128xf32>
    %6 = tpu.matmul %3, %5, %cst_6 {dimension_numbers = #tpu.dot_dimension_numbers<[1], [0], [0], [1], [0, 0, 1, 1], [], []>} : vector<64x128xbf16>, vector<128x128xbf16>, vector<64x128xf32> -> vector<64x128xf32>
    %7 = arith.addf %0, %6 : vector<64x128xf32>
    %c1 = arith.constant 1 : index
    %c0_7 = arith.constant 0 : index
    %c0_8 = arith.constant 0 : index
    %c0_9 = arith.constant 0 : index
    %8 = vector.load %arg2[%c1, %c0_7, %c0_8, %c0_9] : memref<4x9x9x128xbf16, #tpu.memory_space<vmem>>, vector<1x8x8x128xbf16>
    %9 = vector.shape_cast %8 : vector<1x8x8x128xbf16> to vector<8x8x128xbf16>
    %10 = vector.shape_cast %9 : vector<8x8x128xbf16> to vector<64x128xbf16>
    %c1_10 = arith.constant 1 : index
    %c0_11 = arith.constant 0 : index
    %c0_12 = arith.constant 0 : index
    %11 = vector.load %arg3[%c1_10, %c0_11, %c0_12] : memref<9x128x128xbf16, #tpu.memory_space<vmem>>, vector<1x128x128xbf16>
    %12 = vector.shape_cast %11 : vector<1x128x128xbf16> to vector<128x128xbf16>
    %cst_13 = arith.constant dense<0.000000e+00> : vector<64x128xf32>
    %13 = tpu.matmul %10, %12, %cst_13 {dimension_numbers = #tpu.dot_dimension_numbers<[1], [0], [0], [1], [0, 0, 1, 1], [], []>} : vector<64x128xbf16>, vector<128x128xbf16>, vector<64x128xf32> -> vector<64x128xf32>
    %14 = arith.addf %7, %13 : vector<64x128xf32>
    %c0_14 = arith.constant 0 : index
    %c0_15 = arith.constant 0 : index
    %c1_16 = arith.constant 1 : index
    %c0_17 = arith.constant 0 : index
    %15 = vector.load %arg2[%c0_14, %c0_15, %c1_16, %c0_17] : memref<4x9x9x128xbf16, #tpu.memory_space<vmem>>, vector<1x8x8x128xbf16>
    %16 = vector.shape_cast %15 : vector<1x8x8x128xbf16> to vector<8x8x128xbf16>
    %17 = vector.shape_cast %16 : vector<8x8x128xbf16> to vector<64x128xbf16>
    %c2 = arith.constant 2 : index
    %c0_18 = arith.constant 0 : index
    %c0_19 = arith.constant 0 : index
    %18 = vector.load %arg3[%c2, %c0_18, %c0_19] : memref<9x128x128xbf16, #tpu.memory_space<vmem>>, vector<1x128x128xbf16>
    %19 = vector.shape_cast %18 : vector<1x128x128xbf16> to vector<128x128xbf16>
    %cst_20 = arith.constant dense<0.000000e+00> : vector<64x128xf32>
    %20 = tpu.matmul %17, %19, %cst_20 {dimension_numbers = #tpu.dot_dimension_numbers<[1], [0], [0], [1], [0, 0, 1, 1], [], []>} : vector<64x128xbf16>, vector<128x128xbf16>, vector<64x128xf32> -> vector<64x128xf32>
    %21 = arith.addf %14, %20 : vector<64x128xf32>
    %c2_21 = arith.constant 2 : index
    %c0_22 = arith.constant 0 : index
    %c0_23 = arith.constant 0 : index
    %c0_24 = arith.constant 0 : index
    %22 = vector.load %arg2[%c2_21, %c0_22, %c0_23, %c0_24] : memref<4x9x9x128xbf16, #tpu.memory_space<vmem>>, vector<1x8x8x128xbf16>
    %23 = vector.shape_cast %22 : vector<1x8x8x128xbf16> to vector<8x8x128xbf16>
    %24 = vector.shape_cast %23 : vector<8x8x128xbf16> to vector<64x128xbf16>
    %c3 = arith.constant 3 : index
    %c0_25 = arith.constant 0 : index
    %c0_26 = arith.constant 0 : index
    %25 = vector.load %arg3[%c3, %c0_25, %c0_26] : memref<9x128x128xbf16, #tpu.memory_space<vmem>>, vector<1x128x128xbf16>
    %26 = vector.shape_cast %25 : vector<1x128x128xbf16> to vector<128x128xbf16>
    %cst_27 = arith.constant dense<0.000000e+00> : vector<64x128xf32>
    %27 = tpu.matmul %24, %26, %cst_27 {dimension_numbers = #tpu.dot_dimension_numbers<[1], [0], [0], [1], [0, 0, 1, 1], [], []>} : vector<64x128xbf16>, vector<128x128xbf16>, vector<64x128xf32> -> vector<64x128xf32>
    %28 = arith.addf %21, %27 : vector<64x128xf32>
    %c3_28 = arith.constant 3 : index
    %c0_29 = arith.constant 0 : index
    %c0_30 = arith.constant 0 : index
    %c0_31 = arith.constant 0 : index
    %29 = vector.load %arg2[%c3_28, %c0_29, %c0_30, %c0_31] : memref<4x9x9x128xbf16, #tpu.memory_space<vmem>>, vector<1x8x8x128xbf16>
    %30 = vector.shape_cast %29 : vector<1x8x8x128xbf16> to vector<8x8x128xbf16>
    %31 = vector.shape_cast %30 : vector<8x8x128xbf16> to vector<64x128xbf16>
    %c4 = arith.constant 4 : index
    %c0_32 = arith.constant 0 : index
    %c0_33 = arith.constant 0 : index
    %32 = vector.load %arg3[%c4, %c0_32, %c0_33] : memref<9x128x128xbf16, #tpu.memory_space<vmem>>, vector<1x128x128xbf16>
    %33 = vector.shape_cast %32 : vector<1x128x128xbf16> to vector<128x128xbf16>
    %cst_34 = arith.constant dense<0.000000e+00> : vector<64x128xf32>
    %34 = tpu.matmul %31, %33, %cst_34 {dimension_numbers = #tpu.dot_dimension_numbers<[1], [0], [0], [1], [0, 0, 1, 1], [], []>} : vector<64x128xbf16>, vector<128x128xbf16>, vector<64x128xf32> -> vector<64x128xf32>
    %35 = arith.addf %28, %34 : vector<64x128xf32>
    %c2_35 = arith.constant 2 : index
    %c0_36 = arith.constant 0 : index
    %c1_37 = arith.constant 1 : index
    %c0_38 = arith.constant 0 : index
    %36 = vector.load %arg2[%c2_35, %c0_36, %c1_37, %c0_38] : memref<4x9x9x128xbf16, #tpu.memory_space<vmem>>, vector<1x8x8x128xbf16>
    %37 = vector.shape_cast %36 : vector<1x8x8x128xbf16> to vector<8x8x128xbf16>
    %38 = vector.shape_cast %37 : vector<8x8x128xbf16> to vector<64x128xbf16>
    %c5 = arith.constant 5 : index
    %c0_39 = arith.constant 0 : index
    %c0_40 = arith.constant 0 : index
    %39 = vector.load %arg3[%c5, %c0_39, %c0_40] : memref<9x128x128xbf16, #tpu.memory_space<vmem>>, vector<1x128x128xbf16>
    %40 = vector.shape_cast %39 : vector<1x128x128xbf16> to vector<128x128xbf16>
    %cst_41 = arith.constant dense<0.000000e+00> : vector<64x128xf32>
    %41 = tpu.matmul %38, %40, %cst_41 {dimension_numbers = #tpu.dot_dimension_numbers<[1], [0], [0], [1], [0, 0, 1, 1], [], []>} : vector<64x128xbf16>, vector<128x128xbf16>, vector<64x128xf32> -> vector<64x128xf32>
    %42 = arith.addf %35, %41 : vector<64x128xf32>
    %c0_42 = arith.constant 0 : index
    %c1_43 = arith.constant 1 : index
    %c0_44 = arith.constant 0 : index
    %c0_45 = arith.constant 0 : index
    %43 = vector.load %arg2[%c0_42, %c1_43, %c0_44, %c0_45] : memref<4x9x9x128xbf16, #tpu.memory_space<vmem>>, vector<1x8x8x128xbf16>
    %44 = vector.shape_cast %43 : vector<1x8x8x128xbf16> to vector<8x8x128xbf16>
    %45 = vector.shape_cast %44 : vector<8x8x128xbf16> to vector<64x128xbf16>
    %c6 = arith.constant 6 : index
    %c0_46 = arith.constant 0 : index
    %c0_47 = arith.constant 0 : index
    %46 = vector.load %arg3[%c6, %c0_46, %c0_47] : memref<9x128x128xbf16, #tpu.memory_space<vmem>>, vector<1x128x128xbf16>
    %47 = vector.shape_cast %46 : vector<1x128x128xbf16> to vector<128x128xbf16>
    %cst_48 = arith.constant dense<0.000000e+00> : vector<64x128xf32>
    %48 = tpu.matmul %45, %47, %cst_48 {dimension_numbers = #tpu.dot_dimension_numbers<[1], [0], [0], [1], [0, 0, 1, 1], [], []>} : vector<64x128xbf16>, vector<128x128xbf16>, vector<64x128xf32> -> vector<64x128xf32>
    %49 = arith.addf %42, %48 : vector<64x128xf32>
    %c1_49 = arith.constant 1 : index
    %c1_50 = arith.constant 1 : index
    %c0_51 = arith.constant 0 : index
    %c0_52 = arith.constant 0 : index
    %50 = vector.load %arg2[%c1_49, %c1_50, %c0_51, %c0_52] : memref<4x9x9x128xbf16, #tpu.memory_space<vmem>>, vector<1x8x8x128xbf16>
    %51 = vector.shape_cast %50 : vector<1x8x8x128xbf16> to vector<8x8x128xbf16>
    %52 = vector.shape_cast %51 : vector<8x8x128xbf16> to vector<64x128xbf16>
    %c7 = arith.constant 7 : index
    %c0_53 = arith.constant 0 : index
    %c0_54 = arith.constant 0 : index
    %53 = vector.load %arg3[%c7, %c0_53, %c0_54] : memref<9x128x128xbf16, #tpu.memory_space<vmem>>, vector<1x128x128xbf16>
    %54 = vector.shape_cast %53 : vector<1x128x128xbf16> to vector<128x128xbf16>
    %cst_55 = arith.constant dense<0.000000e+00> : vector<64x128xf32>
    %55 = tpu.matmul %52, %54, %cst_55 {dimension_numbers = #tpu.dot_dimension_numbers<[1], [0], [0], [1], [0, 0, 1, 1], [], []>} : vector<64x128xbf16>, vector<128x128xbf16>, vector<64x128xf32> -> vector<64x128xf32>
    %56 = arith.addf %49, %55 : vector<64x128xf32>
    %c0_56 = arith.constant 0 : index
    %c1_57 = arith.constant 1 : index
    %c1_58 = arith.constant 1 : index
    %c0_59 = arith.constant 0 : index
    %57 = vector.load %arg2[%c0_56, %c1_57, %c1_58, %c0_59] : memref<4x9x9x128xbf16, #tpu.memory_space<vmem>>, vector<1x8x8x128xbf16>
    %58 = vector.shape_cast %57 : vector<1x8x8x128xbf16> to vector<8x8x128xbf16>
    %59 = vector.shape_cast %58 : vector<8x8x128xbf16> to vector<64x128xbf16>
    %c8 = arith.constant 8 : index
    %c0_60 = arith.constant 0 : index
    %c0_61 = arith.constant 0 : index
    %60 = vector.load %arg3[%c8, %c0_60, %c0_61] : memref<9x128x128xbf16, #tpu.memory_space<vmem>>, vector<1x128x128xbf16>
    %61 = vector.shape_cast %60 : vector<1x128x128xbf16> to vector<128x128xbf16>
    %cst_62 = arith.constant dense<0.000000e+00> : vector<64x128xf32>
    %62 = tpu.matmul %59, %61, %cst_62 {dimension_numbers = #tpu.dot_dimension_numbers<[1], [0], [0], [1], [0, 0, 1, 1], [], []>} : vector<64x128xbf16>, vector<128x128xbf16>, vector<64x128xf32> -> vector<64x128xf32>
    %63 = arith.addf %56, %62 : vector<64x128xf32>
    %cst_63 = arith.constant dense<0.000000e+00> : vector<128xf32>
    %64 = vector.multi_reduction <add>, %63, %cst_63 [0] : vector<64x128xf32> to vector<128xf32>
    %65 = vector.shape_cast %64 : vector<128xf32> to vector<1x128xf32>
    %66 = vector.shape_cast %65 : vector<1x128xf32> to vector<1x1x128xf32>
    %c0_64 = arith.constant 0 : index
    %c0_65 = arith.constant 0 : index
    %c0_66 = arith.constant 0 : index
    %67 = vector.load %arg5[%c0_64, %c0_65, %c0_66] : memref<1x1x128xf32, #tpu.memory_space<vmem>>, vector<1x1x128xf32>
    tpu.vector_store %arg5[%c0_64, %c0_65, %c0_66], %66 {strides = array<i32>} : memref<1x1x128xf32, #tpu.memory_space<vmem>>, vector<1x1x128xf32>,
    %68 = arith.mulf %63, %63 : vector<64x128xf32>
    %cst_67 = arith.constant dense<0.000000e+00> : vector<128xf32>
    %69 = vector.multi_reduction <add>, %68, %cst_67 [0] : vector<64x128xf32> to vector<128xf32>
    %70 = vector.shape_cast %69 : vector<128xf32> to vector<1x128xf32>
    %71 = vector.shape_cast %70 : vector<1x128xf32> to vector<1x1x128xf32>
    %c0_68 = arith.constant 0 : index
    %c0_69 = arith.constant 0 : index
    %c0_70 = arith.constant 0 : index
    %72 = vector.load %arg6[%c0_68, %c0_69, %c0_70] : memref<1x1x128xf32, #tpu.memory_space<vmem>>, vector<1x1x128xf32>
    tpu.vector_store %arg6[%c0_68, %c0_69, %c0_70], %71 {strides = array<i32>} : memref<1x1x128xf32, #tpu.memory_space<vmem>>, vector<1x1x128xf32>,
    %73 = vector.shape_cast %63 : vector<64x128xf32> to vector<1x64x128xf32>
    %74 = arith.truncf %73 : vector<1x64x128xf32> to vector<1x64x128xbf16>
    %c0_71 = arith.constant 0 : index
    %c0_72 = arith.constant 0 : index
    %c0_73 = arith.constant 0 : index
    %75 = vector.load %arg4[%c0_71, %c0_72, %c0_73] : memref<1x64x128xbf16, #tpu.memory_space<vmem>>, vector<1x64x128xbf16>
    tpu.vector_store %arg4[%c0_71, %c0_72, %c0_73], %74 {strides = array<i32>} : memref<1x64x128xbf16, #tpu.memory_space<vmem>>, vector<1x64x128xbf16>,
    return
  }
  func.func @transform_0(%arg0: i32, %arg1: i32) -> (i32, i32, i32, i32) {
    %c1_i32 = arith.constant 1 : i32
    %0 = arith.muli %arg0, %c1_i32 : i32
    %1 = arith.addi %0, %arg1 : i32
    %c0_i32 = arith.constant 0 : i32
    %c0_i32_0 = arith.constant 0 : i32
    %c0_i32_1 = arith.constant 0 : i32
    %c0_i32_2 = arith.constant 0 : i32
    return %1, %c0_i32, %c0_i32_0, %c0_i32_1 : i32, i32, i32, i32
  }
  func.func @transform_1(%arg0: i32, %arg1: i32) -> (i32, i32, i32) {
    %c0_i32 = arith.constant 0 : i32
    %c0_i32_0 = arith.constant 0 : i32
    %c0_i32_1 = arith.constant 0 : i32
    %c0_i32_2 = arith.constant 0 : i32
    return %c0_i32, %c0_i32_0, %c0_i32_1 : i32, i32, i32
  }
  func.func @transform_2(%arg0: i32, %arg1: i32) -> (i32, i32, i32) {
    %c1_i32 = arith.constant 1 : i32
    %0 = arith.muli %arg0, %c1_i32 : i32
    %1 = arith.addi %0, %arg1 : i32
    %c0_i32 = arith.constant 0 : i32
    %c0_i32_0 = arith.constant 0 : i32
    %c0_i32_1 = arith.constant 0 : i32
    return %1, %c0_i32, %c0_i32_0 : i32, i32, i32
  }
  func.func @transform_3(%arg0: i32, %arg1: i32) -> (i32, i32, i32) {
    %c1_i32 = arith.constant 1 : i32
    %0 = arith.muli %arg0, %c1_i32 : i32
    %1 = arith.addi %0, %arg1 : i32
    %c0_i32 = arith.constant 0 : i32
    %c0_i32_0 = arith.constant 0 : i32
    %c0_i32_1 = arith.constant 0 : i32
    return %1, %c0_i32, %c0_i32_0 : i32, i32, i32
  }
  func.func @transform_4(%arg0: i32, %arg1: i32) -> (i32, i32, i32) {
    %c1_i32 = arith.constant 1 : i32
    %0 = arith.muli %arg0, %c1_i32 : i32
    %1 = arith.addi %0, %arg1 : i32
    %c0_i32 = arith.constant 0 : i32
    %c0_i32_0 = arith.constant 0 : i32
    %c0_i32_1 = arith.constant 0 : i32
    return %1, %c0_i32, %c0_i32_0 : i32, i32, i32
  }
}

module attributes {stable_mosaic.version = 11 : i64} {
  func.func @_affine_matmul_stats_kernel(%arg0: i32, %arg1: memref<128x128xbf16, #tpu.memory_space<vmem>>, %arg2: memref<1x128xf32, #tpu.memory_space<vmem>>, %arg3: memref<1x128xf32, #tpu.memory_space<vmem>>, %arg4: memref<128x128xbf16, #tpu.memory_space<vmem>>, %arg5: memref<128x128xbf16, #tpu.memory_space<vmem>>, %arg6: memref<1x1x128xf32, #tpu.memory_space<vmem>>, %arg7: memref<1x1x128xf32, #tpu.memory_space<vmem>>) attributes {dimension_semantics = [#tpu.dimension_semantics<parallel>], iteration_bounds = array<i64: 1>, scalar_prefetch = 0 : i64, scratch_operands = 0 : i64, tpu.core_type = #tpu.core_type<tc>, window_params = [{transform_indices = @transform_0, window_bounds = array<i64: 128, 128>}, {pipeline_mode = #tpu.pipeline_mode<synchronous>, transform_indices = @transform_1, window_bounds = array<i64: 1, 128>}, {pipeline_mode = #tpu.pipeline_mode<synchronous>, transform_indices = @transform_2, window_bounds = array<i64: 1, 128>}, {pipeline_mode = #tpu.pipeline_mode<synchronous>, transform_indices = @transform_3, window_bounds = array<i64: 128, 128>}, {transform_indices = @transform_4, window_bounds = array<i64: 128, 128>}, {transform_indices = @transform_5, window_bounds = array<i64: 1, 1, 128>}, {transform_indices = @transform_6, window_bounds = array<i64: 1, 1, 128>}]} {
    %c0 = arith.constant 0 : index
    %c0_0 = arith.constant 0 : index
    %0 = vector.load %arg1[%c0, %c0_0] : memref<128x128xbf16, #tpu.memory_space<vmem>>, vector<128x128xbf16>
    %1 = arith.extf %0 : vector<128x128xbf16> to vector<128x128xf32>
    %c0_1 = arith.constant 0 : index
    %c0_2 = arith.constant 0 : index
    %2 = vector.load %arg2[%c0_1, %c0_2] : memref<1x128xf32, #tpu.memory_space<vmem>>, vector<1x128xf32>
    %3 = vector.broadcast %2 : vector<1x128xf32> to vector<128x128xf32>
    %4 = arith.mulf %1, %3 : vector<128x128xf32>
    %c0_3 = arith.constant 0 : index
    %c0_4 = arith.constant 0 : index
    %5 = vector.load %arg3[%c0_3, %c0_4] : memref<1x128xf32, #tpu.memory_space<vmem>>, vector<1x128xf32>
    %6 = vector.broadcast %5 : vector<1x128xf32> to vector<128x128xf32>
    %7 = arith.addf %4, %6 : vector<128x128xf32>
    %cst = arith.constant 0.000000e+00 : f32
    %8 = vector.broadcast %cst : f32 to vector<128x128xf32>
    %9 = arith.maximumf %7, %8 : vector<128x128xf32>
    %10 = arith.truncf %9 : vector<128x128xf32> to vector<128x128xbf16>
    %c0_5 = arith.constant 0 : index
    %c0_6 = arith.constant 0 : index
    %11 = vector.load %arg4[%c0_5, %c0_6] : memref<128x128xbf16, #tpu.memory_space<vmem>>, vector<128x128xbf16>
    %cst_7 = arith.constant dense<0.000000e+00> : vector<128x128xf32>
    %12 = tpu.matmul %10, %11, %cst_7 {dimension_numbers = #tpu.dot_dimension_numbers<[1], [0], [0], [1], [0, 0, 1, 1], [], []>} : vector<128x128xbf16>, vector<128x128xbf16>, vector<128x128xf32> -> vector<128x128xf32>
    %cst_8 = arith.constant dense<0.000000e+00> : vector<128xf32>
    %13 = vector.multi_reduction <add>, %12, %cst_8 [0] : vector<128x128xf32> to vector<128xf32>
    %14 = vector.shape_cast %13 : vector<128xf32> to vector<1x128xf32>
    %15 = vector.shape_cast %14 : vector<1x128xf32> to vector<1x1x128xf32>
    %c0_9 = arith.constant 0 : index
    %c0_10 = arith.constant 0 : index
    %c0_11 = arith.constant 0 : index
    %16 = vector.load %arg6[%c0_9, %c0_10, %c0_11] : memref<1x1x128xf32, #tpu.memory_space<vmem>>, vector<1x1x128xf32>
    tpu.vector_store %arg6[%c0_9, %c0_10, %c0_11], %15 {strides = array<i32>} : memref<1x1x128xf32, #tpu.memory_space<vmem>>, vector<1x1x128xf32>,
    %17 = arith.mulf %12, %12 : vector<128x128xf32>
    %cst_12 = arith.constant dense<0.000000e+00> : vector<128xf32>
    %18 = vector.multi_reduction <add>, %17, %cst_12 [0] : vector<128x128xf32> to vector<128xf32>
    %19 = vector.shape_cast %18 : vector<128xf32> to vector<1x128xf32>
    %20 = vector.shape_cast %19 : vector<1x128xf32> to vector<1x1x128xf32>
    %c0_13 = arith.constant 0 : index
    %c0_14 = arith.constant 0 : index
    %c0_15 = arith.constant 0 : index
    %21 = vector.load %arg7[%c0_13, %c0_14, %c0_15] : memref<1x1x128xf32, #tpu.memory_space<vmem>>, vector<1x1x128xf32>
    tpu.vector_store %arg7[%c0_13, %c0_14, %c0_15], %20 {strides = array<i32>} : memref<1x1x128xf32, #tpu.memory_space<vmem>>, vector<1x1x128xf32>,
    %22 = arith.truncf %12 : vector<128x128xf32> to vector<128x128xbf16>
    %c0_16 = arith.constant 0 : index
    %c0_17 = arith.constant 0 : index
    %23 = vector.load %arg5[%c0_16, %c0_17] : memref<128x128xbf16, #tpu.memory_space<vmem>>, vector<128x128xbf16>
    tpu.vector_store %arg5[%c0_16, %c0_17], %22 {strides = array<i32>} : memref<128x128xbf16, #tpu.memory_space<vmem>>, vector<128x128xbf16>,
    return
  }
  func.func @transform_0(%arg0: i32) -> (i32, i32) {
    %c0_i32 = arith.constant 0 : i32
    %c0_i32_0 = arith.constant 0 : i32
    return %arg0, %c0_i32 : i32, i32
  }
  func.func @transform_1(%arg0: i32) -> (i32, i32) {
    %c0_i32 = arith.constant 0 : i32
    %c0_i32_0 = arith.constant 0 : i32
    %c0_i32_1 = arith.constant 0 : i32
    return %c0_i32, %c0_i32_0 : i32, i32
  }
  func.func @transform_2(%arg0: i32) -> (i32, i32) {
    %c0_i32 = arith.constant 0 : i32
    %c0_i32_0 = arith.constant 0 : i32
    %c0_i32_1 = arith.constant 0 : i32
    return %c0_i32, %c0_i32_0 : i32, i32
  }
  func.func @transform_3(%arg0: i32) -> (i32, i32) {
    %c0_i32 = arith.constant 0 : i32
    %c0_i32_0 = arith.constant 0 : i32
    %c0_i32_1 = arith.constant 0 : i32
    return %c0_i32, %c0_i32_0 : i32, i32
  }
  func.func @transform_4(%arg0: i32) -> (i32, i32) {
    %c0_i32 = arith.constant 0 : i32
    %c0_i32_0 = arith.constant 0 : i32
    return %arg0, %c0_i32 : i32, i32
  }
  func.func @transform_5(%arg0: i32) -> (i32, i32, i32) {
    %c0_i32 = arith.constant 0 : i32
    %c0_i32_0 = arith.constant 0 : i32
    %c0_i32_1 = arith.constant 0 : i32
    return %arg0, %c0_i32, %c0_i32_0 : i32, i32, i32
  }
  func.func @transform_6(%arg0: i32) -> (i32, i32, i32) {
    %c0_i32 = arith.constant 0 : i32
    %c0_i32_0 = arith.constant 0 : i32
    %c0_i32_1 = arith.constant 0 : i32
    return %arg0, %c0_i32, %c0_i32_0 : i32, i32, i32
  }
}

module attributes {stable_mosaic.version = 11 : i64} {
  func.func @_bn_add_relu_kernel(%arg0: i32, %arg1: memref<128x128xbf16, #tpu.memory_space<vmem>>, %arg2: memref<1x128xf32, #tpu.memory_space<vmem>>, %arg3: memref<1x128xf32, #tpu.memory_space<vmem>>, %arg4: memref<128x128xbf16, #tpu.memory_space<vmem>>, %arg5: memref<1x128xf32, #tpu.memory_space<vmem>>, %arg6: memref<1x128xf32, #tpu.memory_space<vmem>>, %arg7: memref<128x128xf32, #tpu.memory_space<vmem>>) attributes {dimension_semantics = [#tpu.dimension_semantics<parallel>], iteration_bounds = array<i64: 1>, scalar_prefetch = 0 : i64, scratch_operands = 0 : i64, tpu.core_type = #tpu.core_type<tc>, window_params = [{transform_indices = @transform_0, window_bounds = array<i64: 128, 128>}, {pipeline_mode = #tpu.pipeline_mode<synchronous>, transform_indices = @transform_1, window_bounds = array<i64: 1, 128>}, {pipeline_mode = #tpu.pipeline_mode<synchronous>, transform_indices = @transform_2, window_bounds = array<i64: 1, 128>}, {transform_indices = @transform_3, window_bounds = array<i64: 128, 128>}, {pipeline_mode = #tpu.pipeline_mode<synchronous>, transform_indices = @transform_4, window_bounds = array<i64: 1, 128>}, {pipeline_mode = #tpu.pipeline_mode<synchronous>, transform_indices = @transform_5, window_bounds = array<i64: 1, 128>}, {transform_indices = @transform_6, window_bounds = array<i64: 128, 128>}]} {
    %c0 = arith.constant 0 : index
    %c0_0 = arith.constant 0 : index
    %0 = vector.load %arg4[%c0, %c0_0] : memref<128x128xbf16, #tpu.memory_space<vmem>>, vector<128x128xbf16>
    %1 = arith.extf %0 : vector<128x128xbf16> to vector<128x128xf32>
    %c0_1 = arith.constant 0 : index
    %c0_2 = arith.constant 0 : index
    %2 = vector.load %arg5[%c0_1, %c0_2] : memref<1x128xf32, #tpu.memory_space<vmem>>, vector<1x128xf32>
    %3 = vector.broadcast %2 : vector<1x128xf32> to vector<128x128xf32>
    %4 = arith.mulf %1, %3 : vector<128x128xf32>
    %c0_3 = arith.constant 0 : index
    %c0_4 = arith.constant 0 : index
    %5 = vector.load %arg6[%c0_3, %c0_4] : memref<1x128xf32, #tpu.memory_space<vmem>>, vector<1x128xf32>
    %6 = vector.broadcast %5 : vector<1x128xf32> to vector<128x128xf32>
    %7 = arith.addf %4, %6 : vector<128x128xf32>
    %c0_5 = arith.constant 0 : index
    %c0_6 = arith.constant 0 : index
    %8 = vector.load %arg1[%c0_5, %c0_6] : memref<128x128xbf16, #tpu.memory_space<vmem>>, vector<128x128xbf16>
    %9 = arith.extf %8 : vector<128x128xbf16> to vector<128x128xf32>
    %c0_7 = arith.constant 0 : index
    %c0_8 = arith.constant 0 : index
    %10 = vector.load %arg2[%c0_7, %c0_8] : memref<1x128xf32, #tpu.memory_space<vmem>>, vector<1x128xf32>
    %11 = vector.broadcast %10 : vector<1x128xf32> to vector<128x128xf32>
    %12 = arith.mulf %9, %11 : vector<128x128xf32>
    %c0_9 = arith.constant 0 : index
    %c0_10 = arith.constant 0 : index
    %13 = vector.load %arg3[%c0_9, %c0_10] : memref<1x128xf32, #tpu.memory_space<vmem>>, vector<1x128xf32>
    %14 = vector.broadcast %13 : vector<1x128xf32> to vector<128x128xf32>
    %15 = arith.addf %12, %14 : vector<128x128xf32>
    %16 = arith.addf %15, %7 : vector<128x128xf32>
    %cst = arith.constant 0.000000e+00 : f32
    %17 = vector.broadcast %cst : f32 to vector<128x128xf32>
    %18 = arith.maximumf %16, %17 : vector<128x128xf32>
    %c0_11 = arith.constant 0 : index
    %c0_12 = arith.constant 0 : index
    %19 = vector.load %arg7[%c0_11, %c0_12] : memref<128x128xf32, #tpu.memory_space<vmem>>, vector<128x128xf32>
    tpu.vector_store %arg7[%c0_11, %c0_12], %18 {strides = array<i32>} : memref<128x128xf32, #tpu.memory_space<vmem>>, vector<128x128xf32>,
    return
  }
  func.func @transform_0(%arg0: i32) -> (i32, i32) {
    %c0_i32 = arith.constant 0 : i32
    %c0_i32_0 = arith.constant 0 : i32
    return %arg0, %c0_i32 : i32, i32
  }
  func.func @transform_1(%arg0: i32) -> (i32, i32) {
    %c0_i32 = arith.constant 0 : i32
    %c0_i32_0 = arith.constant 0 : i32
    %c0_i32_1 = arith.constant 0 : i32
    return %c0_i32, %c0_i32_0 : i32, i32
  }
  func.func @transform_2(%arg0: i32) -> (i32, i32) {
    %c0_i32 = arith.constant 0 : i32
    %c0_i32_0 = arith.constant 0 : i32
    %c0_i32_1 = arith.constant 0 : i32
    return %c0_i32, %c0_i32_0 : i32, i32
  }
  func.func @transform_3(%arg0: i32) -> (i32, i32) {
    %c0_i32 = arith.constant 0 : i32
    %c0_i32_0 = arith.constant 0 : i32
    return %arg0, %c0_i32 : i32, i32
  }
  func.func @transform_4(%arg0: i32) -> (i32, i32) {
    %c0_i32 = arith.constant 0 : i32
    %c0_i32_0 = arith.constant 0 : i32
    %c0_i32_1 = arith.constant 0 : i32
    return %c0_i32, %c0_i32_0 : i32, i32
  }
  func.func @transform_5(%arg0: i32) -> (i32, i32) {
    %c0_i32 = arith.constant 0 : i32
    %c0_i32_0 = arith.constant 0 : i32
    %c0_i32_1 = arith.constant 0 : i32
    return %c0_i32, %c0_i32_0 : i32, i32
  }
  func.func @transform_6(%arg0: i32) -> (i32, i32) {
    %c0_i32 = arith.constant 0 : i32
    %c0_i32_0 = arith.constant 0 : i32
    return %arg0, %c0_i32 : i32, i32
  }
}

module attributes {stable_mosaic.version = 11 : i64} {
  func.func @_matmul_stats_kernel(%arg0: i32, %arg1: memref<128x128xbf16, #tpu.memory_space<vmem>>, %arg2: memref<128x128xbf16, #tpu.memory_space<vmem>>, %arg3: memref<128x128xbf16, #tpu.memory_space<vmem>>, %arg4: memref<1x1x128xf32, #tpu.memory_space<vmem>>, %arg5: memref<1x1x128xf32, #tpu.memory_space<vmem>>) attributes {dimension_semantics = [#tpu.dimension_semantics<parallel>], iteration_bounds = array<i64: 1>, scalar_prefetch = 0 : i64, scratch_operands = 0 : i64, tpu.core_type = #tpu.core_type<tc>, window_params = [{transform_indices = @transform_0, window_bounds = array<i64: 128, 128>}, {pipeline_mode = #tpu.pipeline_mode<synchronous>, transform_indices = @transform_1, window_bounds = array<i64: 128, 128>}, {transform_indices = @transform_2, window_bounds = array<i64: 128, 128>}, {transform_indices = @transform_3, window_bounds = array<i64: 1, 1, 128>}, {transform_indices = @transform_4, window_bounds = array<i64: 1, 1, 128>}]} {
    %c0 = arith.constant 0 : index
    %c0_0 = arith.constant 0 : index
    %0 = vector.load %arg1[%c0, %c0_0] : memref<128x128xbf16, #tpu.memory_space<vmem>>, vector<128x128xbf16>
    %c0_1 = arith.constant 0 : index
    %c0_2 = arith.constant 0 : index
    %1 = vector.load %arg2[%c0_1, %c0_2] : memref<128x128xbf16, #tpu.memory_space<vmem>>, vector<128x128xbf16>
    %cst = arith.constant dense<0.000000e+00> : vector<128x128xf32>
    %2 = tpu.matmul %0, %1, %cst {dimension_numbers = #tpu.dot_dimension_numbers<[1], [0], [0], [1], [0, 0, 1, 1], [], []>} : vector<128x128xbf16>, vector<128x128xbf16>, vector<128x128xf32> -> vector<128x128xf32>
    %cst_3 = arith.constant dense<0.000000e+00> : vector<128xf32>
    %3 = vector.multi_reduction <add>, %2, %cst_3 [0] : vector<128x128xf32> to vector<128xf32>
    %4 = vector.shape_cast %3 : vector<128xf32> to vector<1x128xf32>
    %5 = vector.shape_cast %4 : vector<1x128xf32> to vector<1x1x128xf32>
    %c0_4 = arith.constant 0 : index
    %c0_5 = arith.constant 0 : index
    %c0_6 = arith.constant 0 : index
    %6 = vector.load %arg4[%c0_4, %c0_5, %c0_6] : memref<1x1x128xf32, #tpu.memory_space<vmem>>, vector<1x1x128xf32>
    tpu.vector_store %arg4[%c0_4, %c0_5, %c0_6], %5 {strides = array<i32>} : memref<1x1x128xf32, #tpu.memory_space<vmem>>, vector<1x1x128xf32>,
    %7 = arith.mulf %2, %2 : vector<128x128xf32>
    %cst_7 = arith.constant dense<0.000000e+00> : vector<128xf32>
    %8 = vector.multi_reduction <add>, %7, %cst_7 [0] : vector<128x128xf32> to vector<128xf32>
    %9 = vector.shape_cast %8 : vector<128xf32> to vector<1x128xf32>
    %10 = vector.shape_cast %9 : vector<1x128xf32> to vector<1x1x128xf32>
    %c0_8 = arith.constant 0 : index
    %c0_9 = arith.constant 0 : index
    %c0_10 = arith.constant 0 : index
    %11 = vector.load %arg5[%c0_8, %c0_9, %c0_10] : memref<1x1x128xf32, #tpu.memory_space<vmem>>, vector<1x1x128xf32>
    tpu.vector_store %arg5[%c0_8, %c0_9, %c0_10], %10 {strides = array<i32>} : memref<1x1x128xf32, #tpu.memory_space<vmem>>, vector<1x1x128xf32>,
    %12 = arith.truncf %2 : vector<128x128xf32> to vector<128x128xbf16>
    %c0_11 = arith.constant 0 : index
    %c0_12 = arith.constant 0 : index
    %13 = vector.load %arg3[%c0_11, %c0_12] : memref<128x128xbf16, #tpu.memory_space<vmem>>, vector<128x128xbf16>
    tpu.vector_store %arg3[%c0_11, %c0_12], %12 {strides = array<i32>} : memref<128x128xbf16, #tpu.memory_space<vmem>>, vector<128x128xbf16>,
    return
  }
  func.func @transform_0(%arg0: i32) -> (i32, i32) {
    %c0_i32 = arith.constant 0 : i32
    %c0_i32_0 = arith.constant 0 : i32
    return %arg0, %c0_i32 : i32, i32
  }
  func.func @transform_1(%arg0: i32) -> (i32, i32) {
    %c0_i32 = arith.constant 0 : i32
    %c0_i32_0 = arith.constant 0 : i32
    %c0_i32_1 = arith.constant 0 : i32
    return %c0_i32, %c0_i32_0 : i32, i32
  }
  func.func @transform_2(%arg0: i32) -> (i32, i32) {
    %c0_i32 = arith.constant 0 : i32
    %c0_i32_0 = arith.constant 0 : i32
    return %arg0, %c0_i32 : i32, i32
  }
  func.func @transform_3(%arg0: i32) -> (i32, i32, i32) {
    %c0_i32 = arith.constant 0 : i32
    %c0_i32_0 = arith.constant 0 : i32
    %c0_i32_1 = arith.constant 0 : i32
    return %arg0, %c0_i32, %c0_i32_0 : i32, i32, i32
  }
  func.func @transform_4(%arg0: i32) -> (i32, i32, i32) {
    %c0_i32 = arith.constant 0 : i32
    %c0_i32_0 = arith.constant 0 : i32
    %c0_i32_1 = arith.constant 0 : i32
    return %arg0, %c0_i32, %c0_i32_0 : i32, i32, i32
  }
}

</mosaic_0001>

<llo_original>
// kernel: bottleneck_forward.5
$region0: #{bottleneck_forward.5}
  #allocation0 [shape = 'u32[]', space=smem, size = 0x4, offset = 0x4, fixed_abs, tag = 'smem constant byte address 0x4 - core index']
  #allocation1 [shape = 'u32[144,128]{1,0:T(1,128)}', space=vmem, size = 0x12000, scoped, tag = 'internal scratch']
  %s0 = inlined_call_operand.vmem [shape: bf16[512,128], index: 0, kind: input, shape index: {}]
  %s1 = inlined_call_operand.vmem [shape: bf16[128,128], index: 1, kind: input, shape index: {}]
  %s2 = inlined_call_operand.vmem [shape: bf16[512,128], index: 2, kind: output, shape index: {0}]
  %s3 = inlined_call_operand.vmem [shape: f32[2,1,128], index: 3, kind: output, shape index: {1}]
  %s4 = inlined_call_operand.vmem [shape: f32[2,1,128], index: 4, kind: output, shape index: {2}]
  %5 = xla_tuple %s2, %s3, %s4
  %s6 = sld [smem:[#allocation0]]
  $region57: #{bottleneck_forward.5} parent=0
    _
  %s8 = ssub.s32 1, %s6
  %s9 = scalar_select 0, %s8, %s6
  loop: start=0, step=1, limit=4
  $region2: #{bottleneck_forward.5} parent=0 // loop_pre_header
    _
  $region3: #{bottleneck_forward.5} parent=0 // loop_header
    %s11 = sphi 0, %s15
    %p12 = scmp.ge.s32.totalorder %s11, 4
    %s21 = sphi 0, %s23
    %s24 = sphi 0, %s21
    %s25 = sphi 0, %s24
    %s41 = sphi 0, %s25
    %s45 = sphi 0, %s45
    %s47 = sphi 0, %s45
    %s48 = sphi 0, %s47
    %s62 = sphi 0, %s48
    %s68 = sphi 0, %s70
    %s71 = sphi 0, %s68
    %s72 = sphi 0, %s71
    %s88 = sphi 0, %s72
    %s94 = sphi 0, %s96
    %s97 = sphi 0, %s94
    %s98 = sphi 0, %s97
    %s114 = sphi 0, %s98
    %s120 = sphi 0, %s122
    %s123 = sphi 0, %s120
    %s124 = sphi 0, %s123
    %s140 = sphi 0, %s124
  $region4: #{bottleneck_forward.5} parent=0 // loop_header_branch
    %14 = sbr.rel (%p12) target = $region8
  $region5: #{bottleneck_forward.5} parent=0 // loop_body
    %s16 = ssub.s32 %s11, 1
    %s17 = ssub.s32 %s11, 2
    %s18 = sadd.s32 %s11, 1
    %s19 = ssub.s32 %s11, %s18
    %p20 = scmp.eq.s32.totalorder %s19, 0
    %s22 = sadd.s32 %s21, 1
    %s23 = scalar_select %p20, %s21, %s22
    %p26 = pneg %p20
    %p27 = scmp.eq.s32.totalorder %s11, 1
    %p28 = por %p26, %p27
    %p29 = scmp.ne.s32.totalorder %s21, %s24
    %p30 = scmp.eq.s32.totalorder %s11, 0
    %p31 = por %p29, %p30
    %p32 = scmp.ne.s32.totalorder %s21, %s24
    %p33 = scmp.eq.s32.totalorder %s16, 1
    %p34 = por %p32, %p33
    %p35 = scmp.ne.s32.totalorder %s24, %s25
    %p36 = scmp.eq.s32.totalorder %s16, 0
    %p37 = por %p35, %p36
    %p38 = scmp.ne.s32.totalorder %s24, %s25
    %p39 = scmp.eq.s32.totalorder %s17, 1
    %p40 = por %p38, %p39
    %p42 = scmp.ne.s32.totalorder %s25, %s41
    %p43 = scmp.eq.s32.totalorder %s17, 0
    %p44 = por %p42, %p43
    %s46 = sadd.s32 %s45, 1
    %p49 = scmp.eq.s32.totalorder %s11, 1
    %p50 = scmp.ne.s32.totalorder %s45, %s47
    %p51 = scmp.eq.s32.totalorder %s11, 0
    %p52 = por %p50, %p51
    %p53 = scmp.ne.s32.totalorder %s45, %s47
    %p54 = scmp.eq.s32.totalorder %s16, 1
    %p55 = por %p53, %p54
    %p56 = scmp.ne.s32.totalorder %s47, %s48
    %p57 = scmp.eq.s32.totalorder %s16, 0
    %p58 = por %p56, %p57
    %p59 = scmp.ne.s32.totalorder %s47, %s48
    %p60 = scmp.eq.s32.totalorder %s17, 1
    %p61 = por %p59, %p60
    %p63 = scmp.ne.s32.totalorder %s48, %s62
    %p64 = scmp.eq.s32.totalorder %s17, 0
    %p65 = por %p63, %p64
    %s66 = ssub.s32 %s11, %s18
    %p67 = scmp.eq.s32.totalorder %s66, 0
    %s69 = sadd.s32 %s68, 1
    %s70 = scalar_select %p67, %s68, %s69
    %p73 = pneg %p67
    %p74 = scmp.eq.s32.totalorder %s11, 1
    %p75 = por %p73, %p74
    %p76 = scmp.ne.s32.totalorder %s68, %s71
    %p77 = scmp.eq.s32.totalorder %s11, 0
    %p78 = por %p76, %p77
    %p79 = scmp.ne.s32.totalorder %s68, %s71
    %p80 = scmp.eq.s32.totalorder %s16, 1
    %p81 = por %p79, %p80
    %p82 = scmp.ne.s32.totalorder %s71, %s72
    %p83 = scmp.eq.s32.totalorder %s16, 0
    %p84 = por %p82, %p83
    %p85 = scmp.ne.s32.totalorder %s71, %s72
    %p86 = scmp.eq.s32.totalorder %s17, 1
    %p87 = por %p85, %p86
    %p89 = scmp.ne.s32.totalorder %s72, %s88
    %p90 = scmp.eq.s32.totalorder %s17, 0
    %p91 = por %p89, %p90
    %s92 = ssub.s32 %s11, %s18
    %p93 = scmp.eq.s32.totalorder %s92, 0
    %s95 = sadd.s32 %s94, 1
    %s96 = scalar_select %p93, %s94, %s95
    %p99 = pneg %p93
    %p100 = scmp.eq.s32.totalorder %s11, 1
    %p101 = por %p99, %p100
    %p102 = scmp.ne.s32.totalorder %s94, %s97
    %p103 = scmp.eq.s32.totalorder %s11, 0
    %p104 = por %p102, %p103
    %p105 = scmp.ne.s32.totalorder %s94, %s97
    %p106 = scmp.eq.s32.totalorder %s16, 1
    %p107 = por %p105, %p106
    %p108 = scmp.ne.s32.totalorder %s97, %s98
    %p109 = scmp.eq.s32.totalorder %s16, 0
    %p110 = por %p108, %p109
    %p111 = scmp.ne.s32.totalorder %s97, %s98
    %p112 = scmp.eq.s32.totalorder %s17, 1
    %p113 = por %p111, %p112
    %p115 = scmp.ne.s32.totalorder %s98, %s114
    %p116 = scmp.eq.s32.totalorder %s17, 0
    %p117 = por %p115, %p116
    %s118 = ssub.s32 %s11, %s18
    %p119 = scmp.eq.s32.totalorder %s118, 0
    %s121 = sadd.s32 %s120, 1
    %s122 = scalar_select %p119, %s120, %s121
    %p125 = pneg %p119
    %p126 = scmp.eq.s32.totalorder %s11, 1
    %p127 = por %p125, %p126
    %p128 = scmp.ne.s32.totalorder %s120, %s123
    %p129 = scmp.eq.s32.totalorder %s11, 0
    %p130 = por %p128, %p129
    %p131 = scmp.ne.s32.totalorder %s120, %s123
    %p132 = scmp.eq.s32.totalorder %s16, 1
    %p133 = por %p131, %p132
    %p134 = scmp.ne.s32.totalorder %s123, %s124
    %p135 = scmp.eq.s32.totalorder %s16, 0
    %p136 = por %p134, %p135
    %p137 = scmp.ne.s32.totalorder %s123, %s124
    %p138 = scmp.eq.s32.totalorder %s17, 1
    %p139 = por %p137, %p138
    %p141 = scmp.ne.s32.totalorder %s124, %s140
    %p142 = scmp.eq.s32.totalorder %s17, 0
    %p143 = por %p141, %p142
    %p144 = scmp.le.s32.totalorder 1, %s11
    %p145 = scmp.lt.s32.totalorder %s11, 3
    %p146 = pnand %p144, %p145
    %p147 = pneg %p146
    // Predicated region
    $region9: #{bottleneck_forward.5} parent=5 // pred_check
      _
    $region10: #{bottleneck_forward.5} parent=5 // pred_check_branch
      %149 = sbr.rel (%p146) target = $region12
    $region11: #{bottleneck_forward.5} parent=5 // pred_region
      %s150 = ssub.s32 %s11, 1
      // Predicated region
      $region13: #{bottleneck_forward.5} parent=11 // pred_check
        %p151 = pneg %p58
      $region14: #{bottleneck_forward.5} parent=11 // pred_check_branch
        %153 = sbr.rel (%p151) target = $region16
      $region15: #{bottleneck_forward.5} parent=11 // pred_region
        _
      $region16: #{bottleneck_forward.5} parent=11 // pred_fallthru
        _
    $region12: #{bottleneck_forward.5} parent=5 // pred_fallthru
      _
    %p154 = scmp.lt.s32.totalorder %s11, 2
    // Predicated region
    $region17: #{bottleneck_forward.5} parent=5 // pred_check
      %p155 = pneg %p154
    $region18: #{bottleneck_forward.5} parent=5 // pred_check_branch
      %157 = sbr.rel (%p155) target = $region20
    $region19: #{bottleneck_forward.5} parent=5 // pred_region
      // Predicated region
      $region21: #{bottleneck_forward.5} parent=19 // pred_check
        %p158 = pneg %p31
      $region22: #{bottleneck_forward.5} parent=19 // pred_check_branch
        %160 = sbr.rel (%p158) target = $region24
      $region23: #{bottleneck_forward.5} parent=19 // pred_region
        %s161 = smul.u32 32, %s11
        %p162 = scmp.lt.s32.totalorder %s161, 63
        %s163 = scalar_select %p162, %s161, 63
        %s164 = smul.addr %s163, 4
        %s165 = scalar_lea.vmem %s0, %s164
        %s166 = smul.u32 32, %s11
      $region24: #{bottleneck_forward.5} parent=19 // pred_fallthru
        _
    $region20: #{bottleneck_forward.5} parent=5 // pred_fallthru
      _
    %p167 = scmp.le.s32.totalorder 1, %s11
    %p168 = scmp.lt.s32.totalorder %s11, 3
    %p169 = pnand %p167, %p168
    %p170 = pneg %p169
    // Predicated region
    $region25: #{bottleneck_forward.5} parent=5 // pred_check
      _
    $region26: #{bottleneck_forward.5} parent=5 // pred_check_branch
      %172 = sbr.rel (%p169) target = $region28
    $region27: #{bottleneck_forward.5} parent=5 // pred_region
      %s173 = ssub.s32 %s11, 1
      %s174 = smul.u32 32, %s16
      %p175 = scmp.lt.s32.totalorder %s174, 63
      %s176 = scalar_select %p175, %s174, 63
      %s177 = smul.addr %s176, 4
      %s178 = scalar_lea.vmem %s0, %s177
      %p179 = pneg %p37
      %p180 = pneg %p34
      %p181 = pneg %p58
      %p182 = pneg %p55
      %p183 = pneg %p84
      %p184 = pneg %p81
      %s185 = smul.u32 32, %s16
      %p186 = scmp.lt.s32.totalorder %s185, 63
      %s187 = scalar_select %p186, %s185, 63
      %s188 = smul.addr %s187, 4
      %s189 = scalar_lea.vmem %s2, %s188
      %p190 = pneg %p110
      %p191 = pneg %p107
      %p192 = scmp.lt.s32.totalorder %s16, 1
      %s193 = scalar_select %p192, %s16, 1
      %s194 = scalar_lea.vmem %s3, %s193
      %p195 = pneg %p136
      %p196 = pneg %p133
      %p197 = scmp.lt.s32.totalorder %s16, 1
      %s198 = scalar_select %p197, %s16, 1
      %s199 = scalar_lea.vmem %s4, %s198
      %s200 = smul.u32 32, %s16
      %p201 = scmp.lt.s32.totalorder %s200, 63
      %s202 = scalar_select %p201, %s200, 63
      %s203 = smul.addr %s202, 4
      %s204 = scalar_lea.vmem %s0, %s203
      %s205 = smul.u32 32, %s16
      %s206 = smul.u32 32, %s16
      %p207 = scmp.lt.s32.totalorder %s206, 63
      %s208 = scalar_select %p207, %s206, 63
      %s209 = smul.addr %s208, 4
      %s210 = scalar_lea.vmem %s2, %s209
      %s211 = smul.u32 32, %s16
      %p212 = scmp.lt.s32.totalorder %s16, 1
      %s213 = scalar_select %p212, %s16, 1
      %s214 = scalar_lea.vmem %s3, %s213
      %p215 = scmp.lt.s32.totalorder %s16, 1
      %s216 = scalar_select %p215, %s16, 1
      %s217 = scalar_lea.vmem %s4, %s216
      %v219 = vld [vmem:[%s204] sm:$0xf]
      %v220 = vld [vmem:[%s204 + $0x4] sm:$0xf]
      %v221 = vld [vmem:[%s204 + $0x8] sm:$0xf]
      %v222 = vld [vmem:[%s204 + $0xc] sm:$0xf]
      %v223 = vld [vmem:[%s204 + $0x10] sm:$0xf]
      %v224 = vld [vmem:[%s204 + $0x14] sm:$0xf]
      %v225 = vld [vmem:[%s204 + $0x18] sm:$0xf]
      %v226 = vld [vmem:[%s204 + $0x1c] sm:$0xf]
      %v227 = vld [vmem:[%s204 + $0x20] sm:$0xf]
      %v228 = vld [vmem:[%s204 + $0x24] sm:$0xf]
      %v229 = vld [vmem:[%s204 + $0x28] sm:$0xf]
      %v230 = vld [vmem:[%s204 + $0x2c] sm:$0xf]
      %v231 = vld [vmem:[%s204 + $0x30] sm:$0xf]
      %v232 = vld [vmem:[%s204 + $0x34] sm:$0xf]
      %v233 = vld [vmem:[%s204 + $0x38] sm:$0xf]
      %v234 = vld [vmem:[%s204 + $0x3c] sm:$0xf]
      %v235 = vld [vmem:[%s204 + $0x40] sm:$0xf]
      %v236 = vld [vmem:[%s204 + $0x44] sm:$0xf]
      %v237 = vld [vmem:[%s204 + $0x48] sm:$0xf]
      %v238 = vld [vmem:[%s204 + $0x4c] sm:$0xf]
      %v239 = vld [vmem:[%s204 + $0x50] sm:$0xf]
      %v240 = vld [vmem:[%s204 + $0x54] sm:$0xf]
      %v241 = vld [vmem:[%s204 + $0x58] sm:$0xf]
      %v242 = vld [vmem:[%s204 + $0x5c] sm:$0xf]
      %v243 = vld [vmem:[%s204 + $0x60] sm:$0xf]
      %v244 = vld [vmem:[%s204 + $0x64] sm:$0xf]
      %v245 = vld [vmem:[%s204 + $0x68] sm:$0xf]
      %v246 = vld [vmem:[%s204 + $0x6c] sm:$0xf]
      %v247 = vld [vmem:[%s204 + $0x70] sm:$0xf]
      %v248 = vld [vmem:[%s204 + $0x74] sm:$0xf]
      %v249 = vld [vmem:[%s204 + $0x78] sm:$0xf]
      %v250 = vld [vmem:[%s204 + $0x7c] sm:$0xf]
      %v251 = vld [vmem:[%s1] sm:$0xf]
      %v252 = vld [vmem:[%s1 + $0x4] sm:$0xf]
      %v253 = vld [vmem:[%s1 + $0x8] sm:$0xf]
      %v254 = vld [vmem:[%s1 + $0xc] sm:$0xf]
      %v255 = vld [vmem:[%s1 + $0x10] sm:$0xf]
      %v256 = vld [vmem:[%s1 + $0x14] sm:$0xf]
      %v257 = vld [vmem:[%s1 + $0x18] sm:$0xf]
      %v258 = vld [vmem:[%s1 + $0x1c] sm:$0xf]
      %v259 = vld [vmem:[%s1 + $0x20] sm:$0xf]
      %v260 = vld [vmem:[%s1 + $0x24] sm:$0xf]
      %v261 = vld [vmem:[%s1 + $0x28] sm:$0xf]
      %v262 = vld [vmem:[%s1 + $0x2c] sm:$0xf]
      %v263 = vld [vmem:[%s1 + $0x30] sm:$0xf]
      %v264 = vld [vmem:[%s1 + $0x34] sm:$0xf]
      %v265 = vld [vmem:[%s1 + $0x38] sm:$0xf]
      %v266 = vld [vmem:[%s1 + $0x3c] sm:$0xf]
      %v299 = vunpack.c.l.b16 %v219
      %v300 = vunpack.c.l.b16 %v220
      %v301 = vunpack.c.l.b16 %v221
      %v302 = vunpack.c.l.b16 %v222
      %v303 = vunpack.c.l.b16 %v223
      %v304 = vunpack.c.l.b16 %v224
      %v305 = vunpack.c.l.b16 %v225
      %v306 = vunpack.c.l.b16 %v226
      %v307 = vunpack.c.l.b16 %v227
      %v308 = vunpack.c.l.b16 %v228
      %v309 = vunpack.c.l.b16 %v229
      %v310 = vunpack.c.l.b16 %v230
      %v311 = vunpack.c.l.b16 %v231
      %v312 = vunpack.c.l.b16 %v232
      %v313 = vunpack.c.l.b16 %v233
      %v314 = vunpack.c.l.b16 %v234
      %v315 = vunpack.c.l.b16 %v235
      %v316 = vunpack.c.l.b16 %v236
      %v317 = vunpack.c.l.b16 %v237
      %v318 = vunpack.c.l.b16 %v238
      %v319 = vunpack.c.l.b16 %v239
      %v320 = vunpack.c.l.b16 %v240
      %v321 = vunpack.c.l.b16 %v241
      %v322 = vunpack.c.l.b16 %v242
      %v323 = vunpack.c.l.b16 %v243
      %v324 = vunpack.c.l.b16 %v244
      %v325 = vunpack.c.l.b16 %v245
      %v326 = vunpack.c.l.b16 %v246
      %v327 = vunpack.c.l.b16 %v247
      %v328 = vunpack.c.l.b16 %v248
      %v329 = vunpack.c.l.b16 %v249
      %v330 = vunpack.c.l.b16 %v250
      %v331 = vpack.c.b16 %v300, %v299
      %v332 = vpack.c.b16 %v302, %v301
      %v333 = vpack.c.b16 %v304, %v303
      %v334 = vpack.c.b16 %v306, %v305
      %v335 = vpack.c.b16 %v308, %v307
      %v336 = vpack.c.b16 %v310, %v309
      %v337 = vpack.c.b16 %v312, %v311
      %v338 = vpack.c.b16 %v314, %v313
      %v339 = vpack.c.b16 %v316, %v315
      %v340 = vpack.c.b16 %v318, %v317
      %v341 = vpack.c.b16 %v320, %v319
      %v342 = vpack.c.b16 %v322, %v321
      %v343 = vpack.c.b16 %v324, %v323
      %v344 = vpack.c.b16 %v326, %v325
      %v345 = vpack.c.b16 %v328, %v327
      %v346 = vpack.c.b16 %v330, %v329
      %v379 = vunpack.c.l.b16 %v251
      %v380 = vunpack.c.l.b16 %v252
      %v381 = vunpack.c.l.b16 %v253
      %v382 = vunpack.c.l.b16 %v254
      %v383 = vunpack.c.l.b16 %v255
      %v384 = vunpack.c.l.b16 %v256
      %v385 = vunpack.c.l.b16 %v257
      %v386 = vunpack.c.l.b16 %v258
      %v387 = vunpack.c.l.b16 %v259
      %v388 = vunpack.c.l.b16 %v260
      %v389 = vunpack.c.l.b16 %v261
      %v390 = vunpack.c.l.b16 %v262
      %v391 = vunpack.c.l.b16 %v263
      %v392 = vunpack.c.l.b16 %v264
      %v393 = vunpack.c.l.b16 %v265
      %v394 = vunpack.c.l.b16 %v266
      %v395 = vpack.c.b16 %v380, %v379
      %v396 = vpack.c.b16 %v382, %v381
      %v397 = vpack.c.b16 %v384, %v383
      %v398 = vpack.c.b16 %v386, %v385
      %v399 = vpack.c.b16 %v388, %v387
      %v400 = vpack.c.b16 %v390, %v389
      %v401 = vpack.c.b16 %v392, %v391
      %v402 = vpack.c.b16 %v394, %v393
      %411 = vmatprep.subr.bf16.mxu0 0
      %412 = vmatpush1.bf16.msra.mxu0 %v395
      %413 = vmatprep.subr.bf16.mxu0 0
      %414 = vmatpush1.bf16.msra.mxu0 %v396
      %415 = vmatprep.subr.bf16.mxu0 0
      %416 = vmatpush1.bf16.msra.mxu0 %v397
      %417 = vmatprep.subr.bf16.mxu0 0
      %418 = vmatpush1.bf16.msra.mxu0 %v398
      %419 = vmatprep.subr.bf16.mxu0 0
      %420 = vmatpush1.bf16.msra.mxu0 %v399
      %421 = vmatprep.subr.bf16.mxu0 0
      %422 = vmatpush1.bf16.msra.mxu0 %v400
      %423 = vmatprep.subr.bf16.mxu0 0
      %424 = vmatpush1.bf16.msra.mxu0 %v401
      %425 = vmatprep.subr.bf16.mxu0 0
      %426 = vmatpush1.bf16.msra.mxu0 %v402
      %427 = vmatprep.subr.bf16.mxu0 0
      %428 = vmatpush1.bf16.msra.mxu0 0
      %429 = vmatprep.subr.bf16.mxu0 0
      %430 = vmatpush1.bf16.msra.mxu0 0
      %431 = vmatprep.subr.bf16.mxu0 0
      %432 = vmatpush1.bf16.msra.mxu0 0
      %433 = vmatprep.subr.bf16.mxu0 0
      %434 = vmatpush1.bf16.msra.mxu0 0
      %435 = vmatprep.subr.bf16.mxu0 0
      %436 = vmatpush1.bf16.msra.mxu0 0
      %437 = vmatprep.subr.bf16.mxu0 0
      %438 = vmatpush1.bf16.msra.mxu0 0
      %439 = vmatprep.subr.bf16.mxu0 0
      %440 = vmatpush1.bf16.msra.mxu0 0
      %441 = vmatprep.subr.bf16.mxu0 0
      %442 = vmatpush1.bf16.msra.mxu0 0
      %443 = vmatprep.mubr.bf16.mxu0 0
      %444 = vmatmul.mubr.bf16.gmra.mrb[0].mxu0 %v331
      %v445 = vpop.f32.mrb[0].mxu0
      %v446 = vadd.f32 0.0, %v445
      %v447 = vpop.f32.mrb[0].mxu0
      %v448 = vpop.f32.mrb[0].mxu0
      %v449 = vadd.f32 0.0, %v448
      %v450 = vpop.f32.mrb[0].mxu0
      %451 = vmatprep.mubr.bf16.mxu0 0
      %452 = vmatmul.mubr.bf16.gmra.mrb[0].mxu0 %v332
      %v453 = vpop.f32.mrb[0].mxu0
      %v454 = vadd.f32 0.0, %v453
      %v455 = vpop.f32.mrb[0].mxu0
      %v456 = vpop.f32.mrb[0].mxu0
      %v457 = vadd.f32 0.0, %v456
      %v458 = vpop.f32.mrb[0].mxu0
      %459 = vmatprep.mubr.bf16.mxu0 0
      %460 = vmatmul.mubr.bf16.gmra.mrb[0].mxu0 %v333
      %v461 = vpop.f32.mrb[0].mxu0
      %v462 = vadd.f32 0.0, %v461
      %v463 = vpop.f32.mrb[0].mxu0
      %v464 = vpop.f32.mrb[0].mxu0
      %v465 = vadd.f32 0.0, %v464
      %v466 = vpop.f32.mrb[0].mxu0
      %467 = vmatprep.mubr.bf16.mxu0 0
      %468 = vmatmul.mubr.bf16.gmra.mrb[0].mxu0 %v334
      %v469 = vpop.f32.mrb[0].mxu0
      %v470 = vadd.f32 0.0, %v469
      %v471 = vpop.f32.mrb[0].mxu0
      %v472 = vpop.f32.mrb[0].mxu0
      %v473 = vadd.f32 0.0, %v472
      %v474 = vpop.f32.mrb[0].mxu0
      %475 = vmatprep.mubr.bf16.mxu0 0
      %476 = vmatmul.mubr.bf16.gmra.mrb[0].mxu0 %v335
      %v477 = vpop.f32.mrb[0].mxu0
      %v478 = vadd.f32 0.0, %v477
      %v479 = vpop.f32.mrb[0].mxu0
      %v480 = vpop.f32.mrb[0].mxu0
      %v481 = vadd.f32 0.0, %v480
      %v482 = vpop.f32.mrb[0].mxu0
      %483 = vmatprep.mubr.bf16.mxu0 0
      %484 = vmatmul.mubr.bf16.gmra.mrb[0].mxu0 %v336
      %v485 = vpop.f32.mrb[0].mxu0
      %v486 = vadd.f32 0.0, %v485
      %v487 = vpop.f32.mrb[0].mxu0
      %v488 = vpop.f32.mrb[0].mxu0
      %v489 = vadd.f32 0.0, %v488
      %v490 = vpop.f32.mrb[0].mxu0
      %491 = vmatprep.mubr.bf16.mxu0 0
      %492 = vmatmul.mubr.bf16.gmra.mrb[0].mxu0 %v337
      %v493 = vpop.f32.mrb[0].mxu0
      %v494 = vadd.f32 0.0, %v493
      %v495 = vpop.f32.mrb[0].mxu0
      %v496 = vpop.f32.mrb[0].mxu0
      %v497 = vadd.f32 0.0, %v496
      %v498 = vpop.f32.mrb[0].mxu0
      %499 = vmatprep.mubr.bf16.mxu0 0
      %500 = vmatmul.mubr.bf16.gmra.mrb[0].mxu0 %v338
      %v501 = vpop.f32.mrb[0].mxu0
      %v502 = vadd.f32 0.0, %v501
      %v503 = vpop.f32.mrb[0].mxu0
      %v504 = vpop.f32.mrb[0].mxu0
      %v505 = vadd.f32 0.0, %v504
      %v506 = vpop.f32.mrb[0].mxu0
      %507 = vmatprep.mubr.bf16.mxu0 0
      %508 = vmatmul.mubr.bf16.gmra.mrb[0].mxu0 %v339
      %v509 = vpop.f32.mrb[0].mxu0
      %v510 = vadd.f32 0.0, %v509
      %v511 = vpop.f32.mrb[0].mxu0
      %v512 = vpop.f32.mrb[0].mxu0
      %v513 = vadd.f32 0.0, %v512
      %v514 = vpop.f32.mrb[0].mxu0
      %515 = vmatprep.mubr.bf16.mxu0 0
      %516 = vmatmul.mubr.bf16.gmra.mrb[0].mxu0 %v340
      %v517 = vpop.f32.mrb[0].mxu0
      %v518 = vadd.f32 0.0, %v517
      %v519 = vpop.f32.mrb[0].mxu0
      %v520 = vpop.f32.mrb[0].mxu0
      %v521 = vadd.f32 0.0, %v520
      %v522 = vpop.f32.mrb[0].mxu0
      %523 = vmatprep.mubr.bf16.mxu0 0
      %524 = vmatmul.mubr.bf16.gmra.mrb[0].mxu0 %v341
      %v525 = vpop.f32.mrb[0].mxu0
      %v526 = vadd.f32 0.0, %v525
      %v527 = vpop.f32.mrb[0].mxu0
      %v528 = vpop.f32.mrb[0].mxu0
      %v529 = vadd.f32 0.0, %v528
      %v530 = vpop.f32.mrb[0].mxu0
      %531 = vmatprep.mubr.bf16.mxu0 0
      %532 = vmatmul.mubr.bf16.gmra.mrb[0].mxu0 %v342
      %v533 = vpop.f32.mrb[0].mxu0
      %v534 = vadd.f32 0.0, %v533
      %v535 = vpop.f32.mrb[0].mxu0
      %v536 = vpop.f32.mrb[0].mxu0
      %v537 = vadd.f32 0.0, %v536
      %v538 = vpop.f32.mrb[0].mxu0
      %539 = vmatprep.mubr.bf16.mxu0 0
      %540 = vmatmul.mubr.bf16.gmra.mrb[0].mxu0 %v343
      %v541 = vpop.f32.mrb[0].mxu0
      %v542 = vadd.f32 0.0, %v541
      %v543 = vpop.f32.mrb[0].mxu0
      %v544 = vpop.f32.mrb[0].mxu0
      %v545 = vadd.f32 0.0, %v544
      %v546 = vpop.f32.mrb[0].mxu0
      %547 = vmatprep.mubr.bf16.mxu0 0
      %548 = vmatmul.mubr.bf16.gmra.mrb[0].mxu0 %v344
      %v549 = vpop.f32.mrb[0].mxu0
      %v550 = vadd.f32 0.0, %v549
      %v551 = vpop.f32.mrb[0].mxu0
      %v552 = vpop.f32.mrb[0].mxu0
      %v553 = vadd.f32 0.0, %v552
      %v554 = vpop.f32.mrb[0].mxu0
      %555 = vmatprep.mubr.bf16.mxu0 0
      %556 = vmatmul.mubr.bf16.gmra.mrb[0].mxu0 %v345
      %v557 = vpop.f32.mrb[0].mxu0
      %v558 = vadd.f32 0.0, %v557
      %v559 = vpop.f32.mrb[0].mxu0
      %v560 = vpop.f32.mrb[0].mxu0
      %v561 = vadd.f32 0.0, %v560
      %v562 = vpop.f32.mrb[0].mxu0
      %563 = vmatprep.mubr.bf16.mxu0 0
      %564 = vmatmul.mubr.bf16.gmra.mrb[0].mxu0 %v346
      %v565 = vpop.f32.mrb[0].mxu0
      %v566 = vadd.f32 0.0, %v565
      %v567 = vpop.f32.mrb[0].mxu0
      %v568 = vpop.f32.mrb[0].mxu0
      %v569 = vadd.f32 0.0, %v568
      %v570 = vpop.f32.mrb[0].mxu0
      %571 = vdwg.mxu0
      %v572 = vadd.f32 %v446, %v449
      %v573 = vadd.f32 %v572, %v454
      %v574 = vadd.f32 %v573, %v457
      %v575 = vadd.f32 %v574, %v462
      %v576 = vadd.f32 %v575, %v465
      %v577 = vadd.f32 %v576, %v470
      %v578 = vadd.f32 %v577, %v473
      %v579 = vadd.f32 %v578, %v478
      %v580 = vadd.f32 %v579, %v481
      %v581 = vadd.f32 %v580, %v486
      %v582 = vadd.f32 %v581, %v489
      %v583 = vadd.f32 %v582, %v494
      %v584 = vadd.f32 %v583, %v497
      %v585 = vadd.f32 %v584, %v502
      %v586 = vadd.f32 %v585, %v505
      %v587 = vadd.f32 %v586, %v510
      %v588 = vadd.f32 %v587, %v513
      %v589 = vadd.f32 %v588, %v518
      %v590 = vadd.f32 %v589, %v521
      %v591 = vadd.f32 %v590, %v526
      %v592 = vadd.f32 %v591, %v529
      %v593 = vadd.f32 %v592, %v534
      %v594 = vadd.f32 %v593, %v537
      %v595 = vadd.f32 %v594, %v542
      %v596 = vadd.f32 %v595, %v545
      %v597 = vadd.f32 %v596, %v550
      %v598 = vadd.f32 %v597, %v553
      %v599 = vadd.f32 %v598, %v558
      %v600 = vadd.f32 %v599, %v561
      %v601 = vadd.f32 %v600, %v566
      %v602 = vadd.f32 %v601, %v569
      %v603 = vrot.slane %v602, 4
      %v604 = vadd.f32 %v602, %v603
      %v605 = vrot.slane %v604, 2
      %v606 = vadd.f32 %v604, %v605
      %v607 = vrot.slane %v606, 1
      %v608 = vadd.f32 %v606, %v607
      %609 = vst [vmem:[%s214] sm:$0x1] %v608
      %v610 = vmul.f32 %v446, %v446
      %v611 = vmul.f32 %v449, %v449
      %v612 = vmul.f32 %v454, %v454
      %v613 = vmul.f32 %v457, %v457
      %v614 = vmul.f32 %v462, %v462
      %v615 = vmul.f32 %v465, %v465
      %v616 = vmul.f32 %v470, %v470
      %v617 = vmul.f32 %v473, %v473
      %v618 = vmul.f32 %v478, %v478
      %v619 = vmul.f32 %v481, %v481
      %v620 = vmul.f32 %v486, %v486
      %v621 = vmul.f32 %v489, %v489
      %v622 = vmul.f32 %v494, %v494
      %v623 = vmul.f32 %v497, %v497
      %v624 = vmul.f32 %v502, %v502
      %v625 = vmul.f32 %v505, %v505
      %v626 = vmul.f32 %v510, %v510
      %v627 = vmul.f32 %v513, %v513
      %v628 = vmul.f32 %v518, %v518
      %v629 = vmul.f32 %v521, %v521
      %v630 = vmul.f32 %v526, %v526
      %v631 = vmul.f32 %v529, %v529
      %v632 = vmul.f32 %v534, %v534
      %v633 = vmul.f32 %v537, %v537
      %v634 = vmul.f32 %v542, %v542
      %v635 = vmul.f32 %v545, %v545
      %v636 = vmul.f32 %v550, %v550
      %v637 = vmul.f32 %v553, %v553
      %v638 = vmul.f32 %v558, %v558
      %v639 = vmul.f32 %v561, %v561
      %v640 = vmul.f32 %v566, %v566
      %v641 = vmul.f32 %v569, %v569
      %v642 = vadd.f32 %v610, %v611
      %v643 = vadd.f32 %v642, %v612
      %v644 = vadd.f32 %v643, %v613
      %v645 = vadd.f32 %v644, %v614
      %v646 = vadd.f32 %v645, %v615
      %v647 = vadd.f32 %v646, %v616
      %v648 = vadd.f32 %v647, %v617
      %v649 = vadd.f32 %v648, %v618
      %v650 = vadd.f32 %v649, %v619
      %v651 = vadd.f32 %v650, %v620
      %v652 = vadd.f32 %v651, %v621
      %v653 = vadd.f32 %v652, %v622
      %v654 = vadd.f32 %v653, %v623
      %v655 = vadd.f32 %v654, %v624
      %v656 = vadd.f32 %v655, %v625
      %v657 = vadd.f32 %v656, %v626
      %v658 = vadd.f32 %v657, %v627
      %v659 = vadd.f32 %v658, %v628
      %v660 = vadd.f32 %v659, %v629
      %v661 = vadd.f32 %v660, %v630
      %v662 = vadd.f32 %v661, %v631
      %v663 = vadd.f32 %v662, %v632
      %v664 = vadd.f32 %v663, %v633
      %v665 = vadd.f32 %v664, %v634
      %v666 = vadd.f32 %v665, %v635
      %v667 = vadd.f32 %v666, %v636
      %v668 = vadd.f32 %v667, %v637
      %v669 = vadd.f32 %v668, %v638
      %v670 = vadd.f32 %v669, %v639
      %v671 = vadd.f32 %v670, %v640
      %v672 = vadd.f32 %v671, %v641
      %v673 = vrot.slane %v672, 4
      %v674 = vadd.f32 %v672, %v673
      %v675 = vrot.slane %v674, 2
      %v676 = vadd.f32 %v674, %v675
      %v677 = vrot.slane %v676, 1
      %v678 = vadd.f32 %v676, %v677
      %679 = vst [vmem:[%s217] sm:$0x1] %v678
      %v680 = vpack.c.bf16 %v449, %v446
      %v681 = vpack.c.bf16 %v457, %v454
      %v682 = vpack.c.bf16 %v465, %v462
      %v683 = vpack.c.bf16 %v473, %v470
      %v684 = vpack.c.bf16 %v481, %v478
      %v685 = vpack.c.bf16 %v489, %v486
      %v686 = vpack.c.bf16 %v497, %v494
      %v687 = vpack.c.bf16 %v505, %v502
      %v688 = vpack.c.bf16 %v513, %v510
      %v689 = vpack.c.bf16 %v521, %v518
      %v690 = vpack.c.bf16 %v529, %v526
      %v691 = vpack.c.bf16 %v537, %v534
      %v692 = vpack.c.bf16 %v545, %v542
      %v693 = vpack.c.bf16 %v553, %v550
      %v694 = vpack.c.bf16 %v561, %v558
      %v695 = vpack.c.bf16 %v569, %v566
      %v712 = vunpack.c.l.b16 %v680
      %v713 = vunpack.c.h.b16 %v680
      %v714 = vunpack.c.l.b16 %v681
      %v715 = vunpack.c.h.b16 %v681
      %v716 = vunpack.c.l.b16 %v682
      %v717 = vunpack.c.h.b16 %v682
      %v718 = vunpack.c.l.b16 %v683
      %v719 = vunpack.c.h.b16 %v683
      %v720 = vunpack.c.l.b16 %v684
      %v721 = vunpack.c.h.b16 %v684
      %v722 = vunpack.c.l.b16 %v685
      %v723 = vunpack.c.h.b16 %v685
      %v724 = vunpack.c.l.b16 %v686
      %v725 = vunpack.c.h.b16 %v686
      %v726 = vunpack.c.l.b16 %v687
      %v727 = vunpack.c.h.b16 %v687
      %v728 = vunpack.c.l.b16 %v688
      %v729 = vunpack.c.h.b16 %v688
      %v730 = vunpack.c.l.b16 %v689
      %v731 = vunpack.c.h.b16 %v689
      %v732 = vunpack.c.l.b16 %v690
      %v733 = vunpack.c.h.b16 %v690
      %v734 = vunpack.c.l.b16 %v691
      %v735 = vunpack.c.h.b16 %v691
      %v736 = vunpack.c.l.b16 %v692
      %v737 = vunpack.c.h.b16 %v692
      %v738 = vunpack.c.l.b16 %v693
      %v739 = vunpack.c.h.b16 %v693
      %v740 = vunpack.c.l.b16 %v694
      %v741 = vunpack.c.h.b16 %v694
      %v742 = vunpack.c.l.b16 %v695
      %v743 = vunpack.c.h.b16 %v695
      %v744 = vpack.c.b16 %v712, %v712
      %v745 = vpack.c.b16 %v713, %v713
      %v746 = vpack.c.b16 %v714, %v714
      %v747 = vpack.c.b16 %v715, %v715
      %v748 = vpack.c.b16 %v716, %v716
      %v749 = vpack.c.b16 %v717, %v717
      %v750 = vpack.c.b16 %v718, %v718
      %v751 = vpack.c.b16 %v719, %v719
      %v752 = vpack.c.b16 %v720, %v720
      %v753 = vpack.c.b16 %v721, %v721
      %v754 = vpack.c.b16 %v722, %v722
      %v755 = vpack.c.b16 %v723, %v723
      %v756 = vpack.c.b16 %v724, %v724
      %v757 = vpack.c.b16 %v725, %v725
      %v758 = vpack.c.b16 %v726, %v726
      %v759 = vpack.c.b16 %v727, %v727
      %v760 = vpack.c.b16 %v728, %v728
      %v761 = vpack.c.b16 %v729, %v729
      %v762 = vpack.c.b16 %v730, %v730
      %v763 = vpack.c.b16 %v731, %v731
      %v764 = vpack.c.b16 %v732, %v732
      %v765 = vpack.c.b16 %v733, %v733
      %v766 = vpack.c.b16 %v734, %v734
      %v767 = vpack.c.b16 %v735, %v735
      %v768 = vpack.c.b16 %v736, %v736
      %v769 = vpack.c.b16 %v737, %v737
      %v770 = vpack.c.b16 %v738, %v738
      %v771 = vpack.c.b16 %v739, %v739
      %v772 = vpack.c.b16 %v740, %v740
      %v773 = vpack.c.b16 %v741, %v741
      %v774 = vpack.c.b16 %v742, %v742
      %v775 = vpack.c.b16 %v743, %v743
      %808 = vst [vmem:[%s210] sm:$0xf] %v744
      %809 = vst [vmem:[%s210 + $0x4] sm:$0xf] %v745
      %810 = vst [vmem:[%s210 + $0x8] sm:$0xf] %v746
      %811 = vst [vmem:[%s210 + $0xc] sm:$0xf] %v747
      %812 = vst [vmem:[%s210 + $0x10] sm:$0xf] %v748
      %813 = vst [vmem:[%s210 + $0x14] sm:$0xf] %v749
      %814 = vst [vmem:[%s210 + $0x18] sm:$0xf] %v750
      %815 = vst [vmem:[%s210 + $0x1c] sm:$0xf] %v751
      %816 = vst [vmem:[%s210 + $0x20] sm:$0xf] %v752
      %817 = vst [vmem:[%s210 + $0x24] sm:$0xf] %v753
      %818 = vst [vmem:[%s210 + $0x28] sm:$0xf] %v754
      %819 = vst [vmem:[%s210 + $0x2c] sm:$0xf] %v755
      %820 = vst [vmem:[%s210 + $0x30] sm:$0xf] %v756
      %821 = vst [vmem:[%s210 + $0x34] sm:$0xf] %v757
      %822 = vst [vmem:[%s210 + $0x38] sm:$0xf] %v758
      %823 = vst [vmem:[%s210 + $0x3c] sm:$0xf] %v759
      %824 = vst [vmem:[%s210 + $0x40] sm:$0xf] %v760
      %825 = vst [vmem:[%s210 + $0x44] sm:$0xf] %v761
      %826 = vst [vmem:[%s210 + $0x48] sm:$0xf] %v762
      %827 = vst [vmem:[%s210 + $0x4c] sm:$0xf] %v763
      %828 = vst [vmem:[%s210 + $0x50] sm:$0xf] %v764
      %829 = vst [vmem:[%s210 + $0x54] sm:$0xf] %v765
      %830 = vst [vmem:[%s210 + $0x58] sm:$0xf] %v766
      %831 = vst [vmem:[%s210 + $0x5c] sm:$0xf] %v767
      %832 = vst [vmem:[%s210 + $0x60] sm:$0xf] %v768
      %833 = vst [vmem:[%s210 + $0x64] sm:$0xf] %v769
      %834 = vst [vmem:[%s210 + $0x68] sm:$0xf] %v770
      %835 = vst [vmem:[%s210 + $0x6c] sm:$0xf] %v771
      %836 = vst [vmem:[%s210 + $0x70] sm:$0xf] %v772
      %837 = vst [vmem:[%s210 + $0x74] sm:$0xf] %v773
      %838 = vst [vmem:[%s210 + $0x78] sm:$0xf] %v774
      %839 = vst [vmem:[%s210 + $0x7c] sm:$0xf] %v775
      %s840 = smul.u32 32, %s16
      %p841 = scmp.lt.s32.totalorder %s840, 63
      %s842 = scalar_select %p841, %s840, 63
      %s843 = smul.addr %s842, 4
      %s844 = scalar_lea.vmem %s2, %s843
      %p845 = scmp.lt.s32.totalorder %s16, 1
      %s846 = scalar_select %p845, %s16, 1
      %s847 = scalar_lea.vmem %s3, %s846
      %p848 = scmp.lt.s32.totalorder %s16, 1
      %s849 = scalar_select %p848, %s16, 1
      %s850 = scalar_lea.vmem %s4, %s849
      // Predicated region
      $region29: #{bottleneck_forward.5} parent=27 // pred_check
        %p851 = pneg %p81
      $region30: #{bottleneck_forward.5} parent=27 // pred_check_branch
        %853 = sbr.rel (%p851) target = $region32
      $region31: #{bottleneck_forward.5} parent=27 // pred_region
        %s854 = smul.u32 32, %s16
      $region32: #{bottleneck_forward.5} parent=27 // pred_fallthru
        _
      // Predicated region
      $region33: #{bottleneck_forward.5} parent=27 // pred_check
        %p855 = pneg %p107
      $region34: #{bottleneck_forward.5} parent=27 // pred_check_branch
        %857 = sbr.rel (%p855) target = $region36
      $region35: #{bottleneck_forward.5} parent=27 // pred_region
        _
      $region36: #{bottleneck_forward.5} parent=27 // pred_fallthru
        _
      // Predicated region
      $region37: #{bottleneck_forward.5} parent=27 // pred_check
        %p858 = pneg %p133
      $region38: #{bottleneck_forward.5} parent=27 // pred_check_branch
        %860 = sbr.rel (%p858) target = $region40
      $region39: #{bottleneck_forward.5} parent=27 // pred_region
        _
      $region40: #{bottleneck_forward.5} parent=27 // pred_fallthru
        _
    $region28: #{bottleneck_forward.5} parent=5 // pred_fallthru
      _
    %p861 = scmp.le.s32.totalorder 2, %s11
    // Predicated region
    $region41: #{bottleneck_forward.5} parent=5 // pred_check
      %p862 = pneg %p861
    $region42: #{bottleneck_forward.5} parent=5 // pred_check_branch
      %864 = sbr.rel (%p862) target = $region44
    $region43: #{bottleneck_forward.5} parent=5 // pred_region
      %s865 = ssub.s32 %s11, 2
      // Predicated region
      $region45: #{bottleneck_forward.5} parent=43 // pred_check
        %p866 = pneg %p87
      $region46: #{bottleneck_forward.5} parent=43 // pred_check_branch
        %868 = sbr.rel (%p866) target = $region48
      $region47: #{bottleneck_forward.5} parent=43 // pred_region
        %s869 = smul.u32 32, %s17
        %p870 = scmp.lt.s32.totalorder %s869, 63
        %s871 = scalar_select %p870, %s869, 63
        %s872 = smul.addr %s871, 4
        %s873 = scalar_lea.vmem %s2, %s872
      $region48: #{bottleneck_forward.5} parent=43 // pred_fallthru
        _
      // Predicated region
      $region49: #{bottleneck_forward.5} parent=43 // pred_check
        %p874 = pneg %p113
      $region50: #{bottleneck_forward.5} parent=43 // pred_check_branch
        %876 = sbr.rel (%p874) target = $region52
      $region51: #{bottleneck_forward.5} parent=43 // pred_region
        %p877 = scmp.lt.s32.totalorder %s17, 1
        %s878 = scalar_select %p877, %s17, 1
        %s879 = scalar_lea.vmem %s3, %s878
      $region52: #{bottleneck_forward.5} parent=43 // pred_fallthru
        _
      // Predicated region
      $region53: #{bottleneck_forward.5} parent=43 // pred_check
        %p880 = pneg %p139
      $region54: #{bottleneck_forward.5} parent=43 // pred_check_branch
        %882 = sbr.rel (%p880) target = $region56
      $region55: #{bottleneck_forward.5} parent=43 // pred_region
        %p883 = scmp.lt.s32.totalorder %s17, 1
        %s884 = scalar_select %p883, %s17, 1
        %s885 = scalar_lea.vmem %s4, %s884
      $region56: #{bottleneck_forward.5} parent=43 // pred_fallthru
        _
    $region44: #{bottleneck_forward.5} parent=5 // pred_fallthru
      _
  $region6: #{bottleneck_forward.5} parent=0 // loop_footer
    %s15 = sadd.s32 1, %s11
  $region7: #{bottleneck_forward.5} parent=0 // loop_footer_branch
    %10 = sbr.rel target = $region3
  $region8: #{bottleneck_forward.5} parent=0 // loop_exit
    _

// kernel: bottleneck_forward.7
$region0: #{bottleneck_forward.7}
  #allocation0 [shape = 'u32[]', space=smem, size = 0x4, offset = 0x4, fixed_abs, tag = 'smem constant byte address 0x4 - core index']
  #allocation1 [shape = 'u32[144,128]{1,0:T(1,128)}', space=vmem, size = 0x12000, scoped, tag = 'internal scratch']
  %s0 = inlined_call_operand.vmem [shape: bf16[128,128], index: 0, kind: input, shape index: {}]
  %s1 = inlined_call_operand.vmem [shape: f32[1,128], index: 1, kind: input, shape index: {}]
  %s2 = inlined_call_operand.vmem [shape: f32[1,128], index: 2, kind: input, shape index: {}]
  %s3 = inlined_call_operand.vmem [shape: bf16[128,128], index: 3, kind: input, shape index: {}]
  %s4 = inlined_call_operand.vmem [shape: bf16[128,128], index: 4, kind: output, shape index: {0}]
  %s5 = inlined_call_operand.vmem [shape: f32[1,1,128], index: 5, kind: output, shape index: {1}]
  %s6 = inlined_call_operand.vmem [shape: f32[1,1,128], index: 6, kind: output, shape index: {2}]
  %7 = xla_tuple %s4, %s5, %s6
  %s8 = sld [smem:[#allocation0]]
  $region42: #{bottleneck_forward.7} parent=0
    _
  %s10 = ssub.s32 1, %s8
  %s11 = scalar_select 0, %s10, %s8
  // Predicated region
  $region2: #{bottleneck_forward.7} parent=0 // pred_check
    _
  $region3: #{bottleneck_forward.7} parent=0 // pred_check_branch
    %13 = sbr.rel (0) target = $region5
  $region4: #{bottleneck_forward.7} parent=0 // pred_region
    _
  $region5: #{bottleneck_forward.7} parent=0 // pred_fallthru
    _
  // Predicated region
  $region6: #{bottleneck_forward.7} parent=0 // pred_check
    _
  $region7: #{bottleneck_forward.7} parent=0 // pred_check_branch
    %15 = sbr.rel (0) target = $region9
  $region8: #{bottleneck_forward.7} parent=0 // pred_region
    _
  $region9: #{bottleneck_forward.7} parent=0 // pred_fallthru
    _
  // Predicated region
  $region10: #{bottleneck_forward.7} parent=0 // pred_check
    _
  $region11: #{bottleneck_forward.7} parent=0 // pred_check_branch
    %17 = sbr.rel (0) target = $region13
  $region12: #{bottleneck_forward.7} parent=0 // pred_region
    _
  $region13: #{bottleneck_forward.7} parent=0 // pred_fallthru
    _
  // Predicated region
  $region14: #{bottleneck_forward.7} parent=0 // pred_check
    _
  $region15: #{bottleneck_forward.7} parent=0 // pred_check_branch
    %19 = sbr.rel (0) target = $region17
  $region16: #{bottleneck_forward.7} parent=0 // pred_region
    _
  $region17: #{bottleneck_forward.7} parent=0 // pred_fallthru
    _
  %v21 = vld [vmem:[%s0] sm:$0xf]
  %v22 = vld [vmem:[%s0 + $0x4] sm:$0xf]
  %v23 = vld [vmem:[%s0 + $0x8] sm:$0xf]
  %v24 = vld [vmem:[%s0 + $0xc] sm:$0xf]
  %v25 = vld [vmem:[%s0 + $0x10] sm:$0xf]
  %v26 = vld [vmem:[%s0 + $0x14] sm:$0xf]
  %v27 = vld [vmem:[%s0 + $0x18] sm:$0xf]
  %v28 = vld [vmem:[%s0 + $0x1c] sm:$0xf]
  %v29 = vld [vmem:[%s0 + $0x20] sm:$0xf]
  %v30 = vld [vmem:[%s0 + $0x24] sm:$0xf]
  %v31 = vld [vmem:[%s0 + $0x28] sm:$0xf]
  %v32 = vld [vmem:[%s0 + $0x2c] sm:$0xf]
  %v33 = vld [vmem:[%s0 + $0x30] sm:$0xf]
  %v34 = vld [vmem:[%s0 + $0x34] sm:$0xf]
  %v35 = vld [vmem:[%s0 + $0x38] sm:$0xf]
  %v36 = vld [vmem:[%s0 + $0x3c] sm:$0xf]
  %v37 = vunpack.c.l.bf16 %v21
  %v38 = vunpack.c.l.bf16 %v22
  %v39 = vunpack.c.l.bf16 %v23
  %v40 = vunpack.c.l.bf16 %v24
  %v41 = vunpack.c.l.bf16 %v25
  %v42 = vunpack.c.l.bf16 %v26
  %v43 = vunpack.c.l.bf16 %v27
  %v44 = vunpack.c.l.bf16 %v28
  %v45 = vunpack.c.l.bf16 %v29
  %v46 = vunpack.c.l.bf16 %v30
  %v47 = vunpack.c.l.bf16 %v31
  %v48 = vunpack.c.l.bf16 %v32
  %v49 = vunpack.c.l.bf16 %v33
  %v50 = vunpack.c.l.bf16 %v34
  %v51 = vunpack.c.l.bf16 %v35
  %v52 = vunpack.c.l.bf16 %v36
  %v53 = vld [vmem:[%s1] sm:$0x1]
  %v55 = vlaneseq
  %v56 = vshrl.u32 %v55, 7
  %v57 = vsub.s32 0, %v56
  %v58 = vrot.slane %v53, %v57
  %v60 = vmul.f32 %v37, %v58
  %v61 = vmul.f32 %v38, %v58
  %v62 = vmul.f32 %v39, %v58
  %v63 = vmul.f32 %v40, %v58
  %v64 = vmul.f32 %v41, %v58
  %v65 = vmul.f32 %v42, %v58
  %v66 = vmul.f32 %v43, %v58
  %v67 = vmul.f32 %v44, %v58
  %v68 = vmul.f32 %v45, %v58
  %v69 = vmul.f32 %v46, %v58
  %v70 = vmul.f32 %v47, %v58
  %v71 = vmul.f32 %v48, %v58
  %v72 = vmul.f32 %v49, %v58
  %v73 = vmul.f32 %v50, %v58
  %v74 = vmul.f32 %v51, %v58
  %v75 = vmul.f32 %v52, %v58
  %v76 = vld [vmem:[%s2] sm:$0x1]
  %v78 = vlaneseq
  %v79 = vshrl.u32 %v78, 7
  %v80 = vsub.s32 0, %v79
  %v81 = vrot.slane %v76, %v80
  %v83 = vadd.f32 %v60, %v81
  %v84 = vadd.f32 %v61, %v81
  %v85 = vadd.f32 %v62, %v81
  %v86 = vadd.f32 %v63, %v81
  %v87 = vadd.f32 %v64, %v81
  %v88 = vadd.f32 %v65, %v81
  %v89 = vadd.f32 %v66, %v81
  %v90 = vadd.f32 %v67, %v81
  %v91 = vadd.f32 %v68, %v81
  %v92 = vadd.f32 %v69, %v81
  %v93 = vadd.f32 %v70, %v81
  %v94 = vadd.f32 %v71, %v81
  %v95 = vadd.f32 %v72, %v81
  %v96 = vadd.f32 %v73, %v81
  %v97 = vadd.f32 %v74, %v81
  %v98 = vadd.f32 %v75, %v81
  %v99 = vmax.f32 %v83, 0.0
  %v100 = vmax.f32 %v84, 0.0
  %v101 = vmax.f32 %v85, 0.0
  %v102 = vmax.f32 %v86, 0.0
  %v103 = vmax.f32 %v87, 0.0
  %v104 = vmax.f32 %v88, 0.0
  %v105 = vmax.f32 %v89, 0.0
  %v106 = vmax.f32 %v90, 0.0
  %v107 = vmax.f32 %v91, 0.0
  %v108 = vmax.f32 %v92, 0.0
  %v109 = vmax.f32 %v93, 0.0
  %v110 = vmax.f32 %v94, 0.0
  %v111 = vmax.f32 %v95, 0.0
  %v112 = vmax.f32 %v96, 0.0
  %v113 = vmax.f32 %v97, 0.0
  %v114 = vmax.f32 %v98, 0.0
  %v115 = vpack.c.bf16 %v100, %v99
  %v116 = vpack.c.bf16 %v102, %v101
  %v117 = vpack.c.bf16 %v104, %v103
  %v118 = vpack.c.bf16 %v106, %v105
  %v119 = vpack.c.bf16 %v108, %v107
  %v120 = vpack.c.bf16 %v110, %v109
  %v121 = vpack.c.bf16 %v112, %v111
  %v122 = vpack.c.bf16 %v114, %v113
  %v123 = vld [vmem:[%s3] sm:$0xf]
  %v124 = vld [vmem:[%s3 + $0x4] sm:$0xf]
  %v125 = vld [vmem:[%s3 + $0x8] sm:$0xf]
  %v126 = vld [vmem:[%s3 + $0xc] sm:$0xf]
  %v127 = vld [vmem:[%s3 + $0x10] sm:$0xf]
  %v128 = vld [vmem:[%s3 + $0x14] sm:$0xf]
  %v129 = vld [vmem:[%s3 + $0x18] sm:$0xf]
  %v130 = vld [vmem:[%s3 + $0x1c] sm:$0xf]
  %v131 = vld [vmem:[%s3 + $0x20] sm:$0xf]
  %v132 = vld [vmem:[%s3 + $0x24] sm:$0xf]
  %v133 = vld [vmem:[%s3 + $0x28] sm:$0xf]
  %v134 = vld [vmem:[%s3 + $0x2c] sm:$0xf]
  %v135 = vld [vmem:[%s3 + $0x30] sm:$0xf]
  %v136 = vld [vmem:[%s3 + $0x34] sm:$0xf]
  %v137 = vld [vmem:[%s3 + $0x38] sm:$0xf]
  %v138 = vld [vmem:[%s3 + $0x3c] sm:$0xf]
  %v155 = vunpack.c.l.b16 %v123
  %v156 = vunpack.c.l.b16 %v124
  %v157 = vunpack.c.l.b16 %v125
  %v158 = vunpack.c.l.b16 %v126
  %v159 = vunpack.c.l.b16 %v127
  %v160 = vunpack.c.l.b16 %v128
  %v161 = vunpack.c.l.b16 %v129
  %v162 = vunpack.c.l.b16 %v130
  %v163 = vunpack.c.l.b16 %v131
  %v164 = vunpack.c.l.b16 %v132
  %v165 = vunpack.c.l.b16 %v133
  %v166 = vunpack.c.l.b16 %v134
  %v167 = vunpack.c.l.b16 %v135
  %v168 = vunpack.c.l.b16 %v136
  %v169 = vunpack.c.l.b16 %v137
  %v170 = vunpack.c.l.b16 %v138
  %v171 = vpack.c.b16 %v156, %v155
  %v172 = vpack.c.b16 %v158, %v157
  %v173 = vpack.c.b16 %v160, %v159
  %v174 = vpack.c.b16 %v162, %v161
  %v175 = vpack.c.b16 %v164, %v163
  %v176 = vpack.c.b16 %v166, %v165
  %v177 = vpack.c.b16 %v168, %v167
  %v178 = vpack.c.b16 %v170, %v169
  %187 = vmatprep.subr.bf16.mxu0 0
  %188 = vmatpush1.bf16.msra.mxu0 %v171
  %189 = vmatprep.subr.bf16.mxu0 0
  %190 = vmatpush1.bf16.msra.mxu0 %v172
  %191 = vmatprep.subr.bf16.mxu0 0
  %192 = vmatpush1.bf16.msra.mxu0 %v173
  %193 = vmatprep.subr.bf16.mxu0 0
  %194 = vmatpush1.bf16.msra.mxu0 %v174
  %195 = vmatprep.subr.bf16.mxu0 0
  %196 = vmatpush1.bf16.msra.mxu0 %v175
  %197 = vmatprep.subr.bf16.mxu0 0
  %198 = vmatpush1.bf16.msra.mxu0 %v176
  %199 = vmatprep.subr.bf16.mxu0 0
  %200 = vmatpush1.bf16.msra.mxu0 %v177
  %201 = vmatprep.subr.bf16.mxu0 0
  %202 = vmatpush1.bf16.msra.mxu0 %v178
  %203 = vmatprep.subr.bf16.mxu0 0
  %204 = vmatpush1.bf16.msra.mxu0 0
  %205 = vmatprep.subr.bf16.mxu0 0
  %206 = vmatpush1.bf16.msra.mxu0 0
  %207 = vmatprep.subr.bf16.mxu0 0
  %208 = vmatpush1.bf16.msra.mxu0 0
  %209 = vmatprep.subr.bf16.mxu0 0
  %210 = vmatpush1.bf16.msra.mxu0 0
  %211 = vmatprep.subr.bf16.mxu0 0
  %212 = vmatpush1.bf16.msra.mxu0 0
  %213 = vmatprep.subr.bf16.mxu0 0
  %214 = vmatpush1.bf16.msra.mxu0 0
  %215 = vmatprep.subr.bf16.mxu0 0
  %216 = vmatpush1.bf16.msra.mxu0 0
  %217 = vmatprep.subr.bf16.mxu0 0
  %218 = vmatpush1.bf16.msra.mxu0 0
  %219 = vmatprep.mubr.bf16.mxu0 0
  %220 = vmatmul.mubr.bf16.gmra.mrb[0].mxu0 %v115
  %v221 = vpop.f32.mrb[0].mxu0
  %v222 = vadd.f32 0.0, %v221
  %v223 = vpop.f32.mrb[0].mxu0
  %v224 = vpop.f32.mrb[0].mxu0
  %v225 = vadd.f32 0.0, %v224
  %v226 = vpop.f32.mrb[0].mxu0
  %227 = vmatprep.mubr.bf16.mxu0 0
  %228 = vmatmul.mubr.bf16.gmra.mrb[0].mxu0 %v116
  %v229 = vpop.f32.mrb[0].mxu0
  %v230 = vadd.f32 0.0, %v229
  %v231 = vpop.f32.mrb[0].mxu0
  %v232 = vpop.f32.mrb[0].mxu0
  %v233 = vadd.f32 0.0, %v232
  %v234 = vpop.f32.mrb[0].mxu0
  %235 = vmatprep.mubr.bf16.mxu0 0
  %236 = vmatmul.mubr.bf16.gmra.mrb[0].mxu0 %v117
  %v237 = vpop.f32.mrb[0].mxu0
  %v238 = vadd.f32 0.0, %v237
  %v239 = vpop.f32.mrb[0].mxu0
  %v240 = vpop.f32.mrb[0].mxu0
  %v241 = vadd.f32 0.0, %v240
  %v242 = vpop.f32.mrb[0].mxu0
  %243 = vmatprep.mubr.bf16.mxu0 0
  %244 = vmatmul.mubr.bf16.gmra.mrb[0].mxu0 %v118
  %v245 = vpop.f32.mrb[0].mxu0
  %v246 = vadd.f32 0.0, %v245
  %v247 = vpop.f32.mrb[0].mxu0
  %v248 = vpop.f32.mrb[0].mxu0
  %v249 = vadd.f32 0.0, %v248
  %v250 = vpop.f32.mrb[0].mxu0
  %251 = vmatprep.mubr.bf16.mxu0 0
  %252 = vmatmul.mubr.bf16.gmra.mrb[0].mxu0 %v119
  %v253 = vpop.f32.mrb[0].mxu0
  %v254 = vadd.f32 0.0, %v253
  %v255 = vpop.f32.mrb[0].mxu0
  %v256 = vpop.f32.mrb[0].mxu0
  %v257 = vadd.f32 0.0, %v256
  %v258 = vpop.f32.mrb[0].mxu0
  %259 = vmatprep.mubr.bf16.mxu0 0
  %260 = vmatmul.mubr.bf16.gmra.mrb[0].mxu0 %v120
  %v261 = vpop.f32.mrb[0].mxu0
  %v262 = vadd.f32 0.0, %v261
  %v263 = vpop.f32.mrb[0].mxu0
  %v264 = vpop.f32.mrb[0].mxu0
  %v265 = vadd.f32 0.0, %v264
  %v266 = vpop.f32.mrb[0].mxu0
  %267 = vmatprep.mubr.bf16.mxu0 0
  %268 = vmatmul.mubr.bf16.gmra.mrb[0].mxu0 %v121
  %v269 = vpop.f32.mrb[0].mxu0
  %v270 = vadd.f32 0.0, %v269
  %v271 = vpop.f32.mrb[0].mxu0
  %v272 = vpop.f32.mrb[0].mxu0
  %v273 = vadd.f32 0.0, %v272
  %v274 = vpop.f32.mrb[0].mxu0
  %275 = vmatprep.mubr.bf16.mxu0 0
  %276 = vmatmul.mubr.bf16.gmra.mrb[0].mxu0 %v122
  %v277 = vpop.f32.mrb[0].mxu0
  %v278 = vadd.f32 0.0, %v277
  %v279 = vpop.f32.mrb[0].mxu0
  %v280 = vpop.f32.mrb[0].mxu0
  %v281 = vadd.f32 0.0, %v280
  %v282 = vpop.f32.mrb[0].mxu0
  %283 = vdwg.mxu0
  %v284 = vadd.f32 %v222, %v225
  %v285 = vadd.f32 %v284, %v230
  %v286 = vadd.f32 %v285, %v233
  %v287 = vadd.f32 %v286, %v238
  %v288 = vadd.f32 %v287, %v241
  %v289 = vadd.f32 %v288, %v246
  %v290 = vadd.f32 %v289, %v249
  %v291 = vadd.f32 %v290, %v254
  %v292 = vadd.f32 %v291, %v257
  %v293 = vadd.f32 %v292, %v262
  %v294 = vadd.f32 %v293, %v265
  %v295 = vadd.f32 %v294, %v270
  %v296 = vadd.f32 %v295, %v273
  %v297 = vadd.f32 %v296, %v278
  %v298 = vadd.f32 %v297, %v281
  %v299 = vrot.slane %v298, 4
  %v300 = vadd.f32 %v298, %v299
  %v301 = vrot.slane %v300, 2
  %v302 = vadd.f32 %v300, %v301
  %v303 = vrot.slane %v302, 1
  %v304 = vadd.f32 %v302, %v303
  %305 = vst [vmem:[%s5] sm:$0x1] %v304
  %v306 = vmul.f32 %v222, %v222
  %v307 = vmul.f32 %v225, %v225
  %v308 = vmul.f32 %v230, %v230
  %v309 = vmul.f32 %v233, %v233
  %v310 = vmul.f32 %v238, %v238
  %v311 = vmul.f32 %v241, %v241
  %v312 = vmul.f32 %v246, %v246
  %v313 = vmul.f32 %v249, %v249
  %v314 = vmul.f32 %v254, %v254
  %v315 = vmul.f32 %v257, %v257
  %v316 = vmul.f32 %v262, %v262
  %v317 = vmul.f32 %v265, %v265
  %v318 = vmul.f32 %v270, %v270
  %v319 = vmul.f32 %v273, %v273
  %v320 = vmul.f32 %v278, %v278
  %v321 = vmul.f32 %v281, %v281
  %v322 = vadd.f32 %v306, %v307
  %v323 = vadd.f32 %v322, %v308
  %v324 = vadd.f32 %v323, %v309
  %v325 = vadd.f32 %v324, %v310
  %v326 = vadd.f32 %v325, %v311
  %v327 = vadd.f32 %v326, %v312
  %v328 = vadd.f32 %v327, %v313
  %v329 = vadd.f32 %v328, %v314
  %v330 = vadd.f32 %v329, %v315
  %v331 = vadd.f32 %v330, %v316
  %v332 = vadd.f32 %v331, %v317
  %v333 = vadd.f32 %v332, %v318
  %v334 = vadd.f32 %v333, %v319
  %v335 = vadd.f32 %v334, %v320
  %v336 = vadd.f32 %v335, %v321
  %v337 = vrot.slane %v336, 4
  %v338 = vadd.f32 %v336, %v337
  %v339 = vrot.slane %v338, 2
  %v340 = vadd.f32 %v338, %v339
  %v341 = vrot.slane %v340, 1
  %v342 = vadd.f32 %v340, %v341
  %343 = vst [vmem:[%s6] sm:$0x1] %v342
  %v344 = vpack.c.bf16 %v225, %v222
  %v345 = vpack.c.bf16 %v233, %v230
  %v346 = vpack.c.bf16 %v241, %v238
  %v347 = vpack.c.bf16 %v249, %v246
  %v348 = vpack.c.bf16 %v257, %v254
  %v349 = vpack.c.bf16 %v265, %v262
  %v350 = vpack.c.bf16 %v273, %v270
  %v351 = vpack.c.bf16 %v281, %v278
  %v360 = vunpack.c.l.b16 %v344
  %v361 = vunpack.c.h.b16 %v344
  %v362 = vunpack.c.l.b16 %v345
  %v363 = vunpack.c.h.b16 %v345
  %v364 = vunpack.c.l.b16 %v346
  %v365 = vunpack.c.h.b16 %v346
  %v366 = vunpack.c.l.b16 %v347
  %v367 = vunpack.c.h.b16 %v347
  %v368 = vunpack.c.l.b16 %v348
  %v369 = vunpack.c.h.b16 %v348
  %v370 = vunpack.c.l.b16 %v349
  %v371 = vunpack.c.h.b16 %v349
  %v372 = vunpack.c.l.b16 %v350
  %v373 = vunpack.c.h.b16 %v350
  %v374 = vunpack.c.l.b16 %v351
  %v375 = vunpack.c.h.b16 %v351
  %v376 = vpack.c.b16 %v360, %v360
  %v377 = vpack.c.b16 %v361, %v361
  %v378 = vpack.c.b16 %v362, %v362
  %v379 = vpack.c.b16 %v363, %v363
  %v380 = vpack.c.b16 %v364, %v364
  %v381 = vpack.c.b16 %v365, %v365
  %v382 = vpack.c.b16 %v366, %v366
  %v383 = vpack.c.b16 %v367, %v367
  %v384 = vpack.c.b16 %v368, %v368
  %v385 = vpack.c.b16 %v369, %v369
  %v386 = vpack.c.b16 %v370, %v370
  %v387 = vpack.c.b16 %v371, %v371
  %v388 = vpack.c.b16 %v372, %v372
  %v389 = vpack.c.b16 %v373, %v373
  %v390 = vpack.c.b16 %v374, %v374
  %v391 = vpack.c.b16 %v375, %v375
  %408 = vst [vmem:[%s4] sm:$0xf] %v376
  %409 = vst [vmem:[%s4 + $0x4] sm:$0xf] %v377
  %410 = vst [vmem:[%s4 + $0x8] sm:$0xf] %v378
  %411 = vst [vmem:[%s4 + $0xc] sm:$0xf] %v379
  %412 = vst [vmem:[%s4 + $0x10] sm:$0xf] %v380
  %413 = vst [vmem:[%s4 + $0x14] sm:$0xf] %v381
  %414 = vst [vmem:[%s4 + $0x18] sm:$0xf] %v382
  %415 = vst [vmem:[%s4 + $0x1c] sm:$0xf] %v383
  %416 = vst [vmem:[%s4 + $0x20] sm:$0xf] %v384
  %417 = vst [vmem:[%s4 + $0x24] sm:$0xf] %v385
  %418 = vst [vmem:[%s4 + $0x28] sm:$0xf] %v386
  %419 = vst [vmem:[%s4 + $0x2c] sm:$0xf] %v387
  %420 = vst [vmem:[%s4 + $0x30] sm:$0xf] %v388
  %421 = vst [vmem:[%s4 + $0x34] sm:$0xf] %v389
  %422 = vst [vmem:[%s4 + $0x38] sm:$0xf] %v390
  %423 = vst [vmem:[%s4 + $0x3c] sm:$0xf] %v391
  // Predicated region
  $region18: #{bottleneck_forward.7} parent=0 // pred_check
    _
  $region19: #{bottleneck_forward.7} parent=0 // pred_check_branch
    %425 = sbr.rel (0) target = $region21
  $region20: #{bottleneck_forward.7} parent=0 // pred_region
    _
  $region21: #{bottleneck_forward.7} parent=0 // pred_fallthru
    _
  // Predicated region
  $region22: #{bottleneck_forward.7} parent=0 // pred_check
    _
  $region23: #{bottleneck_forward.7} parent=0 // pred_check_branch
    %427 = sbr.rel (0) target = $region25
  $region24: #{bottleneck_forward.7} parent=0 // pred_region
    _
  $region25: #{bottleneck_forward.7} parent=0 // pred_fallthru
    _
  // Predicated region
  $region26: #{bottleneck_forward.7} parent=0 // pred_check
    _
  $region27: #{bottleneck_forward.7} parent=0 // pred_check_branch
    %429 = sbr.rel (0) target = $region29
  $region28: #{bottleneck_forward.7} parent=0 // pred_region
    _
  $region29: #{bottleneck_forward.7} parent=0 // pred_fallthru
    _
  // Predicated region
  $region30: #{bottleneck_forward.7} parent=0 // pred_check
    _
  $region31: #{bottleneck_forward.7} parent=0 // pred_check_branch
    %431 = sbr.rel (0) target = $region33
  $region32: #{bottleneck_forward.7} parent=0 // pred_region
    _
  $region33: #{bottleneck_forward.7} parent=0 // pred_fallthru
    _
  // Predicated region
  $region34: #{bottleneck_forward.7} parent=0 // pred_check
    _
  $region35: #{bottleneck_forward.7} parent=0 // pred_check_branch
    %433 = sbr.rel (0) target = $region37
  $region36: #{bottleneck_forward.7} parent=0 // pred_region
    _
  $region37: #{bottleneck_forward.7} parent=0 // pred_fallthru
    _
  // Predicated region
  $region38: #{bottleneck_forward.7} parent=0 // pred_check
    _
  $region39: #{bottleneck_forward.7} parent=0 // pred_check_branch
    %435 = sbr.rel (0) target = $region41
  $region40: #{bottleneck_forward.7} parent=0 // pred_region
    _
  $region41: #{bottleneck_forward.7} parent=0 // pred_fallthru
    _

// kernel: bottleneck_forward.6
$region0: #{bottleneck_forward.6}
  #allocation0 [shape = 'u32[]', space=smem, size = 0x4, offset = 0x4, fixed_abs, tag = 'smem constant byte address 0x4 - core index']
  #allocation1 [shape = 'u32[144,128]{1,0:T(1,128)}', space=vmem, size = 0x12000, scoped, tag = 'internal scratch']
  %s0 = inlined_call_operand.vmem [shape: bf16[8,9,9,128], index: 0, kind: input, shape index: {}]
  %s1 = inlined_call_operand.vmem [shape: bf16[9,128,128], index: 1, kind: input, shape index: {}]
  %s2 = inlined_call_operand.vmem [shape: bf16[2,64,128], index: 2, kind: output, shape index: {0}]
  %s3 = inlined_call_operand.vmem [shape: f32[2,1,128], index: 3, kind: output, shape index: {1}]
  %s4 = inlined_call_operand.vmem [shape: f32[2,1,128], index: 4, kind: output, shape index: {2}]
  %5 = xla_tuple %s2, %s3, %s4
  %s6 = sld [smem:[#allocation0]]
  $region57: #{bottleneck_forward.6} parent=0
    _
  %s8 = ssub.s32 1, %s6
  %s9 = scalar_select 0, %s8, %s6
  loop: start=0, step=1, limit=4
  $region2: #{bottleneck_forward.6} parent=0 // loop_pre_header
    _
  $region3: #{bottleneck_forward.6} parent=0 // loop_header
    %s11 = sphi 0, %s15
    %p12 = scmp.ge.s32.totalorder %s11, 4
    %s18 = sphi 0, %s30
    %s19 = sphi 0, %s26
    %s20 = sphi 0, %s18
    %s21 = sphi 0, %s19
    %s22 = sphi 0, %s20
    %s23 = sphi 0, %s21
    %s35 = sphi 0, %s37
    %s38 = sphi 0, %s35
    %s39 = sphi 0, %s38
    %s55 = sphi 0, %s39
    %s59 = sphi 0, %s59
    %s61 = sphi 0, %s59
    %s62 = sphi 0, %s61
    %s76 = sphi 0, %s62
    %s84 = sphi 0, %s86
    %s87 = sphi 0, %s84
    %s88 = sphi 0, %s87
    %s104 = sphi 0, %s88
    %s112 = sphi 0, %s114
    %s115 = sphi 0, %s112
    %s116 = sphi 0, %s115
    %s132 = sphi 0, %s116
    %s140 = sphi 0, %s142
    %s143 = sphi 0, %s140
    %s144 = sphi 0, %s143
    %s160 = sphi 0, %s144
  $region4: #{bottleneck_forward.6} parent=0 // loop_header_branch
    %14 = sbr.rel (%p12) target = $region8
  $region5: #{bottleneck_forward.6} parent=0 // loop_body
    %s16 = ssub.s32 %s11, 1
    %s17 = ssub.s32 %s11, 2
    %s24 = sadd.s32 1, %s19
    %p25 = scmp.ge.s32.totalorder %s24, 1
    %s26 = scalar_select %p25, 0, %s24
    %s27 = sadd.s32 1, %s18
    %s28 = scalar_select %p25, %s27, %s18
    %p29 = scmp.ge.s32.totalorder %s28, 2
    %s30 = scalar_select %p29, 0, %s28
    %s31 = sadd.s32 %s18, %s19
    %s32 = sadd.s32 %s30, %s26
    %s33 = ssub.s32 %s31, %s32
    %p34 = scmp.eq.s32.totalorder %s33, 0
    %s36 = sadd.s32 %s35, 1
    %s37 = scalar_select %p34, %s35, %s36
    %p40 = pneg %p34
    %p41 = scmp.eq.s32.totalorder %s11, 1
    %p42 = por %p40, %p41
    %p43 = scmp.ne.s32.totalorder %s35, %s38
    %p44 = scmp.eq.s32.totalorder %s11, 0
    %p45 = por %p43, %p44
    %p46 = scmp.ne.s32.totalorder %s35, %s38
    %p47 = scmp.eq.s32.totalorder %s16, 1
    %p48 = por %p46, %p47
    %p49 = scmp.ne.s32.totalorder %s38, %s39
    %p50 = scmp.eq.s32.totalorder %s16, 0
    %p51 = por %p49, %p50
    %p52 = scmp.ne.s32.totalorder %s38, %s39
    %p53 = scmp.eq.s32.totalorder %s17, 1
    %p54 = por %p52, %p53
    %p56 = scmp.ne.s32.totalorder %s39, %s55
    %p57 = scmp.eq.s32.totalorder %s17, 0
    %p58 = por %p56, %p57
    %s60 = sadd.s32 %s59, 1
    %p63 = scmp.eq.s32.totalorder %s11, 1
    %p64 = scmp.ne.s32.totalorder %s59, %s61
    %p65 = scmp.eq.s32.totalorder %s11, 0
    %p66 = por %p64, %p65
    %p67 = scmp.ne.s32.totalorder %s59, %s61
    %p68 = scmp.eq.s32.totalorder %s16, 1
    %p69 = por %p67, %p68
    %p70 = scmp.ne.s32.totalorder %s61, %s62
    %p71 = scmp.eq.s32.totalorder %s16, 0
    %p72 = por %p70, %p71
    %p73 = scmp.ne.s32.totalorder %s61, %s62
    %p74 = scmp.eq.s32.totalorder %s17, 1
    %p75 = por %p73, %p74
    %p77 = scmp.ne.s32.totalorder %s62, %s76
    %p78 = scmp.eq.s32.totalorder %s17, 0
    %p79 = por %p77, %p78
    %s80 = sadd.s32 %s18, %s19
    %s81 = sadd.s32 %s30, %s26
    %s82 = ssub.s32 %s80, %s81
    %p83 = scmp.eq.s32.totalorder %s82, 0
    %s85 = sadd.s32 %s84, 1
    %s86 = scalar_select %p83, %s84, %s85
    %p89 = pneg %p83
    %p90 = scmp.eq.s32.totalorder %s11, 1
    %p91 = por %p89, %p90
    %p92 = scmp.ne.s32.totalorder %s84, %s87
    %p93 = scmp.eq.s32.totalorder %s11, 0
    %p94 = por %p92, %p93
    %p95 = scmp.ne.s32.totalorder %s84, %s87
    %p96 = scmp.eq.s32.totalorder %s16, 1
    %p97 = por %p95, %p96
    %p98 = scmp.ne.s32.totalorder %s87, %s88
    %p99 = scmp.eq.s32.totalorder %s16, 0
    %p100 = por %p98, %p99
    %p101 = scmp.ne.s32.totalorder %s87, %s88
    %p102 = scmp.eq.s32.totalorder %s17, 1
    %p103 = por %p101, %p102
    %p105 = scmp.ne.s32.totalorder %s88, %s104
    %p106 = scmp.eq.s32.totalorder %s17, 0
    %p107 = por %p105, %p106
    %s108 = sadd.s32 %s18, %s19
    %s109 = sadd.s32 %s30, %s26
    %s110 = ssub.s32 %s108, %s109
    %p111 = scmp.eq.s32.totalorder %s110, 0
    %s113 = sadd.s32 %s112, 1
    %s114 = scalar_select %p111, %s112, %s113
    %p117 = pneg %p111
    %p118 = scmp.eq.s32.totalorder %s11, 1
    %p119 = por %p117, %p118
    %p120 = scmp.ne.s32.totalorder %s112, %s115
    %p121 = scmp.eq.s32.totalorder %s11, 0
    %p122 = por %p120, %p121
    %p123 = scmp.ne.s32.totalorder %s112, %s115
    %p124 = scmp.eq.s32.totalorder %s16, 1
    %p125 = por %p123, %p124
    %p126 = scmp.ne.s32.totalorder %s115, %s116
    %p127 = scmp.eq.s32.totalorder %s16, 0
    %p128 = por %p126, %p127
    %p129 = scmp.ne.s32.totalorder %s115, %s116
    %p130 = scmp.eq.s32.totalorder %s17, 1
    %p131 = por %p129, %p130
    %p133 = scmp.ne.s32.totalorder %s116, %s132
    %p134 = scmp.eq.s32.totalorder %s17, 0
    %p135 = por %p133, %p134
    %s136 = sadd.s32 %s18, %s19
    %s137 = sadd.s32 %s30, %s26
    %s138 = ssub.s32 %s136, %s137
    %p139 = scmp.eq.s32.totalorder %s138, 0
    %s141 = sadd.s32 %s140, 1
    %s142 = scalar_select %p139, %s140, %s141
    %p145 = pneg %p139
    %p146 = scmp.eq.s32.totalorder %s11, 1
    %p147 = por %p145, %p146
    %p148 = scmp.ne.s32.totalorder %s140, %s143
    %p149 = scmp.eq.s32.totalorder %s11, 0
    %p150 = por %p148, %p149
    %p151 = scmp.ne.s32.totalorder %s140, %s143
    %p152 = scmp.eq.s32.totalorder %s16, 1
    %p153 = por %p151, %p152
    %p154 = scmp.ne.s32.totalorder %s143, %s144
    %p155 = scmp.eq.s32.totalorder %s16, 0
    %p156 = por %p154, %p155
    %p157 = scmp.ne.s32.totalorder %s143, %s144
    %p158 = scmp.eq.s32.totalorder %s17, 1
    %p159 = por %p157, %p158
    %p161 = scmp.ne.s32.totalorder %s144, %s160
    %p162 = scmp.eq.s32.totalorder %s17, 0
    %p163 = por %p161, %p162
    %p164 = scmp.le.s32.totalorder 1, %s11
    %p165 = scmp.lt.s32.totalorder %s11, 3
    %p166 = pnand %p164, %p165
    %p167 = pneg %p166
    // Predicated region
    $region9: #{bottleneck_forward.6} parent=5 // pred_check
      _
    $region10: #{bottleneck_forward.6} parent=5 // pred_check_branch
      %169 = sbr.rel (%p166) target = $region12
    $region11: #{bottleneck_forward.6} parent=5 // pred_region
      %s170 = ssub.s32 %s11, 1
      // Predicated region
      $region13: #{bottleneck_forward.6} parent=11 // pred_check
        %p171 = pneg %p72
      $region14: #{bottleneck_forward.6} parent=11 // pred_check_branch
        %173 = sbr.rel (%p171) target = $region16
      $region15: #{bottleneck_forward.6} parent=11 // pred_region
        _
      $region16: #{bottleneck_forward.6} parent=11 // pred_fallthru
        _
    $region12: #{bottleneck_forward.6} parent=5 // pred_fallthru
      _
    %p174 = scmp.lt.s32.totalorder %s11, 2
    // Predicated region
    $region17: #{bottleneck_forward.6} parent=5 // pred_check
      %p175 = pneg %p174
    $region18: #{bottleneck_forward.6} parent=5 // pred_check_branch
      %177 = sbr.rel (%p175) target = $region20
    $region19: #{bottleneck_forward.6} parent=5 // pred_region
      // Predicated region
      $region21: #{bottleneck_forward.6} parent=19 // pred_check
        %p178 = pneg %p45
      $region22: #{bottleneck_forward.6} parent=19 // pred_check_branch
        %180 = sbr.rel (%p178) target = $region24
      $region23: #{bottleneck_forward.6} parent=19 // pred_region
        %s181 = sadd.s32 %s18, %s19
        %s182 = smul.u32 4, %s181
        %p183 = scmp.lt.s32.totalorder %s182, 7
        %s184 = scalar_select %p183, %s182, 7
        %s185 = smul.addr %s184, 18
        %s186 = smul.addr %s185, 4
        %s187 = scalar_lea.vmem %s0, %s186
        %s188 = sadd.s32 %s18, %s19
        %s189 = smul.u32 4, %s188
      $region24: #{bottleneck_forward.6} parent=19 // pred_fallthru
        _
    $region20: #{bottleneck_forward.6} parent=5 // pred_fallthru
      _
    %p190 = scmp.le.s32.totalorder 1, %s11
    %p191 = scmp.lt.s32.totalorder %s11, 3
    %p192 = pnand %p190, %p191
    %p193 = pneg %p192
    // Predicated region
    $region25: #{bottleneck_forward.6} parent=5 // pred_check
      _
    $region26: #{bottleneck_forward.6} parent=5 // pred_check_branch
      %195 = sbr.rel (%p192) target = $region28
    $region27: #{bottleneck_forward.6} parent=5 // pred_region
      %s196 = ssub.s32 %s11, 1
      %s197 = sadd.s32 %s20, %s21
      %s198 = smul.u32 4, %s197
      %p199 = scmp.lt.s32.totalorder %s198, 7
      %s200 = scalar_select %p199, %s198, 7
      %s201 = smul.addr %s200, 18
      %s202 = smul.addr %s201, 4
      %s203 = scalar_lea.vmem %s0, %s202
      %p204 = pneg %p51
      %p205 = pneg %p48
      %p206 = pneg %p72
      %p207 = pneg %p69
      %p208 = pneg %p100
      %p209 = pneg %p97
      %s210 = sadd.s32 %s20, %s21
      %p211 = scmp.lt.s32.totalorder %s210, 1
      %s212 = scalar_select %p211, %s210, 1
      %s213 = smul.addr %s212, 8
      %s214 = smul.addr %s213, 4
      %s215 = scalar_lea.vmem %s2, %s214
      %p216 = pneg %p128
      %p217 = pneg %p125
      %s218 = sadd.s32 %s20, %s21
      %p219 = scmp.lt.s32.totalorder %s218, 1
      %s220 = scalar_select %p219, %s218, 1
      %s221 = scalar_lea.vmem %s3, %s220
      %p222 = pneg %p156
      %p223 = pneg %p153
      %s224 = sadd.s32 %s20, %s21
      %p225 = scmp.lt.s32.totalorder %s224, 1
      %s226 = scalar_select %p225, %s224, 1
      %s227 = scalar_lea.vmem %s4, %s226
      %s228 = sadd.s32 %s20, %s21
      %s229 = smul.u32 4, %s228
      %p230 = scmp.lt.s32.totalorder %s229, 7
      %s231 = scalar_select %p230, %s229, 7
      %s232 = smul.addr %s231, 18
      %s233 = smul.addr %s232, 4
      %s234 = scalar_lea.vmem %s0, %s233
      %s235 = sadd.s32 %s20, %s21
      %s236 = smul.u32 4, %s235
      %s237 = sadd.s32 %s20, %s21
      %p238 = scmp.lt.s32.totalorder %s237, 1
      %s239 = scalar_select %p238, %s237, 1
      %s240 = smul.addr %s239, 8
      %s241 = smul.addr %s240, 4
      %s242 = scalar_lea.vmem %s2, %s241
      %s243 = sadd.s32 %s20, %s21
      %s244 = sadd.s32 %s20, %s21
      %p245 = scmp.lt.s32.totalorder %s244, 1
      %s246 = scalar_select %p245, %s244, 1
      %s247 = scalar_lea.vmem %s3, %s246
      %s248 = sadd.s32 %s20, %s21
      %s249 = sadd.s32 %s20, %s21
      %p250 = scmp.lt.s32.totalorder %s249, 1
      %s251 = scalar_select %p250, %s249, 1
      %s252 = scalar_lea.vmem %s4, %s251
      %s253 = sadd.s32 %s20, %s21
      %v255 = vld [vmem:[%s234] sm:$0xf]
      %v256 = vld [vmem:[%s234 + $0x8] sm:$0xf]
      %v257 = vld [vmem:[%s234 + $0x10] sm:$0xf]
      %v258 = vld [vmem:[%s234 + $0x18] sm:$0xf]
      %v259 = vld [vmem:[%s234 + $0x20] sm:$0xf]
      %v260 = vld [vmem:[%s234 + $0x28] sm:$0xf]
      %v261 = vld [vmem:[%s234 + $0x30] sm:$0xf]
      %v262 = vld [vmem:[%s234 + $0x38] sm:$0xf]
      %v263 = vld [vmem:[%s1] sm:$0xf]
      %v264 = vld [vmem:[%s1 + $0x4] sm:$0xf]
      %v265 = vld [vmem:[%s1 + $0x8] sm:$0xf]
      %v266 = vld [vmem:[%s1 + $0xc] sm:$0xf]
      %v267 = vld [vmem:[%s1 + $0x10] sm:$0xf]
      %v268 = vld [vmem:[%s1 + $0x14] sm:$0xf]
      %v269 = vld [vmem:[%s1 + $0x18] sm:$0xf]
      %v270 = vld [vmem:[%s1 + $0x1c] sm:$0xf]
      %v271 = vld [vmem:[%s1 + $0x20] sm:$0xf]
      %v272 = vld [vmem:[%s1 + $0x24] sm:$0xf]
      %v273 = vld [vmem:[%s1 + $0x28] sm:$0xf]
      %v274 = vld [vmem:[%s1 + $0x2c] sm:$0xf]
      %v275 = vld [vmem:[%s1 + $0x30] sm:$0xf]
      %v276 = vld [vmem:[%s1 + $0x34] sm:$0xf]
      %v277 = vld [vmem:[%s1 + $0x38] sm:$0xf]
      %v278 = vld [vmem:[%s1 + $0x3c] sm:$0xf]
      %s279 = scalar_lea.vmem %s234, 72
      %v280 = vld [vmem:[%s279] sm:$0xf]
      %v281 = vld [vmem:[%s279 + $0x8] sm:$0xf]
      %v282 = vld [vmem:[%s279 + $0x10] sm:$0xf]
      %v283 = vld [vmem:[%s279 + $0x18] sm:$0xf]
      %v284 = vld [vmem:[%s279 + $0x20] sm:$0xf]
      %v285 = vld [vmem:[%s279 + $0x28] sm:$0xf]
      %v286 = vld [vmem:[%s279 + $0x30] sm:$0xf]
      %v287 = vld [vmem:[%s279 + $0x38] sm:$0xf]
      %s288 = scalar_lea.vmem %s1, 64
      %v289 = vld [vmem:[%s288] sm:$0xf]
      %v290 = vld [vmem:[%s288 + $0x4] sm:$0xf]
      %v291 = vld [vmem:[%s288 + $0x8] sm:$0xf]
      %v292 = vld [vmem:[%s288 + $0xc] sm:$0xf]
      %v293 = vld [vmem:[%s288 + $0x10] sm:$0xf]
      %v294 = vld [vmem:[%s288 + $0x14] sm:$0xf]
      %v295 = vld [vmem:[%s288 + $0x18] sm:$0xf]
      %v296 = vld [vmem:[%s288 + $0x1c] sm:$0xf]
      %v297 = vld [vmem:[%s288 + $0x20] sm:$0xf]
      %v298 = vld [vmem:[%s288 + $0x24] sm:$0xf]
      %v299 = vld [vmem:[%s288 + $0x28] sm:$0xf]
      %v300 = vld [vmem:[%s288 + $0x2c] sm:$0xf]
      %v301 = vld [vmem:[%s288 + $0x30] sm:$0xf]
      %v302 = vld [vmem:[%s288 + $0x34] sm:$0xf]
      %v303 = vld [vmem:[%s288 + $0x38] sm:$0xf]
      %v304 = vld [vmem:[%s288 + $0x3c] sm:$0xf]
      %v313 = vunpack.c.l.b16 %v280
      %v314 = vunpack.c.l.b16 %v281
      %v315 = vunpack.c.l.b16 %v282
      %v316 = vunpack.c.l.b16 %v283
      %v317 = vunpack.c.l.b16 %v284
      %v318 = vunpack.c.l.b16 %v285
      %v319 = vunpack.c.l.b16 %v286
      %v320 = vunpack.c.l.b16 %v287
      %v321 = vpack.c.b16 %v314, %v313
      %v322 = vpack.c.b16 %v316, %v315
      %v323 = vpack.c.b16 %v318, %v317
      %v324 = vpack.c.b16 %v320, %v319
      %v345 = vunpack.c.l.b16 %v289
      %v346 = vunpack.c.l.b16 %v290
      %v347 = vunpack.c.l.b16 %v291
      %v348 = vunpack.c.l.b16 %v292
      %v349 = vunpack.c.l.b16 %v293
      %v350 = vunpack.c.l.b16 %v294
      %v351 = vunpack.c.l.b16 %v295
      %v352 = vunpack.c.l.b16 %v296
      %v353 = vunpack.c.l.b16 %v297
      %v354 = vunpack.c.l.b16 %v298
      %v355 = vunpack.c.l.b16 %v299
      %v356 = vunpack.c.l.b16 %v300
      %v357 = vunpack.c.l.b16 %v301
      %v358 = vunpack.c.l.b16 %v302
      %v359 = vunpack.c.l.b16 %v303
      %v360 = vunpack.c.l.b16 %v304
      %v361 = vpack.c.b16 %v346, %v345
      %v362 = vpack.c.b16 %v348, %v347
      %v363 = vpack.c.b16 %v350, %v349
      %v364 = vpack.c.b16 %v352, %v351
      %v365 = vpack.c.b16 %v354, %v353
      %v366 = vpack.c.b16 %v356, %v355
      %v367 = vpack.c.b16 %v358, %v357
      %v368 = vpack.c.b16 %v360, %v359
      %377 = vmatprep.subr.bf16.mxu0 0
      %378 = vmatpush1.bf16.msra.mxu0 %v361
      %379 = vmatprep.subr.bf16.mxu0 0
      %380 = vmatpush1.bf16.msra.mxu0 %v362
      %381 = vmatprep.subr.bf16.mxu0 0
      %382 = vmatpush1.bf16.msra.mxu0 %v363
      %383 = vmatprep.subr.bf16.mxu0 0
      %384 = vmatpush1.bf16.msra.mxu0 %v364
      %385 = vmatprep.subr.bf16.mxu0 0
      %386 = vmatpush1.bf16.msra.mxu0 %v365
      %387 = vmatprep.subr.bf16.mxu0 0
      %388 = vmatpush1.bf16.msra.mxu0 %v366
      %389 = vmatprep.subr.bf16.mxu0 0
      %390 = vmatpush1.bf16.msra.mxu0 %v367
      %391 = vmatprep.subr.bf16.mxu0 0
      %392 = vmatpush1.bf16.msra.mxu0 %v368
      %393 = vmatprep.subr.bf16.mxu0 0
      %394 = vmatpush1.bf16.msra.mxu0 0
      %395 = vmatprep.subr.bf16.mxu0 0
      %396 = vmatpush1.bf16.msra.mxu0 0
      %397 = vmatprep.subr.bf16.mxu0 0
      %398 = vmatpush1.bf16.msra.mxu0 0
      %399 = vmatprep.subr.bf16.mxu0 0
      %400 = vmatpush1.bf16.msra.mxu0 0
      %401 = vmatprep.subr.bf16.mxu0 0
      %402 = vmatpush1.bf16.msra.mxu0 0
      %403 = vmatprep.subr.bf16.mxu0 0
      %404 = vmatpush1.bf16.msra.mxu0 0
      %405 = vmatprep.subr.bf16.mxu0 0
      %406 = vmatpush1.bf16.msra.mxu0 0
      %407 = vmatprep.subr.bf16.mxu0 0
      %408 = vmatpush1.bf16.msra.mxu0 0
      %409 = vmatprep.mubr.bf16.mxu0 0
      %410 = vmatmul.mubr.bf16.gmra.mrb[0].mxu0 %v321
      %v411 = vpop.f32.mrb[0].mxu0
      %v412 = vadd.f32 0.0, %v411
      %v413 = vpop.f32.mrb[0].mxu0
      %v414 = vpop.f32.mrb[0].mxu0
      %v415 = vadd.f32 0.0, %v414
      %v416 = vpop.f32.mrb[0].mxu0
      %417 = vmatprep.mubr.bf16.mxu0 0
      %418 = vmatmul.mubr.bf16.gmra.mrb[0].mxu0 %v322
      %v419 = vpop.f32.mrb[0].mxu0
      %v420 = vadd.f32 0.0, %v419
      %v421 = vpop.f32.mrb[0].mxu0
      %v422 = vpop.f32.mrb[0].mxu0
      %v423 = vadd.f32 0.0, %v422
      %v424 = vpop.f32.mrb[0].mxu0
      %425 = vmatprep.mubr.bf16.mxu0 0
      %426 = vmatmul.mubr.bf16.gmra.mrb[0].mxu0 %v323
      %v427 = vpop.f32.mrb[0].mxu0
      %v428 = vadd.f32 0.0, %v427
      %v429 = vpop.f32.mrb[0].mxu0
      %v430 = vpop.f32.mrb[0].mxu0
      %v431 = vadd.f32 0.0, %v430
      %v432 = vpop.f32.mrb[0].mxu0
      %433 = vmatprep.mubr.bf16.mxu0 0
      %434 = vmatmul.mubr.bf16.gmra.mrb[0].mxu0 %v324
      %v435 = vpop.f32.mrb[0].mxu0
      %v436 = vadd.f32 0.0, %v435
      %v437 = vpop.f32.mrb[0].mxu0
      %v438 = vpop.f32.mrb[0].mxu0
      %v439 = vadd.f32 0.0, %v438
      %v440 = vpop.f32.mrb[0].mxu0
      %441 = vdwg.mxu0
      %v450 = vunpack.c.l.b16 %v255
      %v451 = vunpack.c.l.b16 %v256
      %v452 = vunpack.c.l.b16 %v257
      %v453 = vunpack.c.l.b16 %v258
      %v454 = vunpack.c.l.b16 %v259
      %v455 = vunpack.c.l.b16 %v260
      %v456 = vunpack.c.l.b16 %v261
      %v457 = vunpack.c.l.b16 %v262
      %v458 = vpack.c.b16 %v451, %v450
      %v459 = vpack.c.b16 %v453, %v452
      %v460 = vpack.c.b16 %v455, %v454
      %v461 = vpack.c.b16 %v457, %v456
      %v482 = vunpack.c.l.b16 %v263
      %v483 = vunpack.c.l.b16 %v264
      %v484 = vunpack.c.l.b16 %v265
      %v485 = vunpack.c.l.b16 %v266
      %v486 = vunpack.c.l.b16 %v267
      %v487 = vunpack.c.l.b16 %v268
      %v488 = vunpack.c.l.b16 %v269
      %v489 = vunpack.c.l.b16 %v270
      %v490 = vunpack.c.l.b16 %v271
      %v491 = vunpack.c.l.b16 %v272
      %v492 = vunpack.c.l.b16 %v273
      %v493 = vunpack.c.l.b16 %v274
      %v494 = vunpack.c.l.b16 %v275
      %v495 = vunpack.c.l.b16 %v276
      %v496 = vunpack.c.l.b16 %v277
      %v497 = vunpack.c.l.b16 %v278
      %v498 = vpack.c.b16 %v483, %v482
      %v499 = vpack.c.b16 %v485, %v484
      %v500 = vpack.c.b16 %v487, %v486
      %v501 = vpack.c.b16 %v489, %v488
      %v502 = vpack.c.b16 %v491, %v490
      %v503 = vpack.c.b16 %v493, %v492
      %v504 = vpack.c.b16 %v495, %v494
      %v505 = vpack.c.b16 %v497, %v496
      %514 = vmatprep.subr.bf16.mxu0 0
      %515 = vmatpush1.bf16.msra.mxu0 %v498
      %516 = vmatprep.subr.bf16.mxu0 0
      %517 = vmatpush1.bf16.msra.mxu0 %v499
      %518 = vmatprep.subr.bf16.mxu0 0
      %519 = vmatpush1.bf16.msra.mxu0 %v500
      %520 = vmatprep.subr.bf16.mxu0 0
      %521 = vmatpush1.bf16.msra.mxu0 %v501
      %522 = vmatprep.subr.bf16.mxu0 0
      %523 = vmatpush1.bf16.msra.mxu0 %v502
      %524 = vmatprep.subr.bf16.mxu0 0
      %525 = vmatpush1.bf16.msra.mxu0 %v503
      %526 = vmatprep.subr.bf16.mxu0 0
      %527 = vmatpush1.bf16.msra.mxu0 %v504
      %528 = vmatprep.subr.bf16.mxu0 0
      %529 = vmatpush1.bf16.msra.mxu0 %v505
      %530 = vmatprep.subr.bf16.mxu0 0
      %531 = vmatpush1.bf16.msra.mxu0 0
      %532 = vmatprep.subr.bf16.mxu0 0
      %533 = vmatpush1.bf16.msra.mxu0 0
      %534 = vmatprep.subr.bf16.mxu0 0
      %535 = vmatpush1.bf16.msra.mxu0 0
      %536 = vmatprep.subr.bf16.mxu0 0
      %537 = vmatpush1.bf16.msra.mxu0 0
      %538 = vmatprep.subr.bf16.mxu0 0
      %539 = vmatpush1.bf16.msra.mxu0 0
      %540 = vmatprep.subr.bf16.mxu0 0
      %541 = vmatpush1.bf16.msra.mxu0 0
      %542 = vmatprep.subr.bf16.mxu0 0
      %543 = vmatpush1.bf16.msra.mxu0 0
      %544 = vmatprep.subr.bf16.mxu0 0
      %545 = vmatpush1.bf16.msra.mxu0 0
      %546 = vmatprep.mubr.bf16.mxu0 0
      %547 = vmatmul.mubr.bf16.gmra.mrb[0].mxu0 %v458
      %v548 = vpop.f32.mrb[0].mxu0
      %v549 = vadd.f32 %v412, %v548
      %v550 = vpop.f32.mrb[0].mxu0
      %v551 = vpop.f32.mrb[0].mxu0
      %v552 = vadd.f32 %v415, %v551
      %v553 = vpop.f32.mrb[0].mxu0
      %554 = vmatprep.mubr.bf16.mxu0 0
      %555 = vmatmul.mubr.bf16.gmra.mrb[0].mxu0 %v459
      %v556 = vpop.f32.mrb[0].mxu0
      %v557 = vadd.f32 %v420, %v556
      %v558 = vpop.f32.mrb[0].mxu0
      %v559 = vpop.f32.mrb[0].mxu0
      %v560 = vadd.f32 %v423, %v559
      %v561 = vpop.f32.mrb[0].mxu0
      %562 = vmatprep.mubr.bf16.mxu0 0
      %563 = vmatmul.mubr.bf16.gmra.mrb[0].mxu0 %v460
      %v564 = vpop.f32.mrb[0].mxu0
      %v565 = vadd.f32 %v428, %v564
      %v566 = vpop.f32.mrb[0].mxu0
      %v567 = vpop.f32.mrb[0].mxu0
      %v568 = vadd.f32 %v431, %v567
      %v569 = vpop.f32.mrb[0].mxu0
      %570 = vmatprep.mubr.bf16.mxu0 0
      %571 = vmatmul.mubr.bf16.gmra.mrb[0].mxu0 %v461
      %v572 = vpop.f32.mrb[0].mxu0
      %v573 = vadd.f32 %v436, %v572
      %v574 = vpop.f32.mrb[0].mxu0
      %v575 = vpop.f32.mrb[0].mxu0
      %v576 = vadd.f32 %v439, %v575
      %v577 = vpop.f32.mrb[0].mxu0
      %578 = vdwg.mxu0
      %v579 = vld [vmem:[%s234] sm:$0xf]
      %v580 = vld [vmem:[%s234 + $0x4] sm:$0x1]
      %v581 = vld [vmem:[%s234 + $0x8] sm:$0xf]
      %v582 = vld [vmem:[%s234 + $0xc] sm:$0x1]
      %v583 = vld [vmem:[%s234 + $0x10] sm:$0xf]
      %v584 = vld [vmem:[%s234 + $0x14] sm:$0x1]
      %v585 = vld [vmem:[%s234 + $0x18] sm:$0xf]
      %v586 = vld [vmem:[%s234 + $0x1c] sm:$0x1]
      %v587 = vld [vmem:[%s234 + $0x20] sm:$0xf]
      %v588 = vld [vmem:[%s234 + $0x24] sm:$0x1]
      %v589 = vld [vmem:[%s234 + $0x28] sm:$0xf]
      %v590 = vld [vmem:[%s234 + $0x2c] sm:$0x1]
      %v591 = vld [vmem:[%s234 + $0x30] sm:$0xf]
      %v592 = vld [vmem:[%s234 + $0x34] sm:$0x1]
      %v593 = vld [vmem:[%s234 + $0x38] sm:$0xf]
      %v594 = vld [vmem:[%s234 + $0x3c] sm:$0x1]
      %vm595 = vsmask.f32 3328
      %vm596 = vsmask.f32 7440
      %vm597 = vmor %vm595, %vm596
      %v599 = vshrl.u32 %v579, 16
      %v601 = vrot.slane %v599, 4
      %v602 = vshll.u32 %v579, 16
      %v604 = vrot.slane %v602, 5
      %v605 = vor.u32 %v601, %v604
      %v606 = vrot.slane %v605, 4
      %v608 = vshll.u32 %v580, 16
      %v610 = vrot.slane %v608, 5
      %v611 = vsel %vm597, %v606, %v610
      %v613 = vshrl.u32 %v581, 16
      %v615 = vrot.slane %v613, 4
      %v616 = vshll.u32 %v581, 16
      %v618 = vrot.slane %v616, 5
      %v619 = vor.u32 %v615, %v618
      %v620 = vrot.slane %v619, 4
      %v622 = vshll.u32 %v582, 16
      %v624 = vrot.slane %v622, 5
      %v625 = vsel %vm597, %v620, %v624
      %v627 = vshrl.u32 %v583, 16
      %v629 = vrot.slane %v627, 4
      %v630 = vshll.u32 %v583, 16
      %v632 = vrot.slane %v630, 5
      %v633 = vor.u32 %v629, %v632
      %v634 = vrot.slane %v633, 4
      %v636 = vshll.u32 %v584, 16
      %v638 = vrot.slane %v636, 5
      %v639 = vsel %vm597, %v634, %v638
      %v641 = vshrl.u32 %v585, 16
      %v643 = vrot.slane %v641, 4
      %v644 = vshll.u32 %v585, 16
      %v646 = vrot.slane %v644, 5
      %v647 = vor.u32 %v643, %v646
      %v648 = vrot.slane %v647, 4
      %v650 = vshll.u32 %v586, 16
      %v652 = vrot.slane %v650, 5
      %v653 = vsel %vm597, %v648, %v652
      %v655 = vshrl.u32 %v587, 16
      %v657 = vrot.slane %v655, 4
      %v658 = vshll.u32 %v587, 16
      %v660 = vrot.slane %v658, 5
      %v661 = vor.u32 %v657, %v660
      %v662 = vrot.slane %v661, 4
      %v664 = vshll.u32 %v588, 16
      %v666 = vrot.slane %v664, 5
      %v667 = vsel %vm597, %v662, %v666
      %v669 = vshrl.u32 %v589, 16
      %v671 = vrot.slane %v669, 4
      %v672 = vshll.u32 %v589, 16
      %v674 = vrot.slane %v672, 5
      %v675 = vor.u32 %v671, %v674
      %v676 = vrot.slane %v675, 4
      %v678 = vshll.u32 %v590, 16
      %v680 = vrot.slane %v678, 5
      %v681 = vsel %vm597, %v676, %v680
      %v683 = vshrl.u32 %v591, 16
      %v685 = vrot.slane %v683, 4
      %v686 = vshll.u32 %v591, 16
      %v688 = vrot.slane %v686, 5
      %v689 = vor.u32 %v685, %v688
      %v690 = vrot.slane %v689, 4
      %v692 = vshll.u32 %v592, 16
      %v694 = vrot.slane %v692, 5
      %v695 = vsel %vm597, %v690, %v694
      %v697 = vshrl.u32 %v593, 16
      %v699 = vrot.slane %v697, 4
      %v700 = vshll.u32 %v593, 16
      %v702 = vrot.slane %v700, 5
      %v703 = vor.u32 %v699, %v702
      %v704 = vrot.slane %v703, 4
      %v706 = vshll.u32 %v594, 16
      %v708 = vrot.slane %v706, 5
      %v709 = vsel %vm597, %v704, %v708
      %s710 = scalar_lea.vmem %s1, 128
      %v711 = vld [vmem:[%s710] sm:$0xf]
      %v712 = vld [vmem:[%s710 + $0x4] sm:$0xf]
      %v713 = vld [vmem:[%s710 + $0x8] sm:$0xf]
      %v714 = vld [vmem:[%s710 + $0xc] sm:$0xf]
      %v715 = vld [vmem:[%s710 + $0x10] sm:$0xf]
      %v716 = vld [vmem:[%s710 + $0x14] sm:$0xf]
      %v717 = vld [vmem:[%s710 + $0x18] sm:$0xf]
      %v718 = vld [vmem:[%s710 + $0x1c] sm:$0xf]
      %v719 = vld [vmem:[%s710 + $0x20] sm:$0xf]
      %v720 = vld [vmem:[%s710 + $0x24] sm:$0xf]
      %v721 = vld [vmem:[%s710 + $0x28] sm:$0xf]
      %v722 = vld [vmem:[%s710 + $0x2c] sm:$0xf]
      %v723 = vld [vmem:[%s710 + $0x30] sm:$0xf]
      %v724 = vld [vmem:[%s710 + $0x34] sm:$0xf]
      %v725 = vld [vmem:[%s710 + $0x38] sm:$0xf]
      %v726 = vld [vmem:[%s710 + $0x3c] sm:$0xf]
      %v727 = vunpack.c.l.b16 %v611
      %v728 = vunpack.c.l.b16 %v625
      %v729 = vunpack.c.l.b16 %v639
      %v730 = vunpack.c.l.b16 %v653
      %v731 = vunpack.c.l.b16 %v667
      %v732 = vunpack.c.l.b16 %v681
      %v733 = vunpack.c.l.b16 %v695
      %v734 = vunpack.c.l.b16 %v709
      %v735 = vpack.c.b16 %v728, %v727
      %v736 = vpack.c.b16 %v730, %v729
      %v737 = vpack.c.b16 %v732, %v731
      %v738 = vpack.c.b16 %v734, %v733
      %v759 = vunpack.c.l.b16 %v711
      %v760 = vunpack.c.l.b16 %v712
      %v761 = vunpack.c.l.b16 %v713
      %v762 = vunpack.c.l.b16 %v714
      %v763 = vunpack.c.l.b16 %v715
      %v764 = vunpack.c.l.b16 %v716
      %v765 = vunpack.c.l.b16 %v717
      %v766 = vunpack.c.l.b16 %v718
      %v767 = vunpack.c.l.b16 %v719
      %v768 = vunpack.c.l.b16 %v720
      %v769 = vunpack.c.l.b16 %v721
      %v770 = vunpack.c.l.b16 %v722
      %v771 = vunpack.c.l.b16 %v723
      %v772 = vunpack.c.l.b16 %v724
      %v773 = vunpack.c.l.b16 %v725
      %v774 = vunpack.c.l.b16 %v726
      %v775 = vpack.c.b16 %v760, %v759
      %v776 = vpack.c.b16 %v762, %v761
      %v777 = vpack.c.b16 %v764, %v763
      %v778 = vpack.c.b16 %v766, %v765
      %v779 = vpack.c.b16 %v768, %v767
      %v780 = vpack.c.b16 %v770, %v769
      %v781 = vpack.c.b16 %v772, %v771
      %v782 = vpack.c.b16 %v774, %v773
      %791 = vmatprep.subr.bf16.mxu0 0
      %792 = vmatpush1.bf16.msra.mxu0 %v775
      %793 = vmatprep.subr.bf16.mxu0 0
      %794 = vmatpush1.bf16.msra.mxu0 %v776
      %795 = vmatprep.subr.bf16.mxu0 0
      %796 = vmatpush1.bf16.msra.mxu0 %v777
      %797 = vmatprep.subr.bf16.mxu0 0
      %798 = vmatpush1.bf16.msra.mxu0 %v778
      %799 = vmatprep.subr.bf16.mxu0 0
      %800 = vmatpush1.bf16.msra.mxu0 %v779
      %801 = vmatprep.subr.bf16.mxu0 0
      %802 = vmatpush1.bf16.msra.mxu0 %v780
      %803 = vmatprep.subr.bf16.mxu0 0
      %804 = vmatpush1.bf16.msra.mxu0 %v781
      %805 = vmatprep.subr.bf16.mxu0 0
      %806 = vmatpush1.bf16.msra.mxu0 %v782
      %807 = vmatprep.subr.bf16.mxu0 0
      %808 = vmatpush1.bf16.msra.mxu0 0
      %809 = vmatprep.subr.bf16.mxu0 0
      %810 = vmatpush1.bf16.msra.mxu0 0
      %811 = vmatprep.subr.bf16.mxu0 0
      %812 = vmatpush1.bf16.msra.mxu0 0
      %813 = vmatprep.subr.bf16.mxu0 0
      %814 = vmatpush1.bf16.msra.mxu0 0
      %815 = vmatprep.subr.bf16.mxu0 0
      %816 = vmatpush1.bf16.msra.mxu0 0
      %817 = vmatprep.subr.bf16.mxu0 0
      %818 = vmatpush1.bf16.msra.mxu0 0
      %819 = vmatprep.subr.bf16.mxu0 0
      %820 = vmatpush1.bf16.msra.mxu0 0
      %821 = vmatprep.subr.bf16.mxu0 0
      %822 = vmatpush1.bf16.msra.mxu0 0
      %823 = vmatprep.mubr.bf16.mxu0 0
      %824 = vmatmul.mubr.bf16.gmra.mrb[0].mxu0 %v735
      %v825 = vpop.f32.mrb[0].mxu0
      %v826 = vadd.f32 0.0, %v825
      %v827 = vpop.f32.mrb[0].mxu0
      %v828 = vpop.f32.mrb[0].mxu0
      %v829 = vadd.f32 0.0, %v828
      %v830 = vpop.f32.mrb[0].mxu0
      %831 = vmatprep.mubr.bf16.mxu0 0
      %832 = vmatmul.mubr.bf16.gmra.mrb[0].mxu0 %v736
      %v833 = vpop.f32.mrb[0].mxu0
      %v834 = vadd.f32 0.0, %v833
      %v835 = vpop.f32.mrb[0].mxu0
      %v836 = vpop.f32.mrb[0].mxu0
      %v837 = vadd.f32 0.0, %v836
      %v838 = vpop.f32.mrb[0].mxu0
      %839 = vmatprep.mubr.bf16.mxu0 0
      %840 = vmatmul.mubr.bf16.gmra.mrb[0].mxu0 %v737
      %v841 = vpop.f32.mrb[0].mxu0
      %v842 = vadd.f32 0.0, %v841
      %v843 = vpop.f32.mrb[0].mxu0
      %v844 = vpop.f32.mrb[0].mxu0
      %v845 = vadd.f32 0.0, %v844
      %v846 = vpop.f32.mrb[0].mxu0
      %847 = vmatprep.mubr.bf16.mxu0 0
      %848 = vmatmul.mubr.bf16.gmra.mrb[0].mxu0 %v738
      %v849 = vpop.f32.mrb[0].mxu0
      %v850 = vadd.f32 0.0, %v849
      %v851 = vpop.f32.mrb[0].mxu0
      %v852 = vpop.f32.mrb[0].mxu0
      %v853 = vadd.f32 0.0, %v852
      %v854 = vpop.f32.mrb[0].mxu0
      %855 = vdwg.mxu0
      %v856 = vadd.f32 %v549, %v826
      %v857 = vadd.f32 %v552, %v829
      %v858 = vadd.f32 %v557, %v834
      %v859 = vadd.f32 %v560, %v837
      %v860 = vadd.f32 %v565, %v842
      %v861 = vadd.f32 %v568, %v845
      %v862 = vadd.f32 %v573, %v850
      %v863 = vadd.f32 %v576, %v853
      %s864 = scalar_lea.vmem %s234, 144
      %v865 = vld [vmem:[%s864] sm:$0xf]
      %v866 = vld [vmem:[%s864 + $0x8] sm:$0xf]
      %v867 = vld [vmem:[%s864 + $0x10] sm:$0xf]
      %v868 = vld [vmem:[%s864 + $0x18] sm:$0xf]
      %v869 = vld [vmem:[%s864 + $0x20] sm:$0xf]
      %v870 = vld [vmem:[%s864 + $0x28] sm:$0xf]
      %v871 = vld [vmem:[%s864 + $0x30] sm:$0xf]
      %v872 = vld [vmem:[%s864 + $0x38] sm:$0xf]
      %s873 = scalar_lea.vmem %s1, 192
      %v874 = vld [vmem:[%s873] sm:$0xf]
      %v875 = vld [vmem:[%s873 + $0x4] sm:$0xf]
      %v876 = vld [vmem:[%s873 + $0x8] sm:$0xf]
      %v877 = vld [vmem:[%s873 + $0xc] sm:$0xf]
      %v878 = vld [vmem:[%s873 + $0x10] sm:$0xf]
      %v879 = vld [vmem:[%s873 + $0x14] sm:$0xf]
      %v880 = vld [vmem:[%s873 + $0x18] sm:$0xf]
      %v881 = vld [vmem:[%s873 + $0x1c] sm:$0xf]
      %v882 = vld [vmem:[%s873 + $0x20] sm:$0xf]
      %v883 = vld [vmem:[%s873 + $0x24] sm:$0xf]
      %v884 = vld [vmem:[%s873 + $0x28] sm:$0xf]
      %v885 = vld [vmem:[%s873 + $0x2c] sm:$0xf]
      %v886 = vld [vmem:[%s873 + $0x30] sm:$0xf]
      %v887 = vld [vmem:[%s873 + $0x34] sm:$0xf]
      %v888 = vld [vmem:[%s873 + $0x38] sm:$0xf]
      %v889 = vld [vmem:[%s873 + $0x3c] sm:$0xf]
      %v898 = vunpack.c.l.b16 %v865
      %v899 = vunpack.c.l.b16 %v866
      %v900 = vunpack.c.l.b16 %v867
      %v901 = vunpack.c.l.b16 %v868
      %v902 = vunpack.c.l.b16 %v869
      %v903 = vunpack.c.l.b16 %v870
      %v904 = vunpack.c.l.b16 %v871
      %v905 = vunpack.c.l.b16 %v872
      %v906 = vpack.c.b16 %v899, %v898
      %v907 = vpack.c.b16 %v901, %v900
      %v908 = vpack.c.b16 %v903, %v902
      %v909 = vpack.c.b16 %v905, %v904
      %v930 = vunpack.c.l.b16 %v874
      %v931 = vunpack.c.l.b16 %v875
      %v932 = vunpack.c.l.b16 %v876
      %v933 = vunpack.c.l.b16 %v877
      %v934 = vunpack.c.l.b16 %v878
      %v935 = vunpack.c.l.b16 %v879
      %v936 = vunpack.c.l.b16 %v880
      %v937 = vunpack.c.l.b16 %v881
      %v938 = vunpack.c.l.b16 %v882
      %v939 = vunpack.c.l.b16 %v883
      %v940 = vunpack.c.l.b16 %v884
      %v941 = vunpack.c.l.b16 %v885
      %v942 = vunpack.c.l.b16 %v886
      %v943 = vunpack.c.l.b16 %v887
      %v944 = vunpack.c.l.b16 %v888
      %v945 = vunpack.c.l.b16 %v889
      %v946 = vpack.c.b16 %v931, %v930
      %v947 = vpack.c.b16 %v933, %v932
      %v948 = vpack.c.b16 %v935, %v934
      %v949 = vpack.c.b16 %v937, %v936
      %v950 = vpack.c.b16 %v939, %v938
      %v951 = vpack.c.b16 %v941, %v940
      %v952 = vpack.c.b16 %v943, %v942
      %v953 = vpack.c.b16 %v945, %v944
      %962 = vmatprep.subr.bf16.mxu0 0
      %963 = vmatpush1.bf16.msra.mxu0 %v946
      %964 = vmatprep.subr.bf16.mxu0 0
      %965 = vmatpush1.bf16.msra.mxu0 %v947
      %966 = vmatprep.subr.bf16.mxu0 0
      %967 = vmatpush1.bf16.msra.mxu0 %v948
      %968 = vmatprep.subr.bf16.mxu0 0
      %969 = vmatpush1.bf16.msra.mxu0 %v949
      %970 = vmatprep.subr.bf16.mxu0 0
      %971 = vmatpush1.bf16.msra.mxu0 %v950
      %972 = vmatprep.subr.bf16.mxu0 0
      %973 = vmatpush1.bf16.msra.mxu0 %v951
      %974 = vmatprep.subr.bf16.mxu0 0
      %975 = vmatpush1.bf16.msra.mxu0 %v952
      %976 = vmatprep.subr.bf16.mxu0 0
      %977 = vmatpush1.bf16.msra.mxu0 %v953
      %978 = vmatprep.subr.bf16.mxu0 0
      %979 = vmatpush1.bf16.msra.mxu0 0
      %980 = vmatprep.subr.bf16.mxu0 0
      %981 = vmatpush1.bf16.msra.mxu0 0
      %982 = vmatprep.subr.bf16.mxu0 0
      %983 = vmatpush1.bf16.msra.mxu0 0
      %984 = vmatprep.subr.bf16.mxu0 0
      %985 = vmatpush1.bf16.msra.mxu0 0
      %986 = vmatprep.subr.bf16.mxu0 0
      %987 = vmatpush1.bf16.msra.mxu0 0
      %988 = vmatprep.subr.bf16.mxu0 0
      %989 = vmatpush1.bf16.msra.mxu0 0
      %990 = vmatprep.subr.bf16.mxu0 0
      %991 = vmatpush1.bf16.msra.mxu0 0
      %992 = vmatprep.subr.bf16.mxu0 0
      %993 = vmatpush1.bf16.msra.mxu0 0
      %994 = vmatprep.mubr.bf16.mxu0 0
      %995 = vmatmul.mubr.bf16.gmra.mrb[0].mxu0 %v906
      %v996 = vpop.f32.mrb[0].mxu0
      %v997 = vadd.f32 0.0, %v996
      %v998 = vpop.f32.mrb[0].mxu0
      %v999 = vpop.f32.mrb[0].mxu0
      %v1000 = vadd.f32 0.0, %v999
      %v1001 = vpop.f32.mrb[0].mxu0
      %1002 = vmatprep.mubr.bf16.mxu0 0
      %1003 = vmatmul.mubr.bf16.gmra.mrb[0].mxu0 %v907
      %v1004 = vpop.f32.mrb[0].mxu0
      %v1005 = vadd.f32 0.0, %v1004
      %v1006 = vpop.f32.mrb[0].mxu0
      %v1007 = vpop.f32.mrb[0].mxu0
      %v1008 = vadd.f32 0.0, %v1007
      %v1009 = vpop.f32.mrb[0].mxu0
      %1010 = vmatprep.mubr.bf16.mxu0 0
      %1011 = vmatmul.mubr.bf16.gmra.mrb[0].mxu0 %v908
      %v1012 = vpop.f32.mrb[0].mxu0
      %v1013 = vadd.f32 0.0, %v1012
      %v1014 = vpop.f32.mrb[0].mxu0
      %v1015 = vpop.f32.mrb[0].mxu0
      %v1016 = vadd.f32 0.0, %v1015
      %v1017 = vpop.f32.mrb[0].mxu0
      %1018 = vmatprep.mubr.bf16.mxu0 0
      %1019 = vmatmul.mubr.bf16.gmra.mrb[0].mxu0 %v909
      %v1020 = vpop.f32.mrb[0].mxu0
      %v1021 = vadd.f32 0.0, %v1020
      %v1022 = vpop.f32.mrb[0].mxu0
      %v1023 = vpop.f32.mrb[0].mxu0
      %v1024 = vadd.f32 0.0, %v1023
      %v1025 = vpop.f32.mrb[0].mxu0
      %1026 = vdwg.mxu0
      %v1027 = vadd.f32 %v856, %v997
      %v1028 = vadd.f32 %v857, %v1000
      %v1029 = vadd.f32 %v858, %v1005
      %v1030 = vadd.f32 %v859, %v1008
      %v1031 = vadd.f32 %v860, %v1013
      %v1032 = vadd.f32 %v861, %v1016
      %v1033 = vadd.f32 %v862, %v1021
      %v1034 = vadd.f32 %v863, %v1024
      %s1035 = scalar_lea.vmem %s234, 216
      %v1036 = vld [vmem:[%s1035] sm:$0xf]
      %v1037 = vld [vmem:[%s1035 + $0x8] sm:$0xf]
      %v1038 = vld [vmem:[%s1035 + $0x10] sm:$0xf]
      %v1039 = vld [vmem:[%s1035 + $0x18] sm:$0xf]
      %v1040 = vld [vmem:[%s1035 + $0x20] sm:$0xf]
      %v1041 = vld [vmem:[%s1035 + $0x28] sm:$0xf]
      %v1042 = vld [vmem:[%s1035 + $0x30] sm:$0xf]
      %v1043 = vld [vmem:[%s1035 + $0x38] sm:$0xf]
      %s1044 = scalar_lea.vmem %s1, 256
      %v1045 = vld [vmem:[%s1044] sm:$0xf]
      %v1046 = vld [vmem:[%s1044 + $0x4] sm:$0xf]
      %v1047 = vld [vmem:[%s1044 + $0x8] sm:$0xf]
      %v1048 = vld [vmem:[%s1044 + $0xc] sm:$0xf]
      %v1049 = vld [vmem:[%s1044 + $0x10] sm:$0xf]
      %v1050 = vld [vmem:[%s1044 + $0x14] sm:$0xf]
      %v1051 = vld [vmem:[%s1044 + $0x18] sm:$0xf]
      %v1052 = vld [vmem:[%s1044 + $0x1c] sm:$0xf]
      %v1053 = vld [vmem:[%s1044 + $0x20] sm:$0xf]
      %v1054 = vld [vmem:[%s1044 + $0x24] sm:$0xf]
      %v1055 = vld [vmem:[%s1044 + $0x28] sm:$0xf]
      %v1056 = vld [vmem:[%s1044 + $0x2c] sm:$0xf]
      %v1057 = vld [vmem:[%s1044 + $0x30] sm:$0xf]
      %v1058 = vld [vmem:[%s1044 + $0x34] sm:$0xf]
      %v1059 = vld [vmem:[%s1044 + $0x38] sm:$0xf]
      %v1060 = vld [vmem:[%s1044 + $0x3c] sm:$0xf]
      %v1069 = vunpack.c.l.b16 %v1036
      %v1070 = vunpack.c.l.b16 %v1037
      %v1071 = vunpack.c.l.b16 %v1038
      %v1072 = vunpack.c.l.b16 %v1039
      %v1073 = vunpack.c.l.b16 %v1040
      %v1074 = vunpack.c.l.b16 %v1041
      %v1075 = vunpack.c.l.b16 %v1042
      %v1076 = vunpack.c.l.b16 %v1043
      %v1077 = vpack.c.b16 %v1070, %v1069
      %v1078 = vpack.c.b16 %v1072, %v1071
      %v1079 = vpack.c.b16 %v1074, %v1073
      %v1080 = vpack.c.b16 %v1076, %v1075
      %v1101 = vunpack.c.l.b16 %v1045
      %v1102 = vunpack.c.l.b16 %v1046
      %v1103 = vunpack.c.l.b16 %v1047
      %v1104 = vunpack.c.l.b16 %v1048
      %v1105 = vunpack.c.l.b16 %v1049
      %v1106 = vunpack.c.l.b16 %v1050
      %v1107 = vunpack.c.l.b16 %v1051
      %v1108 = vunpack.c.l.b16 %v1052
      %v1109 = vunpack.c.l.b16 %v1053
      %v1110 = vunpack.c.l.b16 %v1054
      %v1111 = vunpack.c.l.b16 %v1055
      %v1112 = vunpack.c.l.b16 %v1056
      %v1113 = vunpack.c.l.b16 %v1057
      %v1114 = vunpack.c.l.b16 %v1058
      %v1115 = vunpack.c.l.b16 %v1059
      %v1116 = vunpack.c.l.b16 %v1060
      %v1117 = vpack.c.b16 %v1102, %v1101
      %v1118 = vpack.c.b16 %v1104, %v1103
      %v1119 = vpack.c.b16 %v1106, %v1105
      %v1120 = vpack.c.b16 %v1108, %v1107
      %v1121 = vpack.c.b16 %v1110, %v1109
      %v1122 = vpack.c.b16 %v1112, %v1111
      %v1123 = vpack.c.b16 %v1114, %v1113
      %v1124 = vpack.c.b16 %v1116, %v1115
      %1133 = vmatprep.subr.bf16.mxu0 0
      %1134 = vmatpush1.bf16.msra.mxu0 %v1117
      %1135 = vmatprep.subr.bf16.mxu0 0
      %1136 = vmatpush1.bf16.msra.mxu0 %v1118
      %1137 = vmatprep.subr.bf16.mxu0 0
      %1138 = vmatpush1.bf16.msra.mxu0 %v1119
      %1139 = vmatprep.subr.bf16.mxu0 0
      %1140 = vmatpush1.bf16.msra.mxu0 %v1120
      %1141 = vmatprep.subr.bf16.mxu0 0
      %1142 = vmatpush1.bf16.msra.mxu0 %v1121
      %1143 = vmatprep.subr.bf16.mxu0 0
      %1144 = vmatpush1.bf16.msra.mxu0 %v1122
      %1145 = vmatprep.subr.bf16.mxu0 0
      %1146 = vmatpush1.bf16.msra.mxu0 %v1123
      %1147 = vmatprep.subr.bf16.mxu0 0
      %1148 = vmatpush1.bf16.msra.mxu0 %v1124
      %1149 = vmatprep.subr.bf16.mxu0 0
      %1150 = vmatpush1.bf16.msra.mxu0 0
      %1151 = vmatprep.subr.bf16.mxu0 0
      %1152 = vmatpush1.bf16.msra.mxu0 0
      %1153 = vmatprep.subr.bf16.mxu0 0
      %1154 = vmatpush1.bf16.msra.mxu0 0
      %1155 = vmatprep.subr.bf16.mxu0 0
      %1156 = vmatpush1.bf16.msra.mxu0 0
      %1157 = vmatprep.subr.bf16.mxu0 0
      %1158 = vmatpush1.bf16.msra.mxu0 0
      %1159 = vmatprep.subr.bf16.mxu0 0
      %1160 = vmatpush1.bf16.msra.mxu0 0
      %1161 = vmatprep.subr.bf16.mxu0 0
      %1162 = vmatpush1.bf16.msra.mxu0 0
      %1163 = vmatprep.subr.bf16.mxu0 0
      %1164 = vmatpush1.bf16.msra.mxu0 0
      %1165 = vmatprep.mubr.bf16.mxu0 0
      %1166 = vmatmul.mubr.bf16.gmra.mrb[0].mxu0 %v1077
      %v1167 = vpop.f32.mrb[0].mxu0
      %v1168 = vadd.f32 0.0, %v1167
      %v1169 = vpop.f32.mrb[0].mxu0
      %v1170 = vpop.f32.mrb[0].mxu0
      %v1171 = vadd.f32 0.0, %v1170
      %v1172 = vpop.f32.mrb[0].mxu0
      %1173 = vmatprep.mubr.bf16.mxu0 0
      %1174 = vmatmul.mubr.bf16.gmra.mrb[0].mxu0 %v1078
      %v1175 = vpop.f32.mrb[0].mxu0
      %v1176 = vadd.f32 0.0, %v1175
      %v1177 = vpop.f32.mrb[0].mxu0
      %v1178 = vpop.f32.mrb[0].mxu0
      %v1179 = vadd.f32 0.0, %v1178
      %v1180 = vpop.f32.mrb[0].mxu0
      %1181 = vmatprep.mubr.bf16.mxu0 0
      %1182 = vmatmul.mubr.bf16.gmra.mrb[0].mxu0 %v1079
      %v1183 = vpop.f32.mrb[0].mxu0
      %v1184 = vadd.f32 0.0, %v1183
      %v1185 = vpop.f32.mrb[0].mxu0
      %v1186 = vpop.f32.mrb[0].mxu0
      %v1187 = vadd.f32 0.0, %v1186
      %v1188 = vpop.f32.mrb[0].mxu0
      %1189 = vmatprep.mubr.bf16.mxu0 0
      %1190 = vmatmul.mubr.bf16.gmra.mrb[0].mxu0 %v1080
      %v1191 = vpop.f32.mrb[0].mxu0
      %v1192 = vadd.f32 0.0, %v1191
      %v1193 = vpop.f32.mrb[0].mxu0
      %v1194 = vpop.f32.mrb[0].mxu0
      %v1195 = vadd.f32 0.0, %v1194
      %v1196 = vpop.f32.mrb[0].mxu0
      %1197 = vdwg.mxu0
      %v1198 = vadd.f32 %v1027, %v1168
      %v1199 = vadd.f32 %v1028, %v1171
      %v1200 = vadd.f32 %v1029, %v1176
      %v1201 = vadd.f32 %v1030, %v1179
      %v1202 = vadd.f32 %v1031, %v1184
      %v1203 = vadd.f32 %v1032, %v1187
      %v1204 = vadd.f32 %v1033, %v1192
      %v1205 = vadd.f32 %v1034, %v1195
      %v1206 = vld [vmem:[%s864] sm:$0xf]
      %v1207 = vld [vmem:[%s864 + $0x4] sm:$0x1]
      %v1208 = vld [vmem:[%s864 + $0x8] sm:$0xf]
      %v1209 = vld [vmem:[%s864 + $0xc] sm:$0x1]
      %v1210 = vld [vmem:[%s864 + $0x10] sm:$0xf]
      %v1211 = vld [vmem:[%s864 + $0x14] sm:$0x1]
      %v1212 = vld [vmem:[%s864 + $0x18] sm:$0xf]
      %v1213 = vld [vmem:[%s864 + $0x1c] sm:$0x1]
      %v1214 = vld [vmem:[%s864 + $0x20] sm:$0xf]
      %v1215 = vld [vmem:[%s864 + $0x24] sm:$0x1]
      %v1216 = vld [vmem:[%s864 + $0x28] sm:$0xf]
      %v1217 = vld [vmem:[%s864 + $0x2c] sm:$0x1]
      %v1218 = vld [vmem:[%s864 + $0x30] sm:$0xf]
      %v1219 = vld [vmem:[%s864 + $0x34] sm:$0x1]
      %v1220 = vld [vmem:[%s864 + $0x38] sm:$0xf]
      %v1221 = vld [vmem:[%s864 + $0x3c] sm:$0x1]
      %v1223 = vshrl.u32 %v1206, 16
      %v1225 = vrot.slane %v1223, 4
      %v1226 = vshll.u32 %v1206, 16
      %v1228 = vrot.slane %v1226, 5
      %v1229 = vor.u32 %v1225, %v1228
      %v1230 = vrot.slane %v1229, 4
      %v1232 = vshll.u32 %v1207, 16
      %v1234 = vrot.slane %v1232, 5
      %v1235 = vsel %vm597, %v1230, %v1234
      %v1237 = vshrl.u32 %v1208, 16
      %v1239 = vrot.slane %v1237, 4
      %v1240 = vshll.u32 %v1208, 16
      %v1242 = vrot.slane %v1240, 5
      %v1243 = vor.u32 %v1239, %v1242
      %v1244 = vrot.slane %v1243, 4
      %v1246 = vshll.u32 %v1209, 16
      %v1248 = vrot.slane %v1246, 5
      %v1249 = vsel %vm597, %v1244, %v1248
      %v1251 = vshrl.u32 %v1210, 16
      %v1253 = vrot.slane %v1251, 4
      %v1254 = vshll.u32 %v1210, 16
      %v1256 = vrot.slane %v1254, 5
      %v1257 = vor.u32 %v1253, %v1256
      %v1258 = vrot.slane %v1257, 4
      %v1260 = vshll.u32 %v1211, 16
      %v1262 = vrot.slane %v1260, 5
      %v1263 = vsel %vm597, %v1258, %v1262
      %v1265 = vshrl.u32 %v1212, 16
      %v1267 = vrot.slane %v1265, 4
      %v1268 = vshll.u32 %v1212, 16
      %v1270 = vrot.slane %v1268, 5
      %v1271 = vor.u32 %v1267, %v1270
      %v1272 = vrot.slane %v1271, 4
      %v1274 = vshll.u32 %v1213, 16
      %v1276 = vrot.slane %v1274, 5
      %v1277 = vsel %vm597, %v1272, %v1276
      %v1279 = vshrl.u32 %v1214, 16
      %v1281 = vrot.slane %v1279, 4
      %v1282 = vshll.u32 %v1214, 16
      %v1284 = vrot.slane %v1282, 5
      %v1285 = vor.u32 %v1281, %v1284
      %v1286 = vrot.slane %v1285, 4
      %v1288 = vshll.u32 %v1215, 16
      %v1290 = vrot.slane %v1288, 5
      %v1291 = vsel %vm597, %v1286, %v1290
      %v1293 = vshrl.u32 %v1216, 16
      %v1295 = vrot.slane %v1293, 4
      %v1296 = vshll.u32 %v1216, 16
      %v1298 = vrot.slane %v1296, 5
      %v1299 = vor.u32 %v1295, %v1298
      %v1300 = vrot.slane %v1299, 4
      %v1302 = vshll.u32 %v1217, 16
      %v1304 = vrot.slane %v1302, 5
      %v1305 = vsel %vm597, %v1300, %v1304
      %v1307 = vshrl.u32 %v1218, 16
      %v1309 = vrot.slane %v1307, 4
      %v1310 = vshll.u32 %v1218, 16
      %v1312 = vrot.slane %v1310, 5
      %v1313 = vor.u32 %v1309, %v1312
      %v1314 = vrot.slane %v1313, 4
      %v1316 = vshll.u32 %v1219, 16
      %v1318 = vrot.slane %v1316, 5
      %v1319 = vsel %vm597, %v1314, %v1318
      %v1321 = vshrl.u32 %v1220, 16
      %v1323 = vrot.slane %v1321, 4
      %v1324 = vshll.u32 %v1220, 16
      %v1326 = vrot.slane %v1324, 5
      %v1327 = vor.u32 %v1323, %v1326
      %v1328 = vrot.slane %v1327, 4
      %v1330 = vshll.u32 %v1221, 16
      %v1332 = vrot.slane %v1330, 5
      %v1333 = vsel %vm597, %v1328, %v1332
      %s1334 = scalar_lea.vmem %s1, 320
      %v1335 = vld [vmem:[%s1334] sm:$0xf]
      %v1336 = vld [vmem:[%s1334 + $0x4] sm:$0xf]
      %v1337 = vld [vmem:[%s1334 + $0x8] sm:$0xf]
      %v1338 = vld [vmem:[%s1334 + $0xc] sm:$0xf]
      %v1339 = vld [vmem:[%s1334 + $0x10] sm:$0xf]
      %v1340 = vld [vmem:[%s1334 + $0x14] sm:$0xf]
      %v1341 = vld [vmem:[%s1334 + $0x18] sm:$0xf]
      %v1342 = vld [vmem:[%s1334 + $0x1c] sm:$0xf]
      %v1343 = vld [vmem:[%s1334 + $0x20] sm:$0xf]
      %v1344 = vld [vmem:[%s1334 + $0x24] sm:$0xf]
      %v1345 = vld [vmem:[%s1334 + $0x28] sm:$0xf]
      %v1346 = vld [vmem:[%s1334 + $0x2c] sm:$0xf]
      %v1347 = vld [vmem:[%s1334 + $0x30] sm:$0xf]
      %v1348 = vld [vmem:[%s1334 + $0x34] sm:$0xf]
      %v1349 = vld [vmem:[%s1334 + $0x38] sm:$0xf]
      %v1350 = vld [vmem:[%s1334 + $0x3c] sm:$0xf]
      %v1351 = vunpack.c.l.b16 %v1235
      %v1352 = vunpack.c.l.b16 %v1249
      %v1353 = vunpack.c.l.b16 %v1263
      %v1354 = vunpack.c.l.b16 %v1277
      %v1355 = vunpack.c.l.b16 %v1291
      %v1356 = vunpack.c.l.b16 %v1305
      %v1357 = vunpack.c.l.b16 %v1319
      %v1358 = vunpack.c.l.b16 %v1333
      %v1359 = vpack.c.b16 %v1352, %v1351
      %v1360 = vpack.c.b16 %v1354, %v1353
      %v1361 = vpack.c.b16 %v1356, %v1355
      %v1362 = vpack.c.b16 %v1358, %v1357
      %v1383 = vunpack.c.l.b16 %v1335
      %v1384 = vunpack.c.l.b16 %v1336
      %v1385 = vunpack.c.l.b16 %v1337
      %v1386 = vunpack.c.l.b16 %v1338
      %v1387 = vunpack.c.l.b16 %v1339
      %v1388 = vunpack.c.l.b16 %v1340
      %v1389 = vunpack.c.l.b16 %v1341
      %v1390 = vunpack.c.l.b16 %v1342
      %v1391 = vunpack.c.l.b16 %v1343
      %v1392 = vunpack.c.l.b16 %v1344
      %v1393 = vunpack.c.l.b16 %v1345
      %v1394 = vunpack.c.l.b16 %v1346
      %v1395 = vunpack.c.l.b16 %v1347
      %v1396 = vunpack.c.l.b16 %v1348
      %v1397 = vunpack.c.l.b16 %v1349
      %v1398 = vunpack.c.l.b16 %v1350
      %v1399 = vpack.c.b16 %v1384, %v1383
      %v1400 = vpack.c.b16 %v1386, %v1385
      %v1401 = vpack.c.b16 %v1388, %v1387
      %v1402 = vpack.c.b16 %v1390, %v1389
      %v1403 = vpack.c.b16 %v1392, %v1391
      %v1404 = vpack.c.b16 %v1394, %v1393
      %v1405 = vpack.c.b16 %v1396, %v1395
      %v1406 = vpack.c.b16 %v1398, %v1397
      %1415 = vmatprep.subr.bf16.mxu0 0
      %1416 = vmatpush1.bf16.msra.mxu0 %v1399
      %1417 = vmatprep.subr.bf16.mxu0 0
      %1418 = vmatpush1.bf16.msra.mxu0 %v1400
      %1419 = vmatprep.subr.bf16.mxu0 0
      %1420 = vmatpush1.bf16.msra.mxu0 %v1401
      %1421 = vmatprep.subr.bf16.mxu0 0
      %1422 = vmatpush1.bf16.msra.mxu0 %v1402
      %1423 = vmatprep.subr.bf16.mxu0 0
      %1424 = vmatpush1.bf16.msra.mxu0 %v1403
      %1425 = vmatprep.subr.bf16.mxu0 0
      %1426 = vmatpush1.bf16.msra.mxu0 %v1404
      %1427 = vmatprep.subr.bf16.mxu0 0
      %1428 = vmatpush1.bf16.msra.mxu0 %v1405
      %1429 = vmatprep.subr.bf16.mxu0 0
      %1430 = vmatpush1.bf16.msra.mxu0 %v1406
      %1431 = vmatprep.subr.bf16.mxu0 0
      %1432 = vmatpush1.bf16.msra.mxu0 0
      %1433 = vmatprep.subr.bf16.mxu0 0
      %1434 = vmatpush1.bf16.msra.mxu0 0
      %1435 = vmatprep.subr.bf16.mxu0 0
      %1436 = vmatpush1.bf16.msra.mxu0 0
      %1437 = vmatprep.subr.bf16.mxu0 0
      %1438 = vmatpush1.bf16.msra.mxu0 0
      %1439 = vmatprep.subr.bf16.mxu0 0
      %1440 = vmatpush1.bf16.msra.mxu0 0
      %1441 = vmatprep.subr.bf16.mxu0 0
      %1442 = vmatpush1.bf16.msra.mxu0 0
      %1443 = vmatprep.subr.bf16.mxu0 0
      %1444 = vmatpush1.bf16.msra.mxu0 0
      %1445 = vmatprep.subr.bf16.mxu0 0
      %1446 = vmatpush1.bf16.msra.mxu0 0
      %1447 = vmatprep.mubr.bf16.mxu0 0
      %1448 = vmatmul.mubr.bf16.gmra.mrb[0].mxu0 %v1359
      %v1449 = vpop.f32.mrb[0].mxu0
      %v1450 = vadd.f32 0.0, %v1449
      %v1451 = vpop.f32.mrb[0].mxu0
      %v1452 = vpop.f32.mrb[0].mxu0
      %v1453 = vadd.f32 0.0, %v1452
      %v1454 = vpop.f32.mrb[0].mxu0
      %1455 = vmatprep.mubr.bf16.mxu0 0
      %1456 = vmatmul.mubr.bf16.gmra.mrb[0].mxu0 %v1360
      %v1457 = vpop.f32.mrb[0].mxu0
      %v1458 = vadd.f32 0.0, %v1457
      %v1459 = vpop.f32.mrb[0].mxu0
      %v1460 = vpop.f32.mrb[0].mxu0
      %v1461 = vadd.f32 0.0, %v1460
      %v1462 = vpop.f32.mrb[0].mxu0
      %1463 = vmatprep.mubr.bf16.mxu0 0
      %1464 = vmatmul.mubr.bf16.gmra.mrb[0].mxu0 %v1361
      %v1465 = vpop.f32.mrb[0].mxu0
      %v1466 = vadd.f32 0.0, %v1465
      %v1467 = vpop.f32.mrb[0].mxu0
      %v1468 = vpop.f32.mrb[0].mxu0
      %v1469 = vadd.f32 0.0, %v1468
      %v1470 = vpop.f32.mrb[0].mxu0
      %1471 = vmatprep.mubr.bf16.mxu0 0
      %1472 = vmatmul.mubr.bf16.gmra.mrb[0].mxu0 %v1362
      %v1473 = vpop.f32.mrb[0].mxu0
      %v1474 = vadd.f32 0.0, %v1473
      %v1475 = vpop.f32.mrb[0].mxu0
      %v1476 = vpop.f32.mrb[0].mxu0
      %v1477 = vadd.f32 0.0, %v1476
      %v1478 = vpop.f32.mrb[0].mxu0
      %1479 = vdwg.mxu0
      %v1480 = vadd.f32 %v1198, %v1450
      %v1481 = vadd.f32 %v1199, %v1453
      %v1482 = vadd.f32 %v1200, %v1458
      %v1483 = vadd.f32 %v1201, %v1461
      %v1484 = vadd.f32 %v1202, %v1466
      %v1485 = vadd.f32 %v1203, %v1469
      %v1486 = vadd.f32 %v1204, %v1474
      %v1487 = vadd.f32 %v1205, %v1477
      %s1488 = scalar_lea.vmem %s234, 8
      %v1489 = vld [vmem:[%s1488] sm:$0xf]
      %v1490 = vld [vmem:[%s1488 + $0x8] sm:$0xf]
      %v1491 = vld [vmem:[%s1488 + $0x10] sm:$0xf]
      %v1492 = vld [vmem:[%s1488 + $0x18] sm:$0xf]
      %v1493 = vld [vmem:[%s1488 + $0x20] sm:$0xf]
      %v1494 = vld [vmem:[%s1488 + $0x28] sm:$0xf]
      %v1495 = vld [vmem:[%s1488 + $0x30] sm:$0xf]
      %v1496 = vld [vmem:[%s1488 + $0x38] sm:$0xf]
      %s1497 = scalar_lea.vmem %s1, 384
      %v1498 = vld [vmem:[%s1497] sm:$0xf]
      %v1499 = vld [vmem:[%s1497 + $0x4] sm:$0xf]
      %v1500 = vld [vmem:[%s1497 + $0x8] sm:$0xf]
      %v1501 = vld [vmem:[%s1497 + $0xc] sm:$0xf]
      %v1502 = vld [vmem:[%s1497 + $0x10] sm:$0xf]
      %v1503 = vld [vmem:[%s1497 + $0x14] sm:$0xf]
      %v1504 = vld [vmem:[%s1497 + $0x18] sm:$0xf]
      %v1505 = vld [vmem:[%s1497 + $0x1c] sm:$0xf]
      %v1506 = vld [vmem:[%s1497 + $0x20] sm:$0xf]
      %v1507 = vld [vmem:[%s1497 + $0x24] sm:$0xf]
      %v1508 = vld [vmem:[%s1497 + $0x28] sm:$0xf]
      %v1509 = vld [vmem:[%s1497 + $0x2c] sm:$0xf]
      %v1510 = vld [vmem:[%s1497 + $0x30] sm:$0xf]
      %v1511 = vld [vmem:[%s1497 + $0x34] sm:$0xf]
      %v1512 = vld [vmem:[%s1497 + $0x38] sm:$0xf]
      %v1513 = vld [vmem:[%s1497 + $0x3c] sm:$0xf]
      %v1522 = vunpack.c.l.b16 %v1489
      %v1523 = vunpack.c.l.b16 %v1490
      %v1524 = vunpack.c.l.b16 %v1491
      %v1525 = vunpack.c.l.b16 %v1492
      %v1526 = vunpack.c.l.b16 %v1493
      %v1527 = vunpack.c.l.b16 %v1494
      %v1528 = vunpack.c.l.b16 %v1495
      %v1529 = vunpack.c.l.b16 %v1496
      %v1530 = vpack.c.b16 %v1523, %v1522
      %v1531 = vpack.c.b16 %v1525, %v1524
      %v1532 = vpack.c.b16 %v1527, %v1526
      %v1533 = vpack.c.b16 %v1529, %v1528
      %v1554 = vunpack.c.l.b16 %v1498
      %v1555 = vunpack.c.l.b16 %v1499
      %v1556 = vunpack.c.l.b16 %v1500
      %v1557 = vunpack.c.l.b16 %v1501
      %v1558 = vunpack.c.l.b16 %v1502
      %v1559 = vunpack.c.l.b16 %v1503
      %v1560 = vunpack.c.l.b16 %v1504
      %v1561 = vunpack.c.l.b16 %v1505
      %v1562 = vunpack.c.l.b16 %v1506
      %v1563 = vunpack.c.l.b16 %v1507
      %v1564 = vunpack.c.l.b16 %v1508
      %v1565 = vunpack.c.l.b16 %v1509
      %v1566 = vunpack.c.l.b16 %v1510
      %v1567 = vunpack.c.l.b16 %v1511
      %v1568 = vunpack.c.l.b16 %v1512
      %v1569 = vunpack.c.l.b16 %v1513
      %v1570 = vpack.c.b16 %v1555, %v1554
      %v1571 = vpack.c.b16 %v1557, %v1556
      %v1572 = vpack.c.b16 %v1559, %v1558
      %v1573 = vpack.c.b16 %v1561, %v1560
      %v1574 = vpack.c.b16 %v1563, %v1562
      %v1575 = vpack.c.b16 %v1565, %v1564
      %v1576 = vpack.c.b16 %v1567, %v1566
      %v1577 = vpack.c.b16 %v1569, %v1568
      %1586 = vmatprep.subr.bf16.mxu0 0
      %1587 = vmatpush1.bf16.msra.mxu0 %v1570
      %1588 = vmatprep.subr.bf16.mxu0 0
      %1589 = vmatpush1.bf16.msra.mxu0 %v1571
      %1590 = vmatprep.subr.bf16.mxu0 0
      %1591 = vmatpush1.bf16.msra.mxu0 %v1572
      %1592 = vmatprep.subr.bf16.mxu0 0
      %1593 = vmatpush1.bf16.msra.mxu0 %v1573
      %1594 = vmatprep.subr.bf16.mxu0 0
      %1595 = vmatpush1.bf16.msra.mxu0 %v1574
      %1596 = vmatprep.subr.bf16.mxu0 0
      %1597 = vmatpush1.bf16.msra.mxu0 %v1575
      %1598 = vmatprep.subr.bf16.mxu0 0
      %1599 = vmatpush1.bf16.msra.mxu0 %v1576
      %1600 = vmatprep.subr.bf16.mxu0 0
      %1601 = vmatpush1.bf16.msra.mxu0 %v1577
      %1602 = vmatprep.subr.bf16.mxu0 0
      %1603 = vmatpush1.bf16.msra.mxu0 0
      %1604 = vmatprep.subr.bf16.mxu0 0
      %1605 = vmatpush1.bf16.msra.mxu0 0
      %1606 = vmatprep.subr.bf16.mxu0 0
      %1607 = vmatpush1.bf16.msra.mxu0 0
      %1608 = vmatprep.subr.bf16.mxu0 0
      %1609 = vmatpush1.bf16.msra.mxu0 0
      %1610 = vmatprep.subr.bf16.mxu0 0
      %1611 = vmatpush1.bf16.msra.mxu0 0
      %1612 = vmatprep.subr.bf16.mxu0 0
      %1613 = vmatpush1.bf16.msra.mxu0 0
      %1614 = vmatprep.subr.bf16.mxu0 0
      %1615 = vmatpush1.bf16.msra.mxu0 0
      %1616 = vmatprep.subr.bf16.mxu0 0
      %1617 = vmatpush1.bf16.msra.mxu0 0
      %1618 = vmatprep.mubr.bf16.mxu0 0
      %1619 = vmatmul.mubr.bf16.gmra.mrb[0].mxu0 %v1530
      %v1620 = vpop.f32.mrb[0].mxu0
      %v1621 = vadd.f32 0.0, %v1620
      %v1622 = vpop.f32.mrb[0].mxu0
      %v1623 = vpop.f32.mrb[0].mxu0
      %v1624 = vadd.f32 0.0, %v1623
      %v1625 = vpop.f32.mrb[0].mxu0
      %1626 = vmatprep.mubr.bf16.mxu0 0
      %1627 = vmatmul.mubr.bf16.gmra.mrb[0].mxu0 %v1531
      %v1628 = vpop.f32.mrb[0].mxu0
      %v1629 = vadd.f32 0.0, %v1628
      %v1630 = vpop.f32.mrb[0].mxu0
      %v1631 = vpop.f32.mrb[0].mxu0
      %v1632 = vadd.f32 0.0, %v1631
      %v1633 = vpop.f32.mrb[0].mxu0
      %1634 = vmatprep.mubr.bf16.mxu0 0
      %1635 = vmatmul.mubr.bf16.gmra.mrb[0].mxu0 %v1532
      %v1636 = vpop.f32.mrb[0].mxu0
      %v1637 = vadd.f32 0.0, %v1636
      %v1638 = vpop.f32.mrb[0].mxu0
      %v1639 = vpop.f32.mrb[0].mxu0
      %v1640 = vadd.f32 0.0, %v1639
      %v1641 = vpop.f32.mrb[0].mxu0
      %1642 = vmatprep.mubr.bf16.mxu0 0
      %1643 = vmatmul.mubr.bf16.gmra.mrb[0].mxu0 %v1533
      %v1644 = vpop.f32.mrb[0].mxu0
      %v1645 = vadd.f32 0.0, %v1644
      %v1646 = vpop.f32.mrb[0].mxu0
      %v1647 = vpop.f32.mrb[0].mxu0
      %v1648 = vadd.f32 0.0, %v1647
      %v1649 = vpop.f32.mrb[0].mxu0
      %1650 = vdwg.mxu0
      %v1651 = vadd.f32 %v1480, %v1621
      %v1652 = vadd.f32 %v1481, %v1624
      %v1653 = vadd.f32 %v1482, %v1629
      %v1654 = vadd.f32 %v1483, %v1632
      %v1655 = vadd.f32 %v1484, %v1637
      %v1656 = vadd.f32 %v1485, %v1640
      %v1657 = vadd.f32 %v1486, %v1645
      %v1658 = vadd.f32 %v1487, %v1648
      %s1659 = scalar_lea.vmem %s234, 80
      %v1660 = vld [vmem:[%s1659] sm:$0xf]
      %v1661 = vld [vmem:[%s1659 + $0x8] sm:$0xf]
      %v1662 = vld [vmem:[%s1659 + $0x10] sm:$0xf]
      %v1663 = vld [vmem:[%s1659 + $0x18] sm:$0xf]
      %v1664 = vld [vmem:[%s1659 + $0x20] sm:$0xf]
      %v1665 = vld [vmem:[%s1659 + $0x28] sm:$0xf]
      %v1666 = vld [vmem:[%s1659 + $0x30] sm:$0xf]
      %v1667 = vld [vmem:[%s1659 + $0x38] sm:$0xf]
      %s1668 = scalar_lea.vmem %s1, 448
      %v1669 = vld [vmem:[%s1668] sm:$0xf]
      %v1670 = vld [vmem:[%s1668 + $0x4] sm:$0xf]
      %v1671 = vld [vmem:[%s1668 + $0x8] sm:$0xf]
      %v1672 = vld [vmem:[%s1668 + $0xc] sm:$0xf]
      %v1673 = vld [vmem:[%s1668 + $0x10] sm:$0xf]
      %v1674 = vld [vmem:[%s1668 + $0x14] sm:$0xf]
      %v1675 = vld [vmem:[%s1668 + $0x18] sm:$0xf]
      %v1676 = vld [vmem:[%s1668 + $0x1c] sm:$0xf]
      %v1677 = vld [vmem:[%s1668 + $0x20] sm:$0xf]
      %v1678 = vld [vmem:[%s1668 + $0x24] sm:$0xf]
      %v1679 = vld [vmem:[%s1668 + $0x28] sm:$0xf]
      %v1680 = vld [vmem:[%s1668 + $0x2c] sm:$0xf]
      %v1681 = vld [vmem:[%s1668 + $0x30] sm:$0xf]
      %v1682 = vld [vmem:[%s1668 + $0x34] sm:$0xf]
      %v1683 = vld [vmem:[%s1668 + $0x38] sm:$0xf]
      %v1684 = vld [vmem:[%s1668 + $0x3c] sm:$0xf]
      %v1693 = vunpack.c.l.b16 %v1660
      %v1694 = vunpack.c.l.b16 %v1661
      %v1695 = vunpack.c.l.b16 %v1662
      %v1696 = vunpack.c.l.b16 %v1663
      %v1697 = vunpack.c.l.b16 %v1664
      %v1698 = vunpack.c.l.b16 %v1665
      %v1699 = vunpack.c.l.b16 %v1666
      %v1700 = vunpack.c.l.b16 %v1667
      %v1701 = vpack.c.b16 %v1694, %v1693
      %v1702 = vpack.c.b16 %v1696, %v1695
      %v1703 = vpack.c.b16 %v1698, %v1697
      %v1704 = vpack.c.b16 %v1700, %v1699
      %v1725 = vunpack.c.l.b16 %v1669
      %v1726 = vunpack.c.l.b16 %v1670
      %v1727 = vunpack.c.l.b16 %v1671
      %v1728 = vunpack.c.l.b16 %v1672
      %v1729 = vunpack.c.l.b16 %v1673
      %v1730 = vunpack.c.l.b16 %v1674
      %v1731 = vunpack.c.l.b16 %v1675
      %v1732 = vunpack.c.l.b16 %v1676
      %v1733 = vunpack.c.l.b16 %v1677
      %v1734 = vunpack.c.l.b16 %v1678
      %v1735 = vunpack.c.l.b16 %v1679
      %v1736 = vunpack.c.l.b16 %v1680
      %v1737 = vunpack.c.l.b16 %v1681
      %v1738 = vunpack.c.l.b16 %v1682
      %v1739 = vunpack.c.l.b16 %v1683
      %v1740 = vunpack.c.l.b16 %v1684
      %v1741 = vpack.c.b16 %v1726, %v1725
      %v1742 = vpack.c.b16 %v1728, %v1727
      %v1743 = vpack.c.b16 %v1730, %v1729
      %v1744 = vpack.c.b16 %v1732, %v1731
      %v1745 = vpack.c.b16 %v1734, %v1733
      %v1746 = vpack.c.b16 %v1736, %v1735
      %v1747 = vpack.c.b16 %v1738, %v1737
      %v1748 = vpack.c.b16 %v1740, %v1739
      %1757 = vmatprep.subr.bf16.mxu0 0
      %1758 = vmatpush1.bf16.msra.mxu0 %v1741
      %1759 = vmatprep.subr.bf16.mxu0 0
      %1760 = vmatpush1.bf16.msra.mxu0 %v1742
      %1761 = vmatprep.subr.bf16.mxu0 0
      %1762 = vmatpush1.bf16.msra.mxu0 %v1743
      %1763 = vmatprep.subr.bf16.mxu0 0
      %1764 = vmatpush1.bf16.msra.mxu0 %v1744
      %1765 = vmatprep.subr.bf16.mxu0 0
      %1766 = vmatpush1.bf16.msra.mxu0 %v1745
      %1767 = vmatprep.subr.bf16.mxu0 0
      %1768 = vmatpush1.bf16.msra.mxu0 %v1746
      %1769 = vmatprep.subr.bf16.mxu0 0
      %1770 = vmatpush1.bf16.msra.mxu0 %v1747
      %1771 = vmatprep.subr.bf16.mxu0 0
      %1772 = vmatpush1.bf16.msra.mxu0 %v1748
      %1773 = vmatprep.subr.bf16.mxu0 0
      %1774 = vmatpush1.bf16.msra.mxu0 0
      %1775 = vmatprep.subr.bf16.mxu0 0
      %1776 = vmatpush1.bf16.msra.mxu0 0
      %1777 = vmatprep.subr.bf16.mxu0 0
      %1778 = vmatpush1.bf16.msra.mxu0 0
      %1779 = vmatprep.subr.bf16.mxu0 0
      %1780 = vmatpush1.bf16.msra.mxu0 0
      %1781 = vmatprep.subr.bf16.mxu0 0
      %1782 = vmatpush1.bf16.msra.mxu0 0
      %1783 = vmatprep.subr.bf16.mxu0 0
      %1784 = vmatpush1.bf16.msra.mxu0 0
      %1785 = vmatprep.subr.bf16.mxu0 0
      %1786 = vmatpush1.bf16.msra.mxu0 0
      %1787 = vmatprep.subr.bf16.mxu0 0
      %1788 = vmatpush1.bf16.msra.mxu0 0
      %1789 = vmatprep.mubr.bf16.mxu0 0
      %1790 = vmatmul.mubr.bf16.gmra.mrb[0].mxu0 %v1701
      %v1791 = vpop.f32.mrb[0].mxu0
      %v1792 = vadd.f32 0.0, %v1791
      %v1793 = vpop.f32.mrb[0].mxu0
      %v1794 = vpop.f32.mrb[0].mxu0
      %v1795 = vadd.f32 0.0, %v1794
      %v1796 = vpop.f32.mrb[0].mxu0
      %1797 = vmatprep.mubr.bf16.mxu0 0
      %1798 = vmatmul.mubr.bf16.gmra.mrb[0].mxu0 %v1702
      %v1799 = vpop.f32.mrb[0].mxu0
      %v1800 = vadd.f32 0.0, %v1799
      %v1801 = vpop.f32.mrb[0].mxu0
      %v1802 = vpop.f32.mrb[0].mxu0
      %v1803 = vadd.f32 0.0, %v1802
      %v1804 = vpop.f32.mrb[0].mxu0
      %1805 = vmatprep.mubr.bf16.mxu0 0
      %1806 = vmatmul.mubr.bf16.gmra.mrb[0].mxu0 %v1703
      %v1807 = vpop.f32.mrb[0].mxu0
      %v1808 = vadd.f32 0.0, %v1807
      %v1809 = vpop.f32.mrb[0].mxu0
      %v1810 = vpop.f32.mrb[0].mxu0
      %v1811 = vadd.f32 0.0, %v1810
      %v1812 = vpop.f32.mrb[0].mxu0
      %1813 = vmatprep.mubr.bf16.mxu0 0
      %1814 = vmatmul.mubr.bf16.gmra.mrb[0].mxu0 %v1704
      %v1815 = vpop.f32.mrb[0].mxu0
      %v1816 = vadd.f32 0.0, %v1815
      %v1817 = vpop.f32.mrb[0].mxu0
      %v1818 = vpop.f32.mrb[0].mxu0
      %v1819 = vadd.f32 0.0, %v1818
      %v1820 = vpop.f32.mrb[0].mxu0
      %1821 = vdwg.mxu0
      %v1822 = vadd.f32 %v1651, %v1792
      %v1823 = vadd.f32 %v1652, %v1795
      %v1824 = vadd.f32 %v1653, %v1800
      %v1825 = vadd.f32 %v1654, %v1803
      %v1826 = vadd.f32 %v1655, %v1808
      %v1827 = vadd.f32 %v1656, %v1811
      %v1828 = vadd.f32 %v1657, %v1816
      %v1829 = vadd.f32 %v1658, %v1819
      %v1830 = vld [vmem:[%s1488] sm:$0xf]
      %v1831 = vld [vmem:[%s1488 + $0x4] sm:$0x1]
      %v1832 = vld [vmem:[%s1488 + $0x8] sm:$0xf]
      %v1833 = vld [vmem:[%s1488 + $0xc] sm:$0x1]
      %v1834 = vld [vmem:[%s1488 + $0x10] sm:$0xf]
      %v1835 = vld [vmem:[%s1488 + $0x14] sm:$0x1]
      %v1836 = vld [vmem:[%s1488 + $0x18] sm:$0xf]
      %v1837 = vld [vmem:[%s1488 + $0x1c] sm:$0x1]
      %v1838 = vld [vmem:[%s1488 + $0x20] sm:$0xf]
      %v1839 = vld [vmem:[%s1488 + $0x24] sm:$0x1]
      %v1840 = vld [vmem:[%s1488 + $0x28] sm:$0xf]
      %v1841 = vld [vmem:[%s1488 + $0x2c] sm:$0x1]
      %v1842 = vld [vmem:[%s1488 + $0x30] sm:$0xf]
      %v1843 = vld [vmem:[%s1488 + $0x34] sm:$0x1]
      %v1844 = vld [vmem:[%s1488 + $0x38] sm:$0xf]
      %v1845 = vld [vmem:[%s1488 + $0x3c] sm:$0x1]
      %v1847 = vshrl.u32 %v1830, 16
      %v1849 = vrot.slane %v1847, 4
      %v1850 = vshll.u32 %v1830, 16
      %v1852 = vrot.slane %v1850, 5
      %v1853 = vor.u32 %v1849, %v1852
      %v1854 = vrot.slane %v1853, 4
      %v1856 = vshll.u32 %v1831, 16
      %v1858 = vrot.slane %v1856, 5
      %v1859 = vsel %vm597, %v1854, %v1858
      %v1861 = vshrl.u32 %v1832, 16
      %v1863 = vrot.slane %v1861, 4
      %v1864 = vshll.u32 %v1832, 16
      %v1866 = vrot.slane %v1864, 5
      %v1867 = vor.u32 %v1863, %v1866
      %v1868 = vrot.slane %v1867, 4
      %v1870 = vshll.u32 %v1833, 16
      %v1872 = vrot.slane %v1870, 5
      %v1873 = vsel %vm597, %v1868, %v1872
      %v1875 = vshrl.u32 %v1834, 16
      %v1877 = vrot.slane %v1875, 4
      %v1878 = vshll.u32 %v1834, 16
      %v1880 = vrot.slane %v1878, 5
      %v1881 = vor.u32 %v1877, %v1880
      %v1882 = vrot.slane %v1881, 4
      %v1884 = vshll.u32 %v1835, 16
      %v1886 = vrot.slane %v1884, 5
      %v1887 = vsel %vm597, %v1882, %v1886
      %v1889 = vshrl.u32 %v1836, 16
      %v1891 = vrot.slane %v1889, 4
      %v1892 = vshll.u32 %v1836, 16
      %v1894 = vrot.slane %v1892, 5
      %v1895 = vor.u32 %v1891, %v1894
      %v1896 = vrot.slane %v1895, 4
      %v1898 = vshll.u32 %v1837, 16
      %v1900 = vrot.slane %v1898, 5
      %v1901 = vsel %vm597, %v1896, %v1900
      %v1903 = vshrl.u32 %v1838, 16
      %v1905 = vrot.slane %v1903, 4
      %v1906 = vshll.u32 %v1838, 16
      %v1908 = vrot.slane %v1906, 5
      %v1909 = vor.u32 %v1905, %v1908
      %v1910 = vrot.slane %v1909, 4
      %v1912 = vshll.u32 %v1839, 16
      %v1914 = vrot.slane %v1912, 5
      %v1915 = vsel %vm597, %v1910, %v1914
      %v1917 = vshrl.u32 %v1840, 16
      %v1919 = vrot.slane %v1917, 4
      %v1920 = vshll.u32 %v1840, 16
      %v1922 = vrot.slane %v1920, 5
      %v1923 = vor.u32 %v1919, %v1922
      %v1924 = vrot.slane %v1923, 4
      %v1926 = vshll.u32 %v1841, 16
      %v1928 = vrot.slane %v1926, 5
      %v1929 = vsel %vm597, %v1924, %v1928
      %v1931 = vshrl.u32 %v1842, 16
      %v1933 = vrot.slane %v1931, 4
      %v1934 = vshll.u32 %v1842, 16
      %v1936 = vrot.slane %v1934, 5
      %v1937 = vor.u32 %v1933, %v1936
      %v1938 = vrot.slane %v1937, 4
      %v1940 = vshll.u32 %v1843, 16
      %v1942 = vrot.slane %v1940, 5
      %v1943 = vsel %vm597, %v1938, %v1942
      %v1945 = vshrl.u32 %v1844, 16
      %v1947 = vrot.slane %v1945, 4
      %v1948 = vshll.u32 %v1844, 16
      %v1950 = vrot.slane %v1948, 5
      %v1951 = vor.u32 %v1947, %v1950
      %v1952 = vrot.slane %v1951, 4
      %v1954 = vshll.u32 %v1845, 16
      %v1956 = vrot.slane %v1954, 5
      %v1957 = vsel %vm597, %v1952, %v1956
      %s1958 = scalar_lea.vmem %s1, 512
      %v1959 = vld [vmem:[%s1958] sm:$0xf]
      %v1960 = vld [vmem:[%s1958 + $0x4] sm:$0xf]
      %v1961 = vld [vmem:[%s1958 + $0x8] sm:$0xf]
      %v1962 = vld [vmem:[%s1958 + $0xc] sm:$0xf]
      %v1963 = vld [vmem:[%s1958 + $0x10] sm:$0xf]
      %v1964 = vld [vmem:[%s1958 + $0x14] sm:$0xf]
      %v1965 = vld [vmem:[%s1958 + $0x18] sm:$0xf]
      %v1966 = vld [vmem:[%s1958 + $0x1c] sm:$0xf]
      %v1967 = vld [vmem:[%s1958 + $0x20] sm:$0xf]
      %v1968 = vld [vmem:[%s1958 + $0x24] sm:$0xf]
      %v1969 = vld [vmem:[%s1958 + $0x28] sm:$0xf]
      %v1970 = vld [vmem:[%s1958 + $0x2c] sm:$0xf]
      %v1971 = vld [vmem:[%s1958 + $0x30] sm:$0xf]
      %v1972 = vld [vmem:[%s1958 + $0x34] sm:$0xf]
      %v1973 = vld [vmem:[%s1958 + $0x38] sm:$0xf]
      %v1974 = vld [vmem:[%s1958 + $0x3c] sm:$0xf]
      %v1975 = vunpack.c.l.b16 %v1859
      %v1976 = vunpack.c.l.b16 %v1873
      %v1977 = vunpack.c.l.b16 %v1887
      %v1978 = vunpack.c.l.b16 %v1901
      %v1979 = vunpack.c.l.b16 %v1915
      %v1980 = vunpack.c.l.b16 %v1929
      %v1981 = vunpack.c.l.b16 %v1943
      %v1982 = vunpack.c.l.b16 %v1957
      %v1983 = vpack.c.b16 %v1976, %v1975
      %v1984 = vpack.c.b16 %v1978, %v1977
      %v1985 = vpack.c.b16 %v1980, %v1979
      %v1986 = vpack.c.b16 %v1982, %v1981
      %v2007 = vunpack.c.l.b16 %v1959
      %v2008 = vunpack.c.l.b16 %v1960
      %v2009 = vunpack.c.l.b16 %v1961
      %v2010 = vunpack.c.l.b16 %v1962
      %v2011 = vunpack.c.l.b16 %v1963
      %v2012 = vunpack.c.l.b16 %v1964
      %v2013 = vunpack.c.l.b16 %v1965
      %v2014 = vunpack.c.l.b16 %v1966
      %v2015 = vunpack.c.l.b16 %v1967
      %v2016 = vunpack.c.l.b16 %v1968
      %v2017 = vunpack.c.l.b16 %v1969
      %v2018 = vunpack.c.l.b16 %v1970
      %v2019 = vunpack.c.l.b16 %v1971
      %v2020 = vunpack.c.l.b16 %v1972
      %v2021 = vunpack.c.l.b16 %v1973
      %v2022 = vunpack.c.l.b16 %v1974
      %v2023 = vpack.c.b16 %v2008, %v2007
      %v2024 = vpack.c.b16 %v2010, %v2009
      %v2025 = vpack.c.b16 %v2012, %v2011
      %v2026 = vpack.c.b16 %v2014, %v2013
      %v2027 = vpack.c.b16 %v2016, %v2015
      %v2028 = vpack.c.b16 %v2018, %v2017
      %v2029 = vpack.c.b16 %v2020, %v2019
      %v2030 = vpack.c.b16 %v2022, %v2021
      %2039 = vmatprep.subr.bf16.mxu0 0
      %2040 = vmatpush1.bf16.msra.mxu0 %v2023
      %2041 = vmatprep.subr.bf16.mxu0 0
      %2042 = vmatpush1.bf16.msra.mxu0 %v2024
      %2043 = vmatprep.subr.bf16.mxu0 0
      %2044 = vmatpush1.bf16.msra.mxu0 %v2025
      %2045 = vmatprep.subr.bf16.mxu0 0
      %2046 = vmatpush1.bf16.msra.mxu0 %v2026
      %2047 = vmatprep.subr.bf16.mxu0 0
      %2048 = vmatpush1.bf16.msra.mxu0 %v2027
      %2049 = vmatprep.subr.bf16.mxu0 0
      %2050 = vmatpush1.bf16.msra.mxu0 %v2028
      %2051 = vmatprep.subr.bf16.mxu0 0
      %2052 = vmatpush1.bf16.msra.mxu0 %v2029
      %2053 = vmatprep.subr.bf16.mxu0 0
      %2054 = vmatpush1.bf16.msra.mxu0 %v2030
      %2055 = vmatprep.subr.bf16.mxu0 0
      %2056 = vmatpush1.bf16.msra.mxu0 0
      %2057 = vmatprep.subr.bf16.mxu0 0
      %2058 = vmatpush1.bf16.msra.mxu0 0
      %2059 = vmatprep.subr.bf16.mxu0 0
      %2060 = vmatpush1.bf16.msra.mxu0 0
      %2061 = vmatprep.subr.bf16.mxu0 0
      %2062 = vmatpush1.bf16.msra.mxu0 0
      %2063 = vmatprep.subr.bf16.mxu0 0
      %2064 = vmatpush1.bf16.msra.mxu0 0
      %2065 = vmatprep.subr.bf16.mxu0 0
      %2066 = vmatpush1.bf16.msra.mxu0 0
      %2067 = vmatprep.subr.bf16.mxu0 0
      %2068 = vmatpush1.bf16.msra.mxu0 0
      %2069 = vmatprep.subr.bf16.mxu0 0
      %2070 = vmatpush1.bf16.msra.mxu0 0
      %2071 = vmatprep.mubr.bf16.mxu0 0
      %2072 = vmatmul.mubr.bf16.gmra.mrb[0].mxu0 %v1983
      %v2073 = vpop.f32.mrb[0].mxu0
      %v2074 = vadd.f32 0.0, %v2073
      %v2075 = vpop.f32.mrb[0].mxu0
      %v2076 = vpop.f32.mrb[0].mxu0
      %v2077 = vadd.f32 0.0, %v2076
      %v2078 = vpop.f32.mrb[0].mxu0
      %2079 = vmatprep.mubr.bf16.mxu0 0
      %2080 = vmatmul.mubr.bf16.gmra.mrb[0].mxu0 %v1984
      %v2081 = vpop.f32.mrb[0].mxu0
      %v2082 = vadd.f32 0.0, %v2081
      %v2083 = vpop.f32.mrb[0].mxu0
      %v2084 = vpop.f32.mrb[0].mxu0
      %v2085 = vadd.f32 0.0, %v2084
      %v2086 = vpop.f32.mrb[0].mxu0
      %2087 = vmatprep.mubr.bf16.mxu0 0
      %2088 = vmatmul.mubr.bf16.gmra.mrb[0].mxu0 %v1985
      %v2089 = vpop.f32.mrb[0].mxu0
      %v2090 = vadd.f32 0.0, %v2089
      %v2091 = vpop.f32.mrb[0].mxu0
      %v2092 = vpop.f32.mrb[0].mxu0
      %v2093 = vadd.f32 0.0, %v2092
      %v2094 = vpop.f32.mrb[0].mxu0
      %2095 = vmatprep.mubr.bf16.mxu0 0
      %2096 = vmatmul.mubr.bf16.gmra.mrb[0].mxu0 %v1986
      %v2097 = vpop.f32.mrb[0].mxu0
      %v2098 = vadd.f32 0.0, %v2097
      %v2099 = vpop.f32.mrb[0].mxu0
      %v2100 = vpop.f32.mrb[0].mxu0
      %v2101 = vadd.f32 0.0, %v2100
      %v2102 = vpop.f32.mrb[0].mxu0
      %2103 = vdwg.mxu0
      %v2104 = vadd.f32 %v1822, %v2074
      %v2105 = vadd.f32 %v1823, %v2077
      %v2106 = vadd.f32 %v1824, %v2082
      %v2107 = vadd.f32 %v1825, %v2085
      %v2108 = vadd.f32 %v1826, %v2090
      %v2109 = vadd.f32 %v1827, %v2093
      %v2110 = vadd.f32 %v1828, %v2098
      %v2111 = vadd.f32 %v1829, %v2101
      %v2112 = vadd.f32 %v2104, %v2105
      %v2113 = vadd.f32 %v2112, %v2106
      %v2114 = vadd.f32 %v2113, %v2107
      %v2115 = vadd.f32 %v2114, %v2108
      %v2116 = vadd.f32 %v2115, %v2109
      %v2117 = vadd.f32 %v2116, %v2110
      %v2118 = vadd.f32 %v2117, %v2111
      %v2119 = vrot.slane %v2118, 4
      %v2120 = vadd.f32 %v2118, %v2119
      %v2121 = vrot.slane %v2120, 2
      %v2122 = vadd.f32 %v2120, %v2121
      %v2123 = vrot.slane %v2122, 1
      %v2124 = vadd.f32 %v2122, %v2123
      %2125 = vst [vmem:[%s247] sm:$0x1] %v2124
      %v2126 = vmul.f32 %v2104, %v2104
      %v2127 = vmul.f32 %v2105, %v2105
      %v2128 = vmul.f32 %v2106, %v2106
      %v2129 = vmul.f32 %v2107, %v2107
      %v2130 = vmul.f32 %v2108, %v2108
      %v2131 = vmul.f32 %v2109, %v2109
      %v2132 = vmul.f32 %v2110, %v2110
      %v2133 = vmul.f32 %v2111, %v2111
      %v2134 = vadd.f32 %v2126, %v2127
      %v2135 = vadd.f32 %v2134, %v2128
      %v2136 = vadd.f32 %v2135, %v2129
      %v2137 = vadd.f32 %v2136, %v2130
      %v2138 = vadd.f32 %v2137, %v2131
      %v2139 = vadd.f32 %v2138, %v2132
      %v2140 = vadd.f32 %v2139, %v2133
      %v2141 = vrot.slane %v2140, 4
      %v2142 = vadd.f32 %v2140, %v2141
      %v2143 = vrot.slane %v2142, 2
      %v2144 = vadd.f32 %v2142, %v2143
      %v2145 = vrot.slane %v2144, 1
      %v2146 = vadd.f32 %v2144, %v2145
      %2147 = vst [vmem:[%s252] sm:$0x1] %v2146
      %v2148 = vpack.c.bf16 %v2105, %v2104
      %v2149 = vpack.c.bf16 %v2107, %v2106
      %v2150 = vpack.c.bf16 %v2109, %v2108
      %v2151 = vpack.c.bf16 %v2111, %v2110
      %v2156 = vunpack.c.l.b16 %v2148
      %v2157 = vunpack.c.h.b16 %v2148
      %v2158 = vunpack.c.l.b16 %v2149
      %v2159 = vunpack.c.h.b16 %v2149
      %v2160 = vunpack.c.l.b16 %v2150
      %v2161 = vunpack.c.h.b16 %v2150
      %v2162 = vunpack.c.l.b16 %v2151
      %v2163 = vunpack.c.h.b16 %v2151
      %v2164 = vpack.c.b16 %v2156, %v2156
      %v2165 = vpack.c.b16 %v2157, %v2157
      %v2166 = vpack.c.b16 %v2158, %v2158
      %v2167 = vpack.c.b16 %v2159, %v2159
      %v2168 = vpack.c.b16 %v2160, %v2160
      %v2169 = vpack.c.b16 %v2161, %v2161
      %v2170 = vpack.c.b16 %v2162, %v2162
      %v2171 = vpack.c.b16 %v2163, %v2163
      %2180 = vst [vmem:[%s242] sm:$0xf] %v2164
      %2181 = vst [vmem:[%s242 + $0x4] sm:$0xf] %v2165
      %2182 = vst [vmem:[%s242 + $0x8] sm:$0xf] %v2166
      %2183 = vst [vmem:[%s242 + $0xc] sm:$0xf] %v2167
      %2184 = vst [vmem:[%s242 + $0x10] sm:$0xf] %v2168
      %2185 = vst [vmem:[%s242 + $0x14] sm:$0xf] %v2169
      %2186 = vst [vmem:[%s242 + $0x18] sm:$0xf] %v2170
      %2187 = vst [vmem:[%s242 + $0x1c] sm:$0xf] %v2171
      %s2188 = sadd.s32 %s20, %s21
      %p2189 = scmp.lt.s32.totalorder %s2188, 1
      %s2190 = scalar_select %p2189, %s2188, 1
      %s2191 = smul.addr %s2190, 8
      %s2192 = smul.addr %s2191, 4
      %s2193 = scalar_lea.vmem %s2, %s2192
      %s2194 = sadd.s32 %s20, %s21
      %p2195 = scmp.lt.s32.totalorder %s2194, 1
      %s2196 = scalar_select %p2195, %s2194, 1
      %s2197 = scalar_lea.vmem %s3, %s2196
      %s2198 = sadd.s32 %s20, %s21
      %p2199 = scmp.lt.s32.totalorder %s2198, 1
      %s2200 = scalar_select %p2199, %s2198, 1
      %s2201 = scalar_lea.vmem %s4, %s2200
      // Predicated region
      $region29: #{bottleneck_forward.6} parent=27 // pred_check
        %p2202 = pneg %p97
      $region30: #{bottleneck_forward.6} parent=27 // pred_check_branch
        %2204 = sbr.rel (%p2202) target = $region32
      $region31: #{bottleneck_forward.6} parent=27 // pred_region
        %s2205 = sadd.s32 %s20, %s21
      $region32: #{bottleneck_forward.6} parent=27 // pred_fallthru
        _
      // Predicated region
      $region33: #{bottleneck_forward.6} parent=27 // pred_check
        %p2206 = pneg %p125
      $region34: #{bottleneck_forward.6} parent=27 // pred_check_branch
        %2208 = sbr.rel (%p2206) target = $region36
      $region35: #{bottleneck_forward.6} parent=27 // pred_region
        %s2209 = sadd.s32 %s20, %s21
      $region36: #{bottleneck_forward.6} parent=27 // pred_fallthru
        _
      // Predicated region
      $region37: #{bottleneck_forward.6} parent=27 // pred_check
        %p2210 = pneg %p153
      $region38: #{bottleneck_forward.6} parent=27 // pred_check_branch
        %2212 = sbr.rel (%p2210) target = $region40
      $region39: #{bottleneck_forward.6} parent=27 // pred_region
        %s2213 = sadd.s32 %s20, %s21
      $region40: #{bottleneck_forward.6} parent=27 // pred_fallthru
        _
    $region28: #{bottleneck_forward.6} parent=5 // pred_fallthru
      _
    %p2214 = scmp.le.s32.totalorder 2, %s11
    // Predicated region
    $region41: #{bottleneck_forward.6} parent=5 // pred_check
      %p2215 = pneg %p2214
    $region42: #{bottleneck_forward.6} parent=5 // pred_check_branch
      %2217 = sbr.rel (%p2215) target = $region44
    $region43: #{bottleneck_forward.6} parent=5 // pred_region
      %s2218 = ssub.s32 %s11, 2
      // Predicated region
      $region45: #{bottleneck_forward.6} parent=43 // pred_check
        %p2219 = pneg %p103
      $region46: #{bottleneck_forward.6} parent=43 // pred_check_branch
        %2221 = sbr.rel (%p2219) target = $region48
      $region47: #{bottleneck_forward.6} parent=43 // pred_region
        %s2222 = sadd.s32 %s22, %s23
        %p2223 = scmp.lt.s32.totalorder %s2222, 1
        %s2224 = scalar_select %p2223, %s2222, 1
        %s2225 = smul.addr %s2224, 8
        %s2226 = smul.addr %s2225, 4
        %s2227 = scalar_lea.vmem %s2, %s2226
      $region48: #{bottleneck_forward.6} parent=43 // pred_fallthru
        _
      // Predicated region
      $region49: #{bottleneck_forward.6} parent=43 // pred_check
        %p2228 = pneg %p131
      $region50: #{bottleneck_forward.6} parent=43 // pred_check_branch
        %2230 = sbr.rel (%p2228) target = $region52
      $region51: #{bottleneck_forward.6} parent=43 // pred_region
        %s2231 = sadd.s32 %s22, %s23
        %p2232 = scmp.lt.s32.totalorder %s2231, 1
        %s2233 = scalar_select %p2232, %s2231, 1
        %s2234 = scalar_lea.vmem %s3, %s2233
      $region52: #{bottleneck_forward.6} parent=43 // pred_fallthru
        _
      // Predicated region
      $region53: #{bottleneck_forward.6} parent=43 // pred_check
        %p2235 = pneg %p159
      $region54: #{bottleneck_forward.6} parent=43 // pred_check_branch
        %2237 = sbr.rel (%p2235) target = $region56
      $region55: #{bottleneck_forward.6} parent=43 // pred_region
        %s2238 = sadd.s32 %s22, %s23
        %p2239 = scmp.lt.s32.totalorder %s2238, 1
        %s2240 = scalar_select %p2239, %s2238, 1
        %s2241 = scalar_lea.vmem %s4, %s2240
      $region56: #{bottleneck_forward.6} parent=43 // pred_fallthru
        _
    $region44: #{bottleneck_forward.6} parent=5 // pred_fallthru
      _
  $region6: #{bottleneck_forward.6} parent=0 // loop_footer
    %s15 = sadd.s32 1, %s11
  $region7: #{bottleneck_forward.6} parent=0 // loop_footer_branch
    %10 = sbr.rel target = $region3
  $region8: #{bottleneck_forward.6} parent=0 // loop_exit
    _

// kernel: bottleneck_forward.9
$region0: #{bottleneck_forward.9}
  #allocation0 [shape = 'u32[]', space=smem, size = 0x4, offset = 0x4, fixed_abs, tag = 'smem constant byte address 0x4 - core index']
  #allocation1 [shape = 'u32[144,128]{1,0:T(1,128)}', space=vmem, size = 0x12000, scoped, tag = 'internal scratch']
  %s0 = inlined_call_operand.vmem [shape: bf16[128,128], index: 0, kind: input, shape index: {}]
  %s1 = inlined_call_operand.vmem [shape: f32[1,128], index: 1, kind: input, shape index: {}]
  %s2 = inlined_call_operand.vmem [shape: f32[1,128], index: 2, kind: input, shape index: {}]
  %s3 = inlined_call_operand.vmem [shape: bf16[128,128], index: 3, kind: input, shape index: {}]
  %s4 = inlined_call_operand.vmem [shape: f32[1,128], index: 4, kind: input, shape index: {}]
  %s5 = inlined_call_operand.vmem [shape: f32[1,128], index: 5, kind: input, shape index: {}]
  %s6 = inlined_call_operand.vmem [shape: f32[128,128], index: 6, kind: output, shape index: {}]
  %s7 = sld [smem:[#allocation0]]
  $region34: #{bottleneck_forward.9} parent=0
    _
  %s9 = ssub.s32 1, %s7
  %s10 = scalar_select 0, %s9, %s7
  // Predicated region
  $region2: #{bottleneck_forward.9} parent=0 // pred_check
    _
  $region3: #{bottleneck_forward.9} parent=0 // pred_check_branch
    %12 = sbr.rel (0) target = $region5
  $region4: #{bottleneck_forward.9} parent=0 // pred_region
    _
  $region5: #{bottleneck_forward.9} parent=0 // pred_fallthru
    _
  // Predicated region
  $region6: #{bottleneck_forward.9} parent=0 // pred_check
    _
  $region7: #{bottleneck_forward.9} parent=0 // pred_check_branch
    %14 = sbr.rel (0) target = $region9
  $region8: #{bottleneck_forward.9} parent=0 // pred_region
    _
  $region9: #{bottleneck_forward.9} parent=0 // pred_fallthru
    _
  // Predicated region
  $region10: #{bottleneck_forward.9} parent=0 // pred_check
    _
  $region11: #{bottleneck_forward.9} parent=0 // pred_check_branch
    %16 = sbr.rel (0) target = $region13
  $region12: #{bottleneck_forward.9} parent=0 // pred_region
    _
  $region13: #{bottleneck_forward.9} parent=0 // pred_fallthru
    _
  // Predicated region
  $region14: #{bottleneck_forward.9} parent=0 // pred_check
    _
  $region15: #{bottleneck_forward.9} parent=0 // pred_check_branch
    %18 = sbr.rel (0) target = $region17
  $region16: #{bottleneck_forward.9} parent=0 // pred_region
    _
  $region17: #{bottleneck_forward.9} parent=0 // pred_fallthru
    _
  // Predicated region
  $region18: #{bottleneck_forward.9} parent=0 // pred_check
    _
  $region19: #{bottleneck_forward.9} parent=0 // pred_check_branch
    %20 = sbr.rel (0) target = $region21
  $region20: #{bottleneck_forward.9} parent=0 // pred_region
    _
  $region21: #{bottleneck_forward.9} parent=0 // pred_fallthru
    _
  // Predicated region
  $region22: #{bottleneck_forward.9} parent=0 // pred_check
    _
  $region23: #{bottleneck_forward.9} parent=0 // pred_check_branch
    %22 = sbr.rel (0) target = $region25
  $region24: #{bottleneck_forward.9} parent=0 // pred_region
    _
  $region25: #{bottleneck_forward.9} parent=0 // pred_fallthru
    _
  %v23 = vld [vmem:[%s3] sm:$0xf]
  %v24 = vld [vmem:[%s3 + $0x4] sm:$0xf]
  %v25 = vld [vmem:[%s3 + $0x8] sm:$0xf]
  %v26 = vld [vmem:[%s3 + $0xc] sm:$0xf]
  %v27 = vld [vmem:[%s3 + $0x10] sm:$0xf]
  %v28 = vld [vmem:[%s3 + $0x14] sm:$0xf]
  %v29 = vld [vmem:[%s3 + $0x18] sm:$0xf]
  %v30 = vld [vmem:[%s3 + $0x1c] sm:$0xf]
  %v31 = vld [vmem:[%s3 + $0x20] sm:$0xf]
  %v32 = vld [vmem:[%s3 + $0x24] sm:$0xf]
  %v33 = vld [vmem:[%s3 + $0x28] sm:$0xf]
  %v34 = vld [vmem:[%s3 + $0x2c] sm:$0xf]
  %v35 = vld [vmem:[%s3 + $0x30] sm:$0xf]
  %v36 = vld [vmem:[%s3 + $0x34] sm:$0xf]
  %v37 = vld [vmem:[%s3 + $0x38] sm:$0xf]
  %v38 = vld [vmem:[%s3 + $0x3c] sm:$0xf]
  %v39 = vunpack.c.l.bf16 %v23
  %v40 = vunpack.c.l.bf16 %v24
  %v41 = vunpack.c.l.bf16 %v25
  %v42 = vunpack.c.l.bf16 %v26
  %v43 = vunpack.c.l.bf16 %v27
  %v44 = vunpack.c.l.bf16 %v28
  %v45 = vunpack.c.l.bf16 %v29
  %v46 = vunpack.c.l.bf16 %v30
  %v47 = vunpack.c.l.bf16 %v31
  %v48 = vunpack.c.l.bf16 %v32
  %v49 = vunpack.c.l.bf16 %v33
  %v50 = vunpack.c.l.bf16 %v34
  %v51 = vunpack.c.l.bf16 %v35
  %v52 = vunpack.c.l.bf16 %v36
  %v53 = vunpack.c.l.bf16 %v37
  %v54 = vunpack.c.l.bf16 %v38
  %v55 = vld [vmem:[%s4] sm:$0x1]
  %v57 = vlaneseq
  %v58 = vshrl.u32 %v57, 7
  %v59 = vsub.s32 0, %v58
  %v60 = vrot.slane %v55, %v59
  %v62 = vmul.f32 %v39, %v60
  %v63 = vmul.f32 %v40, %v60
  %v64 = vmul.f32 %v41, %v60
  %v65 = vmul.f32 %v42, %v60
  %v66 = vmul.f32 %v43, %v60
  %v67 = vmul.f32 %v44, %v60
  %v68 = vmul.f32 %v45, %v60
  %v69 = vmul.f32 %v46, %v60
  %v70 = vmul.f32 %v47, %v60
  %v71 = vmul.f32 %v48, %v60
  %v72 = vmul.f32 %v49, %v60
  %v73 = vmul.f32 %v50, %v60
  %v74 = vmul.f32 %v51, %v60
  %v75 = vmul.f32 %v52, %v60
  %v76 = vmul.f32 %v53, %v60
  %v77 = vmul.f32 %v54, %v60
  %v78 = vld [vmem:[%s5] sm:$0x1]
  %v80 = vlaneseq
  %v81 = vshrl.u32 %v80, 7
  %v82 = vsub.s32 0, %v81
  %v83 = vrot.slane %v78, %v82
  %v85 = vadd.f32 %v62, %v83
  %v86 = vadd.f32 %v63, %v83
  %v87 = vadd.f32 %v64, %v83
  %v88 = vadd.f32 %v65, %v83
  %v89 = vadd.f32 %v66, %v83
  %v90 = vadd.f32 %v67, %v83
  %v91 = vadd.f32 %v68, %v83
  %v92 = vadd.f32 %v69, %v83
  %v93 = vadd.f32 %v70, %v83
  %v94 = vadd.f32 %v71, %v83
  %v95 = vadd.f32 %v72, %v83
  %v96 = vadd.f32 %v73, %v83
  %v97 = vadd.f32 %v74, %v83
  %v98 = vadd.f32 %v75, %v83
  %v99 = vadd.f32 %v76, %v83
  %v100 = vadd.f32 %v77, %v83
  %v101 = vld [vmem:[%s0] sm:$0xf]
  %v102 = vld [vmem:[%s0 + $0x4] sm:$0xf]
  %v103 = vld [vmem:[%s0 + $0x8] sm:$0xf]
  %v104 = vld [vmem:[%s0 + $0xc] sm:$0xf]
  %v105 = vld [vmem:[%s0 + $0x10] sm:$0xf]
  %v106 = vld [vmem:[%s0 + $0x14] sm:$0xf]
  %v107 = vld [vmem:[%s0 + $0x18] sm:$0xf]
  %v108 = vld [vmem:[%s0 + $0x1c] sm:$0xf]
  %v109 = vld [vmem:[%s0 + $0x20] sm:$0xf]
  %v110 = vld [vmem:[%s0 + $0x24] sm:$0xf]
  %v111 = vld [vmem:[%s0 + $0x28] sm:$0xf]
  %v112 = vld [vmem:[%s0 + $0x2c] sm:$0xf]
  %v113 = vld [vmem:[%s0 + $0x30] sm:$0xf]
  %v114 = vld [vmem:[%s0 + $0x34] sm:$0xf]
  %v115 = vld [vmem:[%s0 + $0x38] sm:$0xf]
  %v116 = vld [vmem:[%s0 + $0x3c] sm:$0xf]
  %v117 = vunpack.c.l.bf16 %v101
  %v118 = vunpack.c.l.bf16 %v102
  %v119 = vunpack.c.l.bf16 %v103
  %v120 = vunpack.c.l.bf16 %v104
  %v121 = vunpack.c.l.bf16 %v105
  %v122 = vunpack.c.l.bf16 %v106
  %v123 = vunpack.c.l.bf16 %v107
  %v124 = vunpack.c.l.bf16 %v108
  %v125 = vunpack.c.l.bf16 %v109
  %v126 = vunpack.c.l.bf16 %v110
  %v127 = vunpack.c.l.bf16 %v111
  %v128 = vunpack.c.l.bf16 %v112
  %v129 = vunpack.c.l.bf16 %v113
  %v130 = vunpack.c.l.bf16 %v114
  %v131 = vunpack.c.l.bf16 %v115
  %v132 = vunpack.c.l.bf16 %v116
  %v133 = vld [vmem:[%s1] sm:$0x1]
  %v135 = vlaneseq
  %v136 = vshrl.u32 %v135, 7
  %v137 = vsub.s32 0, %v136
  %v138 = vrot.slane %v133, %v137
  %v140 = vmul.f32 %v117, %v138
  %v141 = vmul.f32 %v118, %v138
  %v142 = vmul.f32 %v119, %v138
  %v143 = vmul.f32 %v120, %v138
  %v144 = vmul.f32 %v121, %v138
  %v145 = vmul.f32 %v122, %v138
  %v146 = vmul.f32 %v123, %v138
  %v147 = vmul.f32 %v124, %v138
  %v148 = vmul.f32 %v125, %v138
  %v149 = vmul.f32 %v126, %v138
  %v150 = vmul.f32 %v127, %v138
  %v151 = vmul.f32 %v128, %v138
  %v152 = vmul.f32 %v129, %v138
  %v153 = vmul.f32 %v130, %v138
  %v154 = vmul.f32 %v131, %v138
  %v155 = vmul.f32 %v132, %v138
  %v156 = vld [vmem:[%s2] sm:$0x1]
  %v158 = vlaneseq
  %v159 = vshrl.u32 %v158, 7
  %v160 = vsub.s32 0, %v159
  %v161 = vrot.slane %v156, %v160
  %v163 = vadd.f32 %v140, %v161
  %v164 = vadd.f32 %v141, %v161
  %v165 = vadd.f32 %v142, %v161
  %v166 = vadd.f32 %v143, %v161
  %v167 = vadd.f32 %v144, %v161
  %v168 = vadd.f32 %v145, %v161
  %v169 = vadd.f32 %v146, %v161
  %v170 = vadd.f32 %v147, %v161
  %v171 = vadd.f32 %v148, %v161
  %v172 = vadd.f32 %v149, %v161
  %v173 = vadd.f32 %v150, %v161
  %v174 = vadd.f32 %v151, %v161
  %v175 = vadd.f32 %v152, %v161
  %v176 = vadd.f32 %v153, %v161
  %v177 = vadd.f32 %v154, %v161
  %v178 = vadd.f32 %v155, %v161
  %v179 = vadd.f32 %v163, %v85
  %v180 = vadd.f32 %v164, %v86
  %v181 = vadd.f32 %v165, %v87
  %v182 = vadd.f32 %v166, %v88
  %v183 = vadd.f32 %v167, %v89
  %v184 = vadd.f32 %v168, %v90
  %v185 = vadd.f32 %v169, %v91
  %v186 = vadd.f32 %v170, %v92
  %v187 = vadd.f32 %v171, %v93
  %v188 = vadd.f32 %v172, %v94
  %v189 = vadd.f32 %v173, %v95
  %v190 = vadd.f32 %v174, %v96
  %v191 = vadd.f32 %v175, %v97
  %v192 = vadd.f32 %v176, %v98
  %v193 = vadd.f32 %v177, %v99
  %v194 = vadd.f32 %v178, %v100
  %v195 = vmax.f32 %v179, 0.0
  %v196 = vmax.f32 %v180, 0.0
  %v197 = vmax.f32 %v181, 0.0
  %v198 = vmax.f32 %v182, 0.0
  %v199 = vmax.f32 %v183, 0.0
  %v200 = vmax.f32 %v184, 0.0
  %v201 = vmax.f32 %v185, 0.0
  %v202 = vmax.f32 %v186, 0.0
  %v203 = vmax.f32 %v187, 0.0
  %v204 = vmax.f32 %v188, 0.0
  %v205 = vmax.f32 %v189, 0.0
  %v206 = vmax.f32 %v190, 0.0
  %v207 = vmax.f32 %v191, 0.0
  %v208 = vmax.f32 %v192, 0.0
  %v209 = vmax.f32 %v193, 0.0
  %v210 = vmax.f32 %v194, 0.0
  %211 = vst [vmem:[%s6] sm:$0xff] %v195
  %212 = vst [vmem:[%s6 + $0x8] sm:$0xff] %v196
  %213 = vst [vmem:[%s6 + $0x10] sm:$0xff] %v197
  %214 = vst [vmem:[%s6 + $0x18] sm:$0xff] %v198
  %215 = vst [vmem:[%s6 + $0x20] sm:$0xff] %v199
  %216 = vst [vmem:[%s6 + $0x28] sm:$0xff] %v200
  %217 = vst [vmem:[%s6 + $0x30] sm:$0xff] %v201
  %218 = vst [vmem:[%s6 + $0x38] sm:$0xff] %v202
  %219 = vst [vmem:[%s6 + $0x40] sm:$0xff] %v203
  %220 = vst [vmem:[%s6 + $0x48] sm:$0xff] %v204
  %221 = vst [vmem:[%s6 + $0x50] sm:$0xff] %v205
  %222 = vst [vmem:[%s6 + $0x58] sm:$0xff] %v206
  %223 = vst [vmem:[%s6 + $0x60] sm:$0xff] %v207
  %224 = vst [vmem:[%s6 + $0x68] sm:$0xff] %v208
  %225 = vst [vmem:[%s6 + $0x70] sm:$0xff] %v209
  %226 = vst [vmem:[%s6 + $0x78] sm:$0xff] %v210
  // Predicated region
  $region26: #{bottleneck_forward.9} parent=0 // pred_check
    _
  $region27: #{bottleneck_forward.9} parent=0 // pred_check_branch
    %228 = sbr.rel (0) target = $region29
  $region28: #{bottleneck_forward.9} parent=0 // pred_region
    _
  $region29: #{bottleneck_forward.9} parent=0 // pred_fallthru
    _
  // Predicated region
  $region30: #{bottleneck_forward.9} parent=0 // pred_check
    _
  $region31: #{bottleneck_forward.9} parent=0 // pred_check_branch
    %230 = sbr.rel (0) target = $region33
  $region32: #{bottleneck_forward.9} parent=0 // pred_region
    _
  $region33: #{bottleneck_forward.9} parent=0 // pred_fallthru
    _

// kernel: bottleneck_forward.8
$region0: #{bottleneck_forward.8}
  #allocation0 [shape = 'u32[]', space=smem, size = 0x4, offset = 0x4, fixed_abs, tag = 'smem constant byte address 0x4 - core index']
  #allocation1 [shape = 'u32[144,128]{1,0:T(1,128)}', space=vmem, size = 0x12000, scoped, tag = 'internal scratch']
  %s0 = inlined_call_operand.vmem [shape: bf16[128,128], index: 0, kind: input, shape index: {}]
  %s1 = inlined_call_operand.vmem [shape: bf16[128,128], index: 1, kind: input, shape index: {}]
  %s2 = inlined_call_operand.vmem [shape: bf16[128,128], index: 2, kind: output, shape index: {0}]
  %s3 = inlined_call_operand.vmem [shape: f32[1,1,128], index: 3, kind: output, shape index: {1}]
  %s4 = inlined_call_operand.vmem [shape: f32[1,1,128], index: 4, kind: output, shape index: {2}]
  %5 = xla_tuple %s2, %s3, %s4
  %s6 = sld [smem:[#allocation0]]
  $region34: #{bottleneck_forward.8} parent=0
    _
  %s8 = ssub.s32 1, %s6
  %s9 = scalar_select 0, %s8, %s6
  // Predicated region
  $region2: #{bottleneck_forward.8} parent=0 // pred_check
    _
  $region3: #{bottleneck_forward.8} parent=0 // pred_check_branch
    %11 = sbr.rel (0) target = $region5
  $region4: #{bottleneck_forward.8} parent=0 // pred_region
    _
  $region5: #{bottleneck_forward.8} parent=0 // pred_fallthru
    _
  // Predicated region
  $region6: #{bottleneck_forward.8} parent=0 // pred_check
    _
  $region7: #{bottleneck_forward.8} parent=0 // pred_check_branch
    %13 = sbr.rel (0) target = $region9
  $region8: #{bottleneck_forward.8} parent=0 // pred_region
    _
  $region9: #{bottleneck_forward.8} parent=0 // pred_fallthru
    _
  %v15 = vld [vmem:[%s0] sm:$0xf]
  %v16 = vld [vmem:[%s0 + $0x4] sm:$0xf]
  %v17 = vld [vmem:[%s0 + $0x8] sm:$0xf]
  %v18 = vld [vmem:[%s0 + $0xc] sm:$0xf]
  %v19 = vld [vmem:[%s0 + $0x10] sm:$0xf]
  %v20 = vld [vmem:[%s0 + $0x14] sm:$0xf]
  %v21 = vld [vmem:[%s0 + $0x18] sm:$0xf]
  %v22 = vld [vmem:[%s0 + $0x1c] sm:$0xf]
  %v23 = vld [vmem:[%s0 + $0x20] sm:$0xf]
  %v24 = vld [vmem:[%s0 + $0x24] sm:$0xf]
  %v25 = vld [vmem:[%s0 + $0x28] sm:$0xf]
  %v26 = vld [vmem:[%s0 + $0x2c] sm:$0xf]
  %v27 = vld [vmem:[%s0 + $0x30] sm:$0xf]
  %v28 = vld [vmem:[%s0 + $0x34] sm:$0xf]
  %v29 = vld [vmem:[%s0 + $0x38] sm:$0xf]
  %v30 = vld [vmem:[%s0 + $0x3c] sm:$0xf]
  %v31 = vld [vmem:[%s1] sm:$0xf]
  %v32 = vld [vmem:[%s1 + $0x4] sm:$0xf]
  %v33 = vld [vmem:[%s1 + $0x8] sm:$0xf]
  %v34 = vld [vmem:[%s1 + $0xc] sm:$0xf]
  %v35 = vld [vmem:[%s1 + $0x10] sm:$0xf]
  %v36 = vld [vmem:[%s1 + $0x14] sm:$0xf]
  %v37 = vld [vmem:[%s1 + $0x18] sm:$0xf]
  %v38 = vld [vmem:[%s1 + $0x1c] sm:$0xf]
  %v39 = vld [vmem:[%s1 + $0x20] sm:$0xf]
  %v40 = vld [vmem:[%s1 + $0x24] sm:$0xf]
  %v41 = vld [vmem:[%s1 + $0x28] sm:$0xf]
  %v42 = vld [vmem:[%s1 + $0x2c] sm:$0xf]
  %v43 = vld [vmem:[%s1 + $0x30] sm:$0xf]
  %v44 = vld [vmem:[%s1 + $0x34] sm:$0xf]
  %v45 = vld [vmem:[%s1 + $0x38] sm:$0xf]
  %v46 = vld [vmem:[%s1 + $0x3c] sm:$0xf]
  %v63 = vunpack.c.l.b16 %v15
  %v64 = vunpack.c.l.b16 %v16
  %v65 = vunpack.c.l.b16 %v17
  %v66 = vunpack.c.l.b16 %v18
  %v67 = vunpack.c.l.b16 %v19
  %v68 = vunpack.c.l.b16 %v20
  %v69 = vunpack.c.l.b16 %v21
  %v70 = vunpack.c.l.b16 %v22
  %v71 = vunpack.c.l.b16 %v23
  %v72 = vunpack.c.l.b16 %v24
  %v73 = vunpack.c.l.b16 %v25
  %v74 = vunpack.c.l.b16 %v26
  %v75 = vunpack.c.l.b16 %v27
  %v76 = vunpack.c.l.b16 %v28
  %v77 = vunpack.c.l.b16 %v29
  %v78 = vunpack.c.l.b16 %v30
  %v79 = vpack.c.b16 %v64, %v63
  %v80 = vpack.c.b16 %v66, %v65
  %v81 = vpack.c.b16 %v68, %v67
  %v82 = vpack.c.b16 %v70, %v69
  %v83 = vpack.c.b16 %v72, %v71
  %v84 = vpack.c.b16 %v74, %v73
  %v85 = vpack.c.b16 %v76, %v75
  %v86 = vpack.c.b16 %v78, %v77
  %v111 = vunpack.c.l.b16 %v31
  %v112 = vunpack.c.l.b16 %v32
  %v113 = vunpack.c.l.b16 %v33
  %v114 = vunpack.c.l.b16 %v34
  %v115 = vunpack.c.l.b16 %v35
  %v116 = vunpack.c.l.b16 %v36
  %v117 = vunpack.c.l.b16 %v37
  %v118 = vunpack.c.l.b16 %v38
  %v119 = vunpack.c.l.b16 %v39
  %v120 = vunpack.c.l.b16 %v40
  %v121 = vunpack.c.l.b16 %v41
  %v122 = vunpack.c.l.b16 %v42
  %v123 = vunpack.c.l.b16 %v43
  %v124 = vunpack.c.l.b16 %v44
  %v125 = vunpack.c.l.b16 %v45
  %v126 = vunpack.c.l.b16 %v46
  %v127 = vpack.c.b16 %v112, %v111
  %v128 = vpack.c.b16 %v114, %v113
  %v129 = vpack.c.b16 %v116, %v115
  %v130 = vpack.c.b16 %v118, %v117
  %v131 = vpack.c.b16 %v120, %v119
  %v132 = vpack.c.b16 %v122, %v121
  %v133 = vpack.c.b16 %v124, %v123
  %v134 = vpack.c.b16 %v126, %v125
  %143 = vmatprep.subr.bf16.mxu0 0
  %144 = vmatpush1.bf16.msra.mxu0 %v127
  %145 = vmatprep.subr.bf16.mxu0 0
  %146 = vmatpush1.bf16.msra.mxu0 %v128
  %147 = vmatprep.subr.bf16.mxu0 0
  %148 = vmatpush1.bf16.msra.mxu0 %v129
  %149 = vmatprep.subr.bf16.mxu0 0
  %150 = vmatpush1.bf16.msra.mxu0 %v130
  %151 = vmatprep.subr.bf16.mxu0 0
  %152 = vmatpush1.bf16.msra.mxu0 %v131
  %153 = vmatprep.subr.bf16.mxu0 0
  %154 = vmatpush1.bf16.msra.mxu0 %v132
  %155 = vmatprep.subr.bf16.mxu0 0
  %156 = vmatpush1.bf16.msra.mxu0 %v133
  %157 = vmatprep.subr.bf16.mxu0 0
  %158 = vmatpush1.bf16.msra.mxu0 %v134
  %159 = vmatprep.subr.bf16.mxu0 0
  %160 = vmatpush1.bf16.msra.mxu0 0
  %161 = vmatprep.subr.bf16.mxu0 0
  %162 = vmatpush1.bf16.msra.mxu0 0
  %163 = vmatprep.subr.bf16.mxu0 0
  %164 = vmatpush1.bf16.msra.mxu0 0
  %165 = vmatprep.subr.bf16.mxu0 0
  %166 = vmatpush1.bf16.msra.mxu0 0
  %167 = vmatprep.subr.bf16.mxu0 0
  %168 = vmatpush1.bf16.msra.mxu0 0
  %169 = vmatprep.subr.bf16.mxu0 0
  %170 = vmatpush1.bf16.msra.mxu0 0
  %171 = vmatprep.subr.bf16.mxu0 0
  %172 = vmatpush1.bf16.msra.mxu0 0
  %173 = vmatprep.subr.bf16.mxu0 0
  %174 = vmatpush1.bf16.msra.mxu0 0
  %175 = vmatprep.mubr.bf16.mxu0 0
  %176 = vmatmul.mubr.bf16.gmra.mrb[0].mxu0 %v79
  %v177 = vpop.f32.mrb[0].mxu0
  %v178 = vadd.f32 0.0, %v177
  %v179 = vpop.f32.mrb[0].mxu0
  %v180 = vpop.f32.mrb[0].mxu0
  %v181 = vadd.f32 0.0, %v180
  %v182 = vpop.f32.mrb[0].mxu0
  %183 = vmatprep.mubr.bf16.mxu0 0
  %184 = vmatmul.mubr.bf16.gmra.mrb[0].mxu0 %v80
  %v185 = vpop.f32.mrb[0].mxu0
  %v186 = vadd.f32 0.0, %v185
  %v187 = vpop.f32.mrb[0].mxu0
  %v188 = vpop.f32.mrb[0].mxu0
  %v189 = vadd.f32 0.0, %v188
  %v190 = vpop.f32.mrb[0].mxu0
  %191 = vmatprep.mubr.bf16.mxu0 0
  %192 = vmatmul.mubr.bf16.gmra.mrb[0].mxu0 %v81
  %v193 = vpop.f32.mrb[0].mxu0
  %v194 = vadd.f32 0.0, %v193
  %v195 = vpop.f32.mrb[0].mxu0
  %v196 = vpop.f32.mrb[0].mxu0
  %v197 = vadd.f32 0.0, %v196
  %v198 = vpop.f32.mrb[0].mxu0
  %199 = vmatprep.mubr.bf16.mxu0 0
  %200 = vmatmul.mubr.bf16.gmra.mrb[0].mxu0 %v82
  %v201 = vpop.f32.mrb[0].mxu0
  %v202 = vadd.f32 0.0, %v201
  %v203 = vpop.f32.mrb[0].mxu0
  %v204 = vpop.f32.mrb[0].mxu0
  %v205 = vadd.f32 0.0, %v204
  %v206 = vpop.f32.mrb[0].mxu0
  %207 = vmatprep.mubr.bf16.mxu0 0
  %208 = vmatmul.mubr.bf16.gmra.mrb[0].mxu0 %v83
  %v209 = vpop.f32.mrb[0].mxu0
  %v210 = vadd.f32 0.0, %v209
  %v211 = vpop.f32.mrb[0].mxu0
  %v212 = vpop.f32.mrb[0].mxu0
  %v213 = vadd.f32 0.0, %v212
  %v214 = vpop.f32.mrb[0].mxu0
  %215 = vmatprep.mubr.bf16.mxu0 0
  %216 = vmatmul.mubr.bf16.gmra.mrb[0].mxu0 %v84
  %v217 = vpop.f32.mrb[0].mxu0
  %v218 = vadd.f32 0.0, %v217
  %v219 = vpop.f32.mrb[0].mxu0
  %v220 = vpop.f32.mrb[0].mxu0
  %v221 = vadd.f32 0.0, %v220
  %v222 = vpop.f32.mrb[0].mxu0
  %223 = vmatprep.mubr.bf16.mxu0 0
  %224 = vmatmul.mubr.bf16.gmra.mrb[0].mxu0 %v85
  %v225 = vpop.f32.mrb[0].mxu0
  %v226 = vadd.f32 0.0, %v225
  %v227 = vpop.f32.mrb[0].mxu0
  %v228 = vpop.f32.mrb[0].mxu0
  %v229 = vadd.f32 0.0, %v228
  %v230 = vpop.f32.mrb[0].mxu0
  %231 = vmatprep.mubr.bf16.mxu0 0
  %232 = vmatmul.mubr.bf16.gmra.mrb[0].mxu0 %v86
  %v233 = vpop.f32.mrb[0].mxu0
  %v234 = vadd.f32 0.0, %v233
  %v235 = vpop.f32.mrb[0].mxu0
  %v236 = vpop.f32.mrb[0].mxu0
  %v237 = vadd.f32 0.0, %v236
  %v238 = vpop.f32.mrb[0].mxu0
  %239 = vdwg.mxu0
  %v240 = vadd.f32 %v178, %v181
  %v241 = vadd.f32 %v240, %v186
  %v242 = vadd.f32 %v241, %v189
  %v243 = vadd.f32 %v242, %v194
  %v244 = vadd.f32 %v243, %v197
  %v245 = vadd.f32 %v244, %v202
  %v246 = vadd.f32 %v245, %v205
  %v247 = vadd.f32 %v246, %v210
  %v248 = vadd.f32 %v247, %v213
  %v249 = vadd.f32 %v248, %v218
  %v250 = vadd.f32 %v249, %v221
  %v251 = vadd.f32 %v250, %v226
  %v252 = vadd.f32 %v251, %v229
  %v253 = vadd.f32 %v252, %v234
  %v254 = vadd.f32 %v253, %v237
  %v255 = vrot.slane %v254, 4
  %v256 = vadd.f32 %v254, %v255
  %v257 = vrot.slane %v256, 2
  %v258 = vadd.f32 %v256, %v257
  %v259 = vrot.slane %v258, 1
  %v260 = vadd.f32 %v258, %v259
  %261 = vst [vmem:[%s3] sm:$0x1] %v260
  %v262 = vmul.f32 %v178, %v178
  %v263 = vmul.f32 %v181, %v181
  %v264 = vmul.f32 %v186, %v186
  %v265 = vmul.f32 %v189, %v189
  %v266 = vmul.f32 %v194, %v194
  %v267 = vmul.f32 %v197, %v197
  %v268 = vmul.f32 %v202, %v202
  %v269 = vmul.f32 %v205, %v205
  %v270 = vmul.f32 %v210, %v210
  %v271 = vmul.f32 %v213, %v213
  %v272 = vmul.f32 %v218, %v218
  %v273 = vmul.f32 %v221, %v221
  %v274 = vmul.f32 %v226, %v226
  %v275 = vmul.f32 %v229, %v229
  %v276 = vmul.f32 %v234, %v234
  %v277 = vmul.f32 %v237, %v237
  %v278 = vadd.f32 %v262, %v263
  %v279 = vadd.f32 %v278, %v264
  %v280 = vadd.f32 %v279, %v265
  %v281 = vadd.f32 %v280, %v266
  %v282 = vadd.f32 %v281, %v267
  %v283 = vadd.f32 %v282, %v268
  %v284 = vadd.f32 %v283, %v269
  %v285 = vadd.f32 %v284, %v270
  %v286 = vadd.f32 %v285, %v271
  %v287 = vadd.f32 %v286, %v272
  %v288 = vadd.f32 %v287, %v273
  %v289 = vadd.f32 %v288, %v274
  %v290 = vadd.f32 %v289, %v275
  %v291 = vadd.f32 %v290, %v276
  %v292 = vadd.f32 %v291, %v277
  %v293 = vrot.slane %v292, 4
  %v294 = vadd.f32 %v292, %v293
  %v295 = vrot.slane %v294, 2
  %v296 = vadd.f32 %v294, %v295
  %v297 = vrot.slane %v296, 1
  %v298 = vadd.f32 %v296, %v297
  %299 = vst [vmem:[%s4] sm:$0x1] %v298
  %v300 = vpack.c.bf16 %v181, %v178
  %v301 = vpack.c.bf16 %v189, %v186
  %v302 = vpack.c.bf16 %v197, %v194
  %v303 = vpack.c.bf16 %v205, %v202
  %v304 = vpack.c.bf16 %v213, %v210
  %v305 = vpack.c.bf16 %v221, %v218
  %v306 = vpack.c.bf16 %v229, %v226
  %v307 = vpack.c.bf16 %v237, %v234
  %v316 = vunpack.c.l.b16 %v300
  %v317 = vunpack.c.h.b16 %v300
  %v318 = vunpack.c.l.b16 %v301
  %v319 = vunpack.c.h.b16 %v301
  %v320 = vunpack.c.l.b16 %v302
  %v321 = vunpack.c.h.b16 %v302
  %v322 = vunpack.c.l.b16 %v303
  %v323 = vunpack.c.h.b16 %v303
  %v324 = vunpack.c.l.b16 %v304
  %v325 = vunpack.c.h.b16 %v304
  %v326 = vunpack.c.l.b16 %v305
  %v327 = vunpack.c.h.b16 %v305
  %v328 = vunpack.c.l.b16 %v306
  %v329 = vunpack.c.h.b16 %v306
  %v330 = vunpack.c.l.b16 %v307
  %v331 = vunpack.c.h.b16 %v307
  %v332 = vpack.c.b16 %v316, %v316
  %v333 = vpack.c.b16 %v317, %v317
  %v334 = vpack.c.b16 %v318, %v318
  %v335 = vpack.c.b16 %v319, %v319
  %v336 = vpack.c.b16 %v320, %v320
  %v337 = vpack.c.b16 %v321, %v321
  %v338 = vpack.c.b16 %v322, %v322
  %v339 = vpack.c.b16 %v323, %v323
  %v340 = vpack.c.b16 %v324, %v324
  %v341 = vpack.c.b16 %v325, %v325
  %v342 = vpack.c.b16 %v326, %v326
  %v343 = vpack.c.b16 %v327, %v327
  %v344 = vpack.c.b16 %v328, %v328
  %v345 = vpack.c.b16 %v329, %v329
  %v346 = vpack.c.b16 %v330, %v330
  %v347 = vpack.c.b16 %v331, %v331
  %364 = vst [vmem:[%s2] sm:$0xf] %v332
  %365 = vst [vmem:[%s2 + $0x4] sm:$0xf] %v333
  %366 = vst [vmem:[%s2 + $0x8] sm:$0xf] %v334
  %367 = vst [vmem:[%s2 + $0xc] sm:$0xf] %v335
  %368 = vst [vmem:[%s2 + $0x10] sm:$0xf] %v336
  %369 = vst [vmem:[%s2 + $0x14] sm:$0xf] %v337
  %370 = vst [vmem:[%s2 + $0x18] sm:$0xf] %v338
  %371 = vst [vmem:[%s2 + $0x1c] sm:$0xf] %v339
  %372 = vst [vmem:[%s2 + $0x20] sm:$0xf] %v340
  %373 = vst [vmem:[%s2 + $0x24] sm:$0xf] %v341
  %374 = vst [vmem:[%s2 + $0x28] sm:$0xf] %v342
  %375 = vst [vmem:[%s2 + $0x2c] sm:$0xf] %v343
  %376 = vst [vmem:[%s2 + $0x30] sm:$0xf] %v344
  %377 = vst [vmem:[%s2 + $0x34] sm:$0xf] %v345
  %378 = vst [vmem:[%s2 + $0x38] sm:$0xf] %v346
  %379 = vst [vmem:[%s2 + $0x3c] sm:$0xf] %v347
  // Predicated region
  $region10: #{bottleneck_forward.8} parent=0 // pred_check
    _
  $region11: #{bottleneck_forward.8} parent=0 // pred_check_branch
    %381 = sbr.rel (0) target = $region13
  $region12: #{bottleneck_forward.8} parent=0 // pred_region
    _
  $region13: #{bottleneck_forward.8} parent=0 // pred_fallthru
    _
  // Predicated region
  $region14: #{bottleneck_forward.8} parent=0 // pred_check
    _
  $region15: #{bottleneck_forward.8} parent=0 // pred_check_branch
    %383 = sbr.rel (0) target = $region17
  $region16: #{bottleneck_forward.8} parent=0 // pred_region
    _
  $region17: #{bottleneck_forward.8} parent=0 // pred_fallthru
    _
  // Predicated region
  $region18: #{bottleneck_forward.8} parent=0 // pred_check
    _
  $region19: #{bottleneck_forward.8} parent=0 // pred_check_branch
    %385 = sbr.rel (0) target = $region21
  $region20: #{bottleneck_forward.8} parent=0 // pred_region
    _
  $region21: #{bottleneck_forward.8} parent=0 // pred_fallthru
    _
  // Predicated region
  $region22: #{bottleneck_forward.8} parent=0 // pred_check
    _
  $region23: #{bottleneck_forward.8} parent=0 // pred_check_branch
    %387 = sbr.rel (0) target = $region25
  $region24: #{bottleneck_forward.8} parent=0 // pred_region
    _
  $region25: #{bottleneck_forward.8} parent=0 // pred_fallthru
    _
  // Predicated region
  $region26: #{bottleneck_forward.8} parent=0 // pred_check
    _
  $region27: #{bottleneck_forward.8} parent=0 // pred_check_branch
    %389 = sbr.rel (0) target = $region29
  $region28: #{bottleneck_forward.8} parent=0 // pred_region
    _
  $region29: #{bottleneck_forward.8} parent=0 // pred_fallthru
    _
  // Predicated region
  $region30: #{bottleneck_forward.8} parent=0 // pred_check
    _
  $region31: #{bottleneck_forward.8} parent=0 // pred_check_branch
    %391 = sbr.rel (0) target = $region33
  $region32: #{bottleneck_forward.8} parent=0 // pred_region
    _
  $region33: #{bottleneck_forward.8} parent=0 // pred_fallthru
    _

</llo_original>
